<compile_context>
chip_gen: v7x
topology: tpu7x:2x2x1
jax: 0.10.0
libtpu: 0.0.40
codegen_flags: <defaults>
</compile_context>

<pallas_src>
import functools

import jax
import jax.numpy as jnp
from jax import lax
from jax.experimental import pallas as pl
from jax.experimental.pallas import tpu as pltpu

LANE = 128
SUBLANE = 8
SUB_M = 256          # rows per in-kernel sub-block (bounds the vreg live set)
MAX_TILE_M = 1024    # DMA tile cap; x+out per 1024 rows at D=96 is < 1 MB


def _round_up(x, m):
    return (x + m - 1) // m * m


def _num_tensorcores():
    """Best-effort TensorCore count (for megacore grid shaping).  Defaults to 1."""
    try:
        info = pltpu.get_tpu_info()
        for attr in ("num_cores", "core_count", "num_tensorcores",
                     "tensorcore_count", "cores_per_chip", "num_cores_per_chip"):
            v = getattr(info, attr, None)
            if isinstance(v, int) and v > 0:
                return v
    except Exception:
        pass
    try:
        v = getattr(jax.devices()[0], "num_cores", None)
        if isinstance(v, int) and v > 0:
            return v
    except Exception:
        pass
    return 1


def _pick_sub_m(tile_m, cap=SUB_M):
    """Largest multiple of 8 that divides tile_m and is <= cap (exact sub-block cover)."""
    t = tile_m // SUBLANE
    kmax = max(min(t, cap // SUBLANE), 1)
    for k in range(kmax, 0, -1):
        if t % k == 0:
            return k * SUBLANE
    return SUBLANE


def _autoencoder_kernel(x_ref, w_ref, b_ref, o_ref, *, D, P, sub_m, n_sub):
    """One batch tile of the full autoencoder forward pass (6 MXU matmuls per sub-block).

    x_ref: (tile_m, D) f32
    w_ref: (6*P, P)   packed weight slab (layer li occupies rows [li*P, li*P+din), zero-padded)
    b_ref: (8, P)     packed f32 bias slab (layer li in row li, zero-padded lanes)
    o_ref: (tile_m, D) f32
    """
    w_dtype = w_ref.dtype

    def layer(h_in, li, k):
        # Static slices into the packed slabs (li, P, k are Python ints).
        w = w_ref[li * P: li * P + k, :]            # (k, P)
        b = b_ref[li: li + 1, :]                    # (1, P) f32
        return jnp.dot(h_in, w, preferred_element_type=jnp.float32) + b

    def act(h_f32):
        # ReLU in f32 (safe on v5e), then drop to the matmul dtype for the next MXU op.
        return jnp.maximum(h_f32, 0.0).astype(w_dtype)

    def body(s, carry):
        r0 = pl.multiple_of(s * sub_m, sub_m)
        h = x_ref[pl.ds(r0, sub_m), :].astype(w_dtype)
        # ---- encoder ----
        h = act(layer(h, 0, D))                     # D    -> D//4
        h = act(layer(h, 1, P))                     # D//4 -> D//6
        emb = layer(h, 2, P).astype(w_dtype)        # D//6 -> 12   (self.emb, no activation)
        # ---- decoder ----
        # TODO(synk): layers 2 & 3 could be algebraically fused (no nonlinearity between
        # them); skipped to keep numerics identical to the module.
        h = act(layer(emb, 3, P))                   # 12   -> D//6
        h = act(layer(h, 4, P))                     # D//6 -> D//4
        h = layer(h, 5, P)                          # D//4 -> D   (f32)
        o_ref[pl.ds(r0, sub_m), :] = jax.nn.sigmoid(h[:, :D]).astype(o_ref.dtype)
        return carry

    lax.fori_loop(0, n_sub, body, 0, unroll=True)


def autoencoder_forward(x, params, *, tile_m=None, use_bf16_matmul=True):
    """Forward pass of the autoencoder.

    x:      (B, D) float32.
    params: list of 6 (W_t, b); W_t shape (in, out) [pre-transposed vs torch], b shape (1, out).
    Returns (B, D) float32 reconstruction.
    """
    B, D = x.shape
    n_layers = len(params)
    assert n_layers == 6
    P = _round_up(max(D, 12), LANE)          # lane-padded feature width for all hidden acts

    # ---- batch / grid shaping (generation-aware, minimal padding) ----
    cores = _num_tensorcores()
    b8 = _round_up(max(B, SUBLANE), SUBLANE)
    if tile_m is None:
        num_tiles = max(pl.cdiv(b8, MAX_TILE_M), 1)
        # Split across TensorCores only when each core's slice amortizes the split.
        if cores > 1 and (b8 // cores) >= 512 and num_tiles % cores:
            num_tiles = _round_up(num_tiles, cores)
        tile_m = _round_up(pl.cdiv(b8, num_tiles), SUBLANE)
    else:
        tile_m = _round_up(int(tile_m), SUBLANE)
    num_tiles = pl.cdiv(b8, tile_m)
    sub_m = _pick_sub_m(tile_m)
    n_sub = tile_m // sub_m
    b_pad = num_tiles * tile_m
    if b_pad != B:
        x = jnp.pad(x, ((0, b_pad - B), (0, 0)))

    # ---- pack the 12 tiny params into 2 slabs (2 DMAs instead of 13) ----
    w_dtype = jnp.bfloat16 if use_bf16_matmul else jnp.float32
    w_slab = jnp.zeros((n_layers * P, P), w_dtype)
    b_slab = jnp.zeros((SUBLANE, P), jnp.float32)
    for li, (w, b) in enumerate(params):
        din, dout = w.shape
        w_slab = w_slab.at[li * P: li * P + din, :dout].set(w.astype(w_dtype))
        b_slab = b_slab.at[li, :dout].set(b.reshape(-1).astype(jnp.float32))
    # NOTE: in a real deployment the slabs are packed once and reused across calls.

    kernel = functools.partial(_autoencoder_kernel, D=D, P=P, sub_m=sub_m, n_sub=n_sub)

    io_bytes = 2 * tile_m * D * 4                                   # x + out tiles (f32)
    slab_bytes = w_slab.size * w_slab.dtype.itemsize + b_slab.size * 4
    vmem_limit = int(min(max(2 * io_bytes + 2 * slab_bytes + (8 << 20), 16 << 20), 32 << 20))

    out = pl.pallas_call(
        kernel,
        out_shape=jax.ShapeDtypeStruct((b_pad, D), jnp.float32),
        grid_spec=pltpu.PrefetchScalarGridSpec(
            num_scalar_prefetch=0,
            grid=(num_tiles,),
            in_specs=[
                pl.BlockSpec((tile_m, D), lambda i: (i, 0)),
                # Constant index_map -> fetched once, never re-DMA'd across grid steps.
                pl.BlockSpec((n_layers * P, P), lambda i: (0, 0)),
                pl.BlockSpec((SUBLANE, P), lambda i: (0, 0)),
            ],
            out_specs=pl.BlockSpec((tile_m, D), lambda i: (i, 0)),
        ),
        compiler_params=pltpu.CompilerParams(
            dimension_semantics=("parallel",),
            vmem_limit_bytes=vmem_limit,
        ),
    )(x, w_slab, b_slab)

    return out if b_pad == B else out[:B]


def init_params(key, input_dim):
    """Deterministic init matching torch.nn.Linear defaults; weights returned as (in, out)."""
    d4 = input_dim // 4
    d6 = input_dim // 6
    dims = [(input_dim, d4), (d4, d6), (d6, 12),     # encoder
            (12, d6), (d6, d4), (d4, input_dim)]     # decoder
    params = []
    for (din, dout) in dims:
        key, kw, kb = jax.random.split(key, 3)
        bound = 1.0 / jnp.sqrt(jnp.float32(din))
        w_t = jax.random.uniform(kw, (din, dout), jnp.float32, -bound, bound)
        b = jax.random.uniform(kb, (1, dout), jnp.float32, -bound, bound)
        params.append((w_t, b))
    return params


def reference_forward(x, params, *, matmul_dtype=jnp.float32):
    """Plain-JAX reference; matmul_dtype=bf16 emulates the kernel's MXU path."""
    def lin(h, w, b):
        return jnp.dot(h.astype(matmul_dtype), w.astype(matmul_dtype),
                       preferred_element_type=jnp.float32) + b
    h = jnp.maximum(lin(x, *params[0]), 0.0)
    h = jnp.maximum(lin(h, *params[1]), 0.0)
    emb = lin(h, *params[2])
    h = jnp.maximum(lin(emb, *params[3]), 0.0)
    h = jnp.maximum(lin(h, *params[4]), 0.0)
    return jax.nn.sigmoid(lin(h, *params[5]))


if __name__ == "__main__":
    input_dim = 96        # hidden dims: 24, 16, 12, 16, 24, 96
    batch = 512           # -> single grid step (tile_m=512) on 1-TC chips / small batches

    key = jax.random.PRNGKey(0)
    key, kx = jax.random.split(key)
    x = jax.random.normal(kx, (batch, input_dim), jnp.float32)
    params = init_params(key, input_dim)

    out = jax.block_until_ready(autoencoder_forward(x, params))
    assert out.shape == (batch, input_dim)

    # Strict check vs a reference matching the kernel's bf16-matmul / f32-accumulate path,
    # plus a loose sanity check vs full-fp32 math.
    ref_bf16 = reference_forward(x, params, matmul_dtype=jnp.bfloat16)
    ref_f32 = reference_forward(x, params, matmul_dtype=jnp.float32)
    assert jnp.allclose(out, ref_bf16, atol=1e-3, rtol=0), "mismatch vs bf16-matmul reference"
    assert jnp.allclose(out, ref_f32, atol=3e-2, rtol=0), "mismatch vs fp32 reference"

    print("KERNEL_OK")
</pallas_src>

<mosaic_0001>
module attributes {stable_mosaic.version = 11 : i64} {
  func.func @_autoencoder_kernel(%arg0: i32, %arg1: memref<512x96xf32, #tpu.memory_space<vmem>>, %arg2: memref<768x128xbf16, #tpu.memory_space<vmem>>, %arg3: memref<8x128xf32, #tpu.memory_space<vmem>>, %arg4: memref<512x96xf32, #tpu.memory_space<vmem>>) attributes {dimension_semantics = [#tpu.dimension_semantics<parallel>], iteration_bounds = array<i64: 1>, scalar_prefetch = 0 : i64, scratch_operands = 0 : i64, tpu.core_type = #tpu.core_type<tc>, window_params = [{transform_indices = @transform_0, window_bounds = array<i64: 512, 96>}, {pipeline_mode = #tpu.pipeline_mode<synchronous>, transform_indices = @transform_1, window_bounds = array<i64: 768, 128>}, {pipeline_mode = #tpu.pipeline_mode<synchronous>, transform_indices = @transform_2, window_bounds = array<i64: 8, 128>}, {transform_indices = @transform_3, window_bounds = array<i64: 512, 96>}]} {
    %c0_i32 = arith.constant 0 : i32
    %c256_i32 = arith.constant 256 : i32
    %0 = arith.muli %c0_i32, %c256_i32 : i32
    %1 = tpu.assume_multiple %0, 256 : i32
    %2 = arith.index_cast %1 : i32 to index
    %c0 = arith.constant 0 : index
    %3 = vector.load %arg1[%2, %c0] : memref<512x96xf32, #tpu.memory_space<vmem>>, vector<256x96xf32>
    %4 = arith.truncf %3 : vector<256x96xf32> to vector<256x96xbf16>
    %c0_0 = arith.constant 0 : index
    %c0_1 = arith.constant 0 : index
    %5 = vector.load %arg2[%c0_0, %c0_1] : memref<768x128xbf16, #tpu.memory_space<vmem>>, vector<96x128xbf16>
    %c0_2 = arith.constant 0 : index
    %c0_3 = arith.constant 0 : index
    %6 = vector.load %arg3[%c0_2, %c0_3] : memref<8x128xf32, #tpu.memory_space<vmem>>, vector<1x128xf32>
    %cst = arith.constant dense<0.000000e+00> : vector<256x128xf32>
    %7 = tpu.matmul %4, %5, %cst {dimension_numbers = #tpu.dot_dimension_numbers<[1], [0], [0], [1], [0, 0, 1, 1], [], []>} : vector<256x96xbf16>, vector<96x128xbf16>, vector<256x128xf32> -> vector<256x128xf32>
    %8 = vector.broadcast %6 : vector<1x128xf32> to vector<256x128xf32>
    %9 = arith.addf %7, %8 : vector<256x128xf32>
    %cst_4 = arith.constant 0.000000e+00 : f32
    %10 = vector.broadcast %cst_4 : f32 to vector<256x128xf32>
    %11 = arith.maximumf %9, %10 : vector<256x128xf32>
    %12 = arith.truncf %11 : vector<256x128xf32> to vector<256x128xbf16>
    %c128 = arith.constant 128 : index
    %c0_5 = arith.constant 0 : index
    %13 = vector.load %arg2[%c128, %c0_5] : memref<768x128xbf16, #tpu.memory_space<vmem>>, vector<128x128xbf16>
    %c1 = arith.constant 1 : index
    %c0_6 = arith.constant 0 : index
    %14 = vector.load %arg3[%c1, %c0_6] : memref<8x128xf32, #tpu.memory_space<vmem>>, vector<1x128xf32>
    %cst_7 = arith.constant dense<0.000000e+00> : vector<256x128xf32>
    %15 = tpu.matmul %12, %13, %cst_7 {dimension_numbers = #tpu.dot_dimension_numbers<[1], [0], [0], [1], [0, 0, 1, 1], [], []>} : vector<256x128xbf16>, vector<128x128xbf16>, vector<256x128xf32> -> vector<256x128xf32>
    %16 = vector.broadcast %14 : vector<1x128xf32> to vector<256x128xf32>
    %17 = arith.addf %15, %16 : vector<256x128xf32>
    %cst_8 = arith.constant 0.000000e+00 : f32
    %18 = vector.broadcast %cst_8 : f32 to vector<256x128xf32>
    %19 = arith.maximumf %17, %18 : vector<256x128xf32>
    %20 = arith.truncf %19 : vector<256x128xf32> to vector<256x128xbf16>
    %c256 = arith.constant 256 : index
    %c0_9 = arith.constant 0 : index
    %21 = vector.load %arg2[%c256, %c0_9] : memref<768x128xbf16, #tpu.memory_space<vmem>>, vector<128x128xbf16>
    %c2 = arith.constant 2 : index
    %c0_10 = arith.constant 0 : index
    %22 = vector.load %arg3[%c2, %c0_10] : memref<8x128xf32, #tpu.memory_space<vmem>>, vector<1x128xf32>
    %cst_11 = arith.constant dense<0.000000e+00> : vector<256x128xf32>
    %23 = tpu.matmul %20, %21, %cst_11 {dimension_numbers = #tpu.dot_dimension_numbers<[1], [0], [0], [1], [0, 0, 1, 1], [], []>} : vector<256x128xbf16>, vector<128x128xbf16>, vector<256x128xf32> -> vector<256x128xf32>
    %24 = vector.broadcast %22 : vector<1x128xf32> to vector<256x128xf32>
    %25 = arith.addf %23, %24 : vector<256x128xf32>
    %26 = arith.truncf %25 : vector<256x128xf32> to vector<256x128xbf16>
    %c384 = arith.constant 384 : index
    %c0_12 = arith.constant 0 : index
    %27 = vector.load %arg2[%c384, %c0_12] : memref<768x128xbf16, #tpu.memory_space<vmem>>, vector<128x128xbf16>
    %c3 = arith.constant 3 : index
    %c0_13 = arith.constant 0 : index
    %28 = vector.load %arg3[%c3, %c0_13] : memref<8x128xf32, #tpu.memory_space<vmem>>, vector<1x128xf32>
    %cst_14 = arith.constant dense<0.000000e+00> : vector<256x128xf32>
    %29 = tpu.matmul %26, %27, %cst_14 {dimension_numbers = #tpu.dot_dimension_numbers<[1], [0], [0], [1], [0, 0, 1, 1], [], []>} : vector<256x128xbf16>, vector<128x128xbf16>, vector<256x128xf32> -> vector<256x128xf32>
    %30 = vector.broadcast %28 : vector<1x128xf32> to vector<256x128xf32>
    %31 = arith.addf %29, %30 : vector<256x128xf32>
    %cst_15 = arith.constant 0.000000e+00 : f32
    %32 = vector.broadcast %cst_15 : f32 to vector<256x128xf32>
    %33 = arith.maximumf %31, %32 : vector<256x128xf32>
    %34 = arith.truncf %33 : vector<256x128xf32> to vector<256x128xbf16>
    %c512 = arith.constant 512 : index
    %c0_16 = arith.constant 0 : index
    %35 = vector.load %arg2[%c512, %c0_16] : memref<768x128xbf16, #tpu.memory_space<vmem>>, vector<128x128xbf16>
    %c4 = arith.constant 4 : index
    %c0_17 = arith.constant 0 : index
    %36 = vector.load %arg3[%c4, %c0_17] : memref<8x128xf32, #tpu.memory_space<vmem>>, vector<1x128xf32>
    %cst_18 = arith.constant dense<0.000000e+00> : vector<256x128xf32>
    %37 = tpu.matmul %34, %35, %cst_18 {dimension_numbers = #tpu.dot_dimension_numbers<[1], [0], [0], [1], [0, 0, 1, 1], [], []>} : vector<256x128xbf16>, vector<128x128xbf16>, vector<256x128xf32> -> vector<256x128xf32>
    %38 = vector.broadcast %36 : vector<1x128xf32> to vector<256x128xf32>
    %39 = arith.addf %37, %38 : vector<256x128xf32>
    %cst_19 = arith.constant 0.000000e+00 : f32
    %40 = vector.broadcast %cst_19 : f32 to vector<256x128xf32>
    %41 = arith.maximumf %39, %40 : vector<256x128xf32>
    %42 = arith.truncf %41 : vector<256x128xf32> to vector<256x128xbf16>
    %c640 = arith.constant 640 : index
    %c0_20 = arith.constant 0 : index
    %43 = vector.load %arg2[%c640, %c0_20] : memref<768x128xbf16, #tpu.memory_space<vmem>>, vector<128x128xbf16>
    %c5 = arith.constant 5 : index
    %c0_21 = arith.constant 0 : index
    %44 = vector.load %arg3[%c5, %c0_21] : memref<8x128xf32, #tpu.memory_space<vmem>>, vector<1x128xf32>
    %cst_22 = arith.constant dense<0.000000e+00> : vector<256x128xf32>
    %45 = tpu.matmul %42, %43, %cst_22 {dimension_numbers = #tpu.dot_dimension_numbers<[1], [0], [0], [1], [0, 0, 1, 1], [], []>} : vector<256x128xbf16>, vector<128x128xbf16>, vector<256x128xf32> -> vector<256x128xf32>
    %46 = vector.broadcast %44 : vector<1x128xf32> to vector<256x128xf32>
    %47 = arith.addf %45, %46 : vector<256x128xf32>
    %48 = vector.extract_strided_slice %47 {offsets = [0, 0], sizes = [256, 96], strides = [1, 1]} : vector<256x128xf32> to vector<256x96xf32>
    %49 = arith.negf %48 : vector<256x96xf32>
    %50 = math.exp %49 : vector<256x96xf32>
    %cst_23 = arith.constant 1.000000e+00 : f32
    %51 = vector.broadcast %cst_23 : f32 to vector<256x96xf32>
    %52 = arith.addf %51, %50 : vector<256x96xf32>
    %53 = arith.divf %51, %52 : vector<256x96xf32>
    %54 = arith.index_cast %1 : i32 to index
    %c0_24 = arith.constant 0 : index
    %55 = vector.load %arg4[%54, %c0_24] : memref<512x96xf32, #tpu.memory_space<vmem>>, vector<256x96xf32>
    tpu.vector_store %arg4[%54, %c0_24], %53 {strides = array<i32>} : memref<512x96xf32, #tpu.memory_space<vmem>>, vector<256x96xf32>,
    %c1_i32 = arith.constant 1 : i32
    %c256_i32_25 = arith.constant 256 : i32
    %56 = arith.muli %c1_i32, %c256_i32_25 : i32
    %57 = tpu.assume_multiple %56, 256 : i32
    %58 = arith.index_cast %57 : i32 to index
    %c0_26 = arith.constant 0 : index
    %59 = vector.load %arg1[%58, %c0_26] : memref<512x96xf32, #tpu.memory_space<vmem>>, vector<256x96xf32>
    %60 = arith.truncf %59 : vector<256x96xf32> to vector<256x96xbf16>
    %c0_27 = arith.constant 0 : index
    %c0_28 = arith.constant 0 : index
    %61 = vector.load %arg2[%c0_27, %c0_28] : memref<768x128xbf16, #tpu.memory_space<vmem>>, vector<96x128xbf16>
    %c0_29 = arith.constant 0 : index
    %c0_30 = arith.constant 0 : index
    %62 = vector.load %arg3[%c0_29, %c0_30] : memref<8x128xf32, #tpu.memory_space<vmem>>, vector<1x128xf32>
    %cst_31 = arith.constant dense<0.000000e+00> : vector<256x128xf32>
    %63 = tpu.matmul %60, %61, %cst_31 {dimension_numbers = #tpu.dot_dimension_numbers<[1], [0], [0], [1], [0, 0, 1, 1], [], []>} : vector<256x96xbf16>, vector<96x128xbf16>, vector<256x128xf32> -> vector<256x128xf32>
    %64 = vector.broadcast %62 : vector<1x128xf32> to vector<256x128xf32>
    %65 = arith.addf %63, %64 : vector<256x128xf32>
    %cst_32 = arith.constant 0.000000e+00 : f32
    %66 = vector.broadcast %cst_32 : f32 to vector<256x128xf32>
    %67 = arith.maximumf %65, %66 : vector<256x128xf32>
    %68 = arith.truncf %67 : vector<256x128xf32> to vector<256x128xbf16>
    %c128_33 = arith.constant 128 : index
    %c0_34 = arith.constant 0 : index
    %69 = vector.load %arg2[%c128_33, %c0_34] : memref<768x128xbf16, #tpu.memory_space<vmem>>, vector<128x128xbf16>
    %c1_35 = arith.constant 1 : index
    %c0_36 = arith.constant 0 : index
    %70 = vector.load %arg3[%c1_35, %c0_36] : memref<8x128xf32, #tpu.memory_space<vmem>>, vector<1x128xf32>
    %cst_37 = arith.constant dense<0.000000e+00> : vector<256x128xf32>
    %71 = tpu.matmul %68, %69, %cst_37 {dimension_numbers = #tpu.dot_dimension_numbers<[1], [0], [0], [1], [0, 0, 1, 1], [], []>} : vector<256x128xbf16>, vector<128x128xbf16>, vector<256x128xf32> -> vector<256x128xf32>
    %72 = vector.broadcast %70 : vector<1x128xf32> to vector<256x128xf32>
    %73 = arith.addf %71, %72 : vector<256x128xf32>
    %cst_38 = arith.constant 0.000000e+00 : f32
    %74 = vector.broadcast %cst_38 : f32 to vector<256x128xf32>
    %75 = arith.maximumf %73, %74 : vector<256x128xf32>
    %76 = arith.truncf %75 : vector<256x128xf32> to vector<256x128xbf16>
    %c256_39 = arith.constant 256 : index
    %c0_40 = arith.constant 0 : index
    %77 = vector.load %arg2[%c256_39, %c0_40] : memref<768x128xbf16, #tpu.memory_space<vmem>>, vector<128x128xbf16>
    %c2_41 = arith.constant 2 : index
    %c0_42 = arith.constant 0 : index
    %78 = vector.load %arg3[%c2_41, %c0_42] : memref<8x128xf32, #tpu.memory_space<vmem>>, vector<1x128xf32>
    %cst_43 = arith.constant dense<0.000000e+00> : vector<256x128xf32>
    %79 = tpu.matmul %76, %77, %cst_43 {dimension_numbers = #tpu.dot_dimension_numbers<[1], [0], [0], [1], [0, 0, 1, 1], [], []>} : vector<256x128xbf16>, vector<128x128xbf16>, vector<256x128xf32> -> vector<256x128xf32>
    %80 = vector.broadcast %78 : vector<1x128xf32> to vector<256x128xf32>
    %81 = arith.addf %79, %80 : vector<256x128xf32>
    %82 = arith.truncf %81 : vector<256x128xf32> to vector<256x128xbf16>
    %c384_44 = arith.constant 384 : index
    %c0_45 = arith.constant 0 : index
    %83 = vector.load %arg2[%c384_44, %c0_45] : memref<768x128xbf16, #tpu.memory_space<vmem>>, vector<128x128xbf16>
    %c3_46 = arith.constant 3 : index
    %c0_47 = arith.constant 0 : index
    %84 = vector.load %arg3[%c3_46, %c0_47] : memref<8x128xf32, #tpu.memory_space<vmem>>, vector<1x128xf32>
    %cst_48 = arith.constant dense<0.000000e+00> : vector<256x128xf32>
    %85 = tpu.matmul %82, %83, %cst_48 {dimension_numbers = #tpu.dot_dimension_numbers<[1], [0], [0], [1], [0, 0, 1, 1], [], []>} : vector<256x128xbf16>, vector<128x128xbf16>, vector<256x128xf32> -> vector<256x128xf32>
    %86 = vector.broadcast %84 : vector<1x128xf32> to vector<256x128xf32>
    %87 = arith.addf %85, %86 : vector<256x128xf32>
    %cst_49 = arith.constant 0.000000e+00 : f32
    %88 = vector.broadcast %cst_49 : f32 to vector<256x128xf32>
    %89 = arith.maximumf %87, %88 : vector<256x128xf32>
    %90 = arith.truncf %89 : vector<256x128xf32> to vector<256x128xbf16>
    %c512_50 = arith.constant 512 : index
    %c0_51 = arith.constant 0 : index
    %91 = vector.load %arg2[%c512_50, %c0_51] : memref<768x128xbf16, #tpu.memory_space<vmem>>, vector<128x128xbf16>
    %c4_52 = arith.constant 4 : index
    %c0_53 = arith.constant 0 : index
    %92 = vector.load %arg3[%c4_52, %c0_53] : memref<8x128xf32, #tpu.memory_space<vmem>>, vector<1x128xf32>
    %cst_54 = arith.constant dense<0.000000e+00> : vector<256x128xf32>
    %93 = tpu.matmul %90, %91, %cst_54 {dimension_numbers = #tpu.dot_dimension_numbers<[1], [0], [0], [1], [0, 0, 1, 1], [], []>} : vector<256x128xbf16>, vector<128x128xbf16>, vector<256x128xf32> -> vector<256x128xf32>
    %94 = vector.broadcast %92 : vector<1x128xf32> to vector<256x128xf32>
    %95 = arith.addf %93, %94 : vector<256x128xf32>
    %cst_55 = arith.constant 0.000000e+00 : f32
    %96 = vector.broadcast %cst_55 : f32 to vector<256x128xf32>
    %97 = arith.maximumf %95, %96 : vector<256x128xf32>
    %98 = arith.truncf %97 : vector<256x128xf32> to vector<256x128xbf16>
    %c640_56 = arith.constant 640 : index
    %c0_57 = arith.constant 0 : index
    %99 = vector.load %arg2[%c640_56, %c0_57] : memref<768x128xbf16, #tpu.memory_space<vmem>>, vector<128x128xbf16>
    %c5_58 = arith.constant 5 : index
    %c0_59 = arith.constant 0 : index
    %100 = vector.load %arg3[%c5_58, %c0_59] : memref<8x128xf32, #tpu.memory_space<vmem>>, vector<1x128xf32>
    %cst_60 = arith.constant dense<0.000000e+00> : vector<256x128xf32>
    %101 = tpu.matmul %98, %99, %cst_60 {dimension_numbers = #tpu.dot_dimension_numbers<[1], [0], [0], [1], [0, 0, 1, 1], [], []>} : vector<256x128xbf16>, vector<128x128xbf16>, vector<256x128xf32> -> vector<256x128xf32>
    %102 = vector.broadcast %100 : vector<1x128xf32> to vector<256x128xf32>
    %103 = arith.addf %101, %102 : vector<256x128xf32>
    %104 = vector.extract_strided_slice %103 {offsets = [0, 0], sizes = [256, 96], strides = [1, 1]} : vector<256x128xf32> to vector<256x96xf32>
    %105 = arith.negf %104 : vector<256x96xf32>
    %106 = math.exp %105 : vector<256x96xf32>
    %cst_61 = arith.constant 1.000000e+00 : f32
    %107 = vector.broadcast %cst_61 : f32 to vector<256x96xf32>
    %108 = arith.addf %107, %106 : vector<256x96xf32>
    %109 = arith.divf %107, %108 : vector<256x96xf32>
    %110 = arith.index_cast %57 : i32 to index
    %c0_62 = arith.constant 0 : index
    %111 = vector.load %arg4[%110, %c0_62] : memref<512x96xf32, #tpu.memory_space<vmem>>, vector<256x96xf32>
    tpu.vector_store %arg4[%110, %c0_62], %109 {strides = array<i32>} : memref<512x96xf32, #tpu.memory_space<vmem>>, vector<256x96xf32>,
    %c2_i32 = arith.constant 2 : i32
    return
  }
  func.func @transform_0(%arg0: i32) -> (i32, i32) {
    %c0_i32 = arith.constant 0 : i32
    %c0_i32_0 = arith.constant 0 : i32
    return %arg0, %c0_i32 : i32, i32
  }
  func.func @transform_1(%arg0: i32) -> (i32, i32) {
    %c0_i32 = arith.constant 0 : i32
    %c0_i32_0 = arith.constant 0 : i32
    %c0_i32_1 = arith.constant 0 : i32
    return %c0_i32, %c0_i32_0 : i32, i32
  }
  func.func @transform_2(%arg0: i32) -> (i32, i32) {
    %c0_i32 = arith.constant 0 : i32
    %c0_i32_0 = arith.constant 0 : i32
    %c0_i32_1 = arith.constant 0 : i32
    return %c0_i32, %c0_i32_0 : i32, i32
  }
  func.func @transform_3(%arg0: i32) -> (i32, i32) {
    %c0_i32 = arith.constant 0 : i32
    %c0_i32_0 = arith.constant 0 : i32
    return %arg0, %c0_i32 : i32, i32
  }
}

</mosaic_0001>

<llo_original>
// kernel: tpu_custom_call.1
$region0: #{tpu_custom_call.1}
  #allocation0 [shape = 'u32[]', space=smem, size = 0x4, offset = 0x4, fixed_abs, tag = 'smem constant byte address 0x4 - core index']
  #allocation1 [shape = 'u32[144,128]{1,0:T(1,128)}', space=vmem, size = 0x12000, scoped, tag = 'internal scratch']
  %s0 = inlined_call_operand.vmem [shape: f32[512,96], index: 0, kind: input, shape index: {}]
  %s1 = inlined_call_operand.vmem [shape: bf16[768,128], index: 1, kind: input, shape index: {}]
  %s2 = inlined_call_operand.vmem [shape: f32[8,128], index: 2, kind: input, shape index: {}]
  %s3 = inlined_call_operand.vmem [shape: f32[512,96], index: 3, kind: output, shape index: {}]
  %s4 = sld [smem:[#allocation0]]
  $region22: #{tpu_custom_call.1} parent=0
    _
  %s6 = ssub.s32 1, %s4
  %s7 = scalar_select 0, %s6, %s4
  // Predicated region
  $region2: #{tpu_custom_call.1} parent=0 // pred_check
    _
  $region3: #{tpu_custom_call.1} parent=0 // pred_check_branch
    %9 = sbr.rel (0) target = $region5
  $region4: #{tpu_custom_call.1} parent=0 // pred_region
    _
  $region5: #{tpu_custom_call.1} parent=0 // pred_fallthru
    _
  // Predicated region
  $region6: #{tpu_custom_call.1} parent=0 // pred_check
    _
  $region7: #{tpu_custom_call.1} parent=0 // pred_check_branch
    %11 = sbr.rel (0) target = $region9
  $region8: #{tpu_custom_call.1} parent=0 // pred_region
    _
  $region9: #{tpu_custom_call.1} parent=0 // pred_fallthru
    _
  // Predicated region
  $region10: #{tpu_custom_call.1} parent=0 // pred_check
    _
  $region11: #{tpu_custom_call.1} parent=0 // pred_check_branch
    %13 = sbr.rel (0) target = $region13
  $region12: #{tpu_custom_call.1} parent=0 // pred_region
    _
  $region13: #{tpu_custom_call.1} parent=0 // pred_fallthru
    _
  %v15 = vld [vmem:[%s0] sm:$0xff]
  %v16 = vld [vmem:[%s0 + $0x8] sm:$0xff]
  %v17 = vld [vmem:[%s0 + $0x10] sm:$0xff]
  %v18 = vld [vmem:[%s0 + $0x18] sm:$0xff]
  %v19 = vld [vmem:[%s0 + $0x20] sm:$0xff]
  %v20 = vld [vmem:[%s0 + $0x28] sm:$0xff]
  %v21 = vld [vmem:[%s0 + $0x30] sm:$0xff]
  %v22 = vld [vmem:[%s0 + $0x38] sm:$0xff]
  %v23 = vld [vmem:[%s0 + $0x40] sm:$0xff]
  %v24 = vld [vmem:[%s0 + $0x48] sm:$0xff]
  %v25 = vld [vmem:[%s0 + $0x50] sm:$0xff]
  %v26 = vld [vmem:[%s0 + $0x58] sm:$0xff]
  %v27 = vld [vmem:[%s0 + $0x60] sm:$0xff]
  %v28 = vld [vmem:[%s0 + $0x68] sm:$0xff]
  %v29 = vld [vmem:[%s0 + $0x70] sm:$0xff]
  %v30 = vld [vmem:[%s0 + $0x78] sm:$0xff]
  %v31 = vld [vmem:[%s0 + $0x80] sm:$0xff]
  %v32 = vld [vmem:[%s0 + $0x88] sm:$0xff]
  %v33 = vld [vmem:[%s0 + $0x90] sm:$0xff]
  %v34 = vld [vmem:[%s0 + $0x98] sm:$0xff]
  %v35 = vld [vmem:[%s0 + $0xa0] sm:$0xff]
  %v36 = vld [vmem:[%s0 + $0xa8] sm:$0xff]
  %v37 = vld [vmem:[%s0 + $0xb0] sm:$0xff]
  %v38 = vld [vmem:[%s0 + $0xb8] sm:$0xff]
  %v39 = vld [vmem:[%s0 + $0xc0] sm:$0xff]
  %v40 = vld [vmem:[%s0 + $0xc8] sm:$0xff]
  %v41 = vld [vmem:[%s0 + $0xd0] sm:$0xff]
  %v42 = vld [vmem:[%s0 + $0xd8] sm:$0xff]
  %v43 = vld [vmem:[%s0 + $0xe0] sm:$0xff]
  %v44 = vld [vmem:[%s0 + $0xe8] sm:$0xff]
  %v45 = vld [vmem:[%s0 + $0xf0] sm:$0xff]
  %v46 = vld [vmem:[%s0 + $0xf8] sm:$0xff]
  %v47 = vpack.c.bf16 %v16, %v15
  %v48 = vpack.c.bf16 %v18, %v17
  %v49 = vpack.c.bf16 %v20, %v19
  %v50 = vpack.c.bf16 %v22, %v21
  %v51 = vpack.c.bf16 %v24, %v23
  %v52 = vpack.c.bf16 %v26, %v25
  %v53 = vpack.c.bf16 %v28, %v27
  %v54 = vpack.c.bf16 %v30, %v29
  %v55 = vpack.c.bf16 %v32, %v31
  %v56 = vpack.c.bf16 %v34, %v33
  %v57 = vpack.c.bf16 %v36, %v35
  %v58 = vpack.c.bf16 %v38, %v37
  %v59 = vpack.c.bf16 %v40, %v39
  %v60 = vpack.c.bf16 %v42, %v41
  %v61 = vpack.c.bf16 %v44, %v43
  %v62 = vpack.c.bf16 %v46, %v45
  %v63 = vld [vmem:[%s1] sm:$0xf]
  %v64 = vld [vmem:[%s1 + $0x4] sm:$0xf]
  %v65 = vld [vmem:[%s1 + $0x8] sm:$0xf]
  %v66 = vld [vmem:[%s1 + $0xc] sm:$0xf]
  %v67 = vld [vmem:[%s1 + $0x10] sm:$0xf]
  %v68 = vld [vmem:[%s1 + $0x14] sm:$0xf]
  %v69 = vld [vmem:[%s1 + $0x18] sm:$0xf]
  %v70 = vld [vmem:[%s1 + $0x1c] sm:$0xf]
  %v71 = vld [vmem:[%s1 + $0x20] sm:$0xf]
  %v72 = vld [vmem:[%s1 + $0x24] sm:$0xf]
  %v73 = vld [vmem:[%s1 + $0x28] sm:$0xf]
  %v74 = vld [vmem:[%s1 + $0x2c] sm:$0xf]
  %v75 = vld [vmem:[%s2] sm:$0x1]
  %v76 = vlaneseq
  %v77 = vshrl.u32 %v76, 7
  %v78 = vsub.s32 0, %v77
  %v79 = vrot.slane %v75, %v78
  %v92 = vunpack.c.l.b16 %v63
  %v93 = vunpack.c.l.b16 %v64
  %v94 = vunpack.c.l.b16 %v65
  %v95 = vunpack.c.l.b16 %v66
  %v96 = vunpack.c.l.b16 %v67
  %v97 = vunpack.c.l.b16 %v68
  %v98 = vunpack.c.l.b16 %v69
  %v99 = vunpack.c.l.b16 %v70
  %v100 = vunpack.c.l.b16 %v71
  %v101 = vunpack.c.l.b16 %v72
  %v102 = vunpack.c.l.b16 %v73
  %v103 = vunpack.c.l.b16 %v74
  %v104 = vpack.c.b16 %v93, %v92
  %v105 = vpack.c.b16 %v95, %v94
  %v106 = vpack.c.b16 %v97, %v96
  %v107 = vpack.c.b16 %v99, %v98
  %v108 = vpack.c.b16 %v101, %v100
  %v109 = vpack.c.b16 %v103, %v102
  %vm116 = vcmask 785408
  %v118 = vsel %vm116, %v47, 0
  %v121 = vsel %vm116, %v48, 0
  %v124 = vsel %vm116, %v49, 0
  %v127 = vsel %vm116, %v50, 0
  %v130 = vsel %vm116, %v51, 0
  %v133 = vsel %vm116, %v52, 0
  %v136 = vsel %vm116, %v53, 0
  %v139 = vsel %vm116, %v54, 0
  %v142 = vsel %vm116, %v55, 0
  %v145 = vsel %vm116, %v56, 0
  %v148 = vsel %vm116, %v57, 0
  %v151 = vsel %vm116, %v58, 0
  %v154 = vsel %vm116, %v59, 0
  %v157 = vsel %vm116, %v60, 0
  %v160 = vsel %vm116, %v61, 0
  %v163 = vsel %vm116, %v62, 0
  %165 = vmatprep.subr.bf16.mxu0 0
  %166 = vmatpush1.bf16.msra.mxu0 %v104
  %167 = vmatprep.subr.bf16.mxu0 0
  %168 = vmatpush1.bf16.msra.mxu0 %v105
  %169 = vmatprep.subr.bf16.mxu0 0
  %170 = vmatpush1.bf16.msra.mxu0 %v106
  %171 = vmatprep.subr.bf16.mxu0 0
  %172 = vmatpush1.bf16.msra.mxu0 %v107
  %173 = vmatprep.subr.bf16.mxu0 0
  %174 = vmatpush1.bf16.msra.mxu0 %v108
  %175 = vmatprep.subr.bf16.mxu0 0
  %176 = vmatpush1.bf16.msra.mxu0 %v109
  %177 = vmatprep.subr.bf16.mxu0 0
  %178 = vmatpush1.bf16.msra.mxu0 0
  %179 = vmatprep.subr.bf16.mxu0 0
  %180 = vmatpush1.bf16.msra.mxu0 0
  %181 = vmatprep.subr.bf16.mxu0 0
  %182 = vmatpush1.bf16.msra.mxu0 0
  %183 = vmatprep.subr.bf16.mxu0 0
  %184 = vmatpush1.bf16.msra.mxu0 0
  %185 = vmatprep.subr.bf16.mxu0 0
  %186 = vmatpush1.bf16.msra.mxu0 0
  %187 = vmatprep.subr.bf16.mxu0 0
  %188 = vmatpush1.bf16.msra.mxu0 0
  %189 = vmatprep.subr.bf16.mxu0 0
  %190 = vmatpush1.bf16.msra.mxu0 0
  %191 = vmatprep.subr.bf16.mxu0 0
  %192 = vmatpush1.bf16.msra.mxu0 0
  %193 = vmatprep.subr.bf16.mxu0 0
  %194 = vmatpush1.bf16.msra.mxu0 0
  %195 = vmatprep.subr.bf16.mxu0 0
  %196 = vmatpush1.bf16.msra.mxu0 0
  %197 = vmatprep.mubr.bf16.mxu0 0
  %198 = vmatmul.mubr.bf16.gmra.mrb[0].mxu0 %v118
  %v199 = vpop.f32.mrb[0].mxu0
  %v200 = vadd.f32 %v79, %v199
  %v201 = vpop.f32.mrb[0].mxu0
  %v202 = vpop.f32.mrb[0].mxu0
  %v203 = vadd.f32 %v79, %v202
  %v204 = vpop.f32.mrb[0].mxu0
  %205 = vmatprep.mubr.bf16.mxu0 0
  %206 = vmatmul.mubr.bf16.gmra.mrb[0].mxu0 %v121
  %v207 = vpop.f32.mrb[0].mxu0
  %v208 = vadd.f32 %v79, %v207
  %v209 = vpop.f32.mrb[0].mxu0
  %v210 = vpop.f32.mrb[0].mxu0
  %v211 = vadd.f32 %v79, %v210
  %v212 = vpop.f32.mrb[0].mxu0
  %213 = vmatprep.mubr.bf16.mxu0 0
  %214 = vmatmul.mubr.bf16.gmra.mrb[0].mxu0 %v124
  %v215 = vpop.f32.mrb[0].mxu0
  %v216 = vadd.f32 %v79, %v215
  %v217 = vpop.f32.mrb[0].mxu0
  %v218 = vpop.f32.mrb[0].mxu0
  %v219 = vadd.f32 %v79, %v218
  %v220 = vpop.f32.mrb[0].mxu0
  %221 = vmatprep.mubr.bf16.mxu0 0
  %222 = vmatmul.mubr.bf16.gmra.mrb[0].mxu0 %v127
  %v223 = vpop.f32.mrb[0].mxu0
  %v224 = vadd.f32 %v79, %v223
  %v225 = vpop.f32.mrb[0].mxu0
  %v226 = vpop.f32.mrb[0].mxu0
  %v227 = vadd.f32 %v79, %v226
  %v228 = vpop.f32.mrb[0].mxu0
  %229 = vmatprep.mubr.bf16.mxu0 0
  %230 = vmatmul.mubr.bf16.gmra.mrb[0].mxu0 %v130
  %v231 = vpop.f32.mrb[0].mxu0
  %v232 = vadd.f32 %v79, %v231
  %v233 = vpop.f32.mrb[0].mxu0
  %v234 = vpop.f32.mrb[0].mxu0
  %v235 = vadd.f32 %v79, %v234
  %v236 = vpop.f32.mrb[0].mxu0
  %237 = vmatprep.mubr.bf16.mxu0 0
  %238 = vmatmul.mubr.bf16.gmra.mrb[0].mxu0 %v133
  %v239 = vpop.f32.mrb[0].mxu0
  %v240 = vadd.f32 %v79, %v239
  %v241 = vpop.f32.mrb[0].mxu0
  %v242 = vpop.f32.mrb[0].mxu0
  %v243 = vadd.f32 %v79, %v242
  %v244 = vpop.f32.mrb[0].mxu0
  %245 = vmatprep.mubr.bf16.mxu0 0
  %246 = vmatmul.mubr.bf16.gmra.mrb[0].mxu0 %v136
  %v247 = vpop.f32.mrb[0].mxu0
  %v248 = vadd.f32 %v79, %v247
  %v249 = vpop.f32.mrb[0].mxu0
  %v250 = vpop.f32.mrb[0].mxu0
  %v251 = vadd.f32 %v79, %v250
  %v252 = vpop.f32.mrb[0].mxu0
  %253 = vmatprep.mubr.bf16.mxu0 0
  %254 = vmatmul.mubr.bf16.gmra.mrb[0].mxu0 %v139
  %v255 = vpop.f32.mrb[0].mxu0
  %v256 = vadd.f32 %v79, %v255
  %v257 = vpop.f32.mrb[0].mxu0
  %v258 = vpop.f32.mrb[0].mxu0
  %v259 = vadd.f32 %v79, %v258
  %v260 = vpop.f32.mrb[0].mxu0
  %261 = vmatprep.mubr.bf16.mxu0 0
  %262 = vmatmul.mubr.bf16.gmra.mrb[0].mxu0 %v142
  %v263 = vpop.f32.mrb[0].mxu0
  %v264 = vadd.f32 %v79, %v263
  %v265 = vpop.f32.mrb[0].mxu0
  %v266 = vpop.f32.mrb[0].mxu0
  %v267 = vadd.f32 %v79, %v266
  %v268 = vpop.f32.mrb[0].mxu0
  %269 = vmatprep.mubr.bf16.mxu0 0
  %270 = vmatmul.mubr.bf16.gmra.mrb[0].mxu0 %v145
  %v271 = vpop.f32.mrb[0].mxu0
  %v272 = vadd.f32 %v79, %v271
  %v273 = vpop.f32.mrb[0].mxu0
  %v274 = vpop.f32.mrb[0].mxu0
  %v275 = vadd.f32 %v79, %v274
  %v276 = vpop.f32.mrb[0].mxu0
  %277 = vmatprep.mubr.bf16.mxu0 0
  %278 = vmatmul.mubr.bf16.gmra.mrb[0].mxu0 %v148
  %v279 = vpop.f32.mrb[0].mxu0
  %v280 = vadd.f32 %v79, %v279
  %v281 = vpop.f32.mrb[0].mxu0
  %v282 = vpop.f32.mrb[0].mxu0
  %v283 = vadd.f32 %v79, %v282
  %v284 = vpop.f32.mrb[0].mxu0
  %285 = vmatprep.mubr.bf16.mxu0 0
  %286 = vmatmul.mubr.bf16.gmra.mrb[0].mxu0 %v151
  %v287 = vpop.f32.mrb[0].mxu0
  %v288 = vadd.f32 %v79, %v287
  %v289 = vpop.f32.mrb[0].mxu0
  %v290 = vpop.f32.mrb[0].mxu0
  %v291 = vadd.f32 %v79, %v290
  %v292 = vpop.f32.mrb[0].mxu0
  %293 = vmatprep.mubr.bf16.mxu0 0
  %294 = vmatmul.mubr.bf16.gmra.mrb[0].mxu0 %v154
  %v295 = vpop.f32.mrb[0].mxu0
  %v296 = vadd.f32 %v79, %v295
  %v297 = vpop.f32.mrb[0].mxu0
  %v298 = vpop.f32.mrb[0].mxu0
  %v299 = vadd.f32 %v79, %v298
  %v300 = vpop.f32.mrb[0].mxu0
  %301 = vmatprep.mubr.bf16.mxu0 0
  %302 = vmatmul.mubr.bf16.gmra.mrb[0].mxu0 %v157
  %v303 = vpop.f32.mrb[0].mxu0
  %v304 = vadd.f32 %v79, %v303
  %v305 = vpop.f32.mrb[0].mxu0
  %v306 = vpop.f32.mrb[0].mxu0
  %v307 = vadd.f32 %v79, %v306
  %v308 = vpop.f32.mrb[0].mxu0
  %309 = vmatprep.mubr.bf16.mxu0 0
  %310 = vmatmul.mubr.bf16.gmra.mrb[0].mxu0 %v160
  %v311 = vpop.f32.mrb[0].mxu0
  %v312 = vadd.f32 %v79, %v311
  %v313 = vpop.f32.mrb[0].mxu0
  %v314 = vpop.f32.mrb[0].mxu0
  %v315 = vadd.f32 %v79, %v314
  %v316 = vpop.f32.mrb[0].mxu0
  %317 = vmatprep.mubr.bf16.mxu0 0
  %318 = vmatmul.mubr.bf16.gmra.mrb[0].mxu0 %v163
  %v319 = vpop.f32.mrb[0].mxu0
  %v320 = vadd.f32 %v79, %v319
  %v321 = vpop.f32.mrb[0].mxu0
  %v322 = vpop.f32.mrb[0].mxu0
  %v323 = vadd.f32 %v79, %v322
  %v324 = vpop.f32.mrb[0].mxu0
  %325 = vdwg.mxu0
  %v326 = vmax.f32 %v200, 0.0
  %v327 = vmax.f32 %v203, 0.0
  %v328 = vmax.f32 %v208, 0.0
  %v329 = vmax.f32 %v211, 0.0
  %v330 = vmax.f32 %v216, 0.0
  %v331 = vmax.f32 %v219, 0.0
  %v332 = vmax.f32 %v224, 0.0
  %v333 = vmax.f32 %v227, 0.0
  %v334 = vmax.f32 %v232, 0.0
  %v335 = vmax.f32 %v235, 0.0
  %v336 = vmax.f32 %v240, 0.0
  %v337 = vmax.f32 %v243, 0.0
  %v338 = vmax.f32 %v248, 0.0
  %v339 = vmax.f32 %v251, 0.0
  %v340 = vmax.f32 %v256, 0.0
  %v341 = vmax.f32 %v259, 0.0
  %v342 = vmax.f32 %v264, 0.0
  %v343 = vmax.f32 %v267, 0.0
  %v344 = vmax.f32 %v272, 0.0
  %v345 = vmax.f32 %v275, 0.0
  %v346 = vmax.f32 %v280, 0.0
  %v347 = vmax.f32 %v283, 0.0
  %v348 = vmax.f32 %v288, 0.0
  %v349 = vmax.f32 %v291, 0.0
  %v350 = vmax.f32 %v296, 0.0
  %v351 = vmax.f32 %v299, 0.0
  %v352 = vmax.f32 %v304, 0.0
  %v353 = vmax.f32 %v307, 0.0
  %v354 = vmax.f32 %v312, 0.0
  %v355 = vmax.f32 %v315, 0.0
  %v356 = vmax.f32 %v320, 0.0
  %v357 = vmax.f32 %v323, 0.0
  %v358 = vpack.c.bf16 %v327, %v326
  %v359 = vpack.c.bf16 %v329, %v328
  %v360 = vpack.c.bf16 %v331, %v330
  %v361 = vpack.c.bf16 %v333, %v332
  %v362 = vpack.c.bf16 %v335, %v334
  %v363 = vpack.c.bf16 %v337, %v336
  %v364 = vpack.c.bf16 %v339, %v338
  %v365 = vpack.c.bf16 %v341, %v340
  %v366 = vpack.c.bf16 %v343, %v342
  %v367 = vpack.c.bf16 %v345, %v344
  %v368 = vpack.c.bf16 %v347, %v346
  %v369 = vpack.c.bf16 %v349, %v348
  %v370 = vpack.c.bf16 %v351, %v350
  %v371 = vpack.c.bf16 %v353, %v352
  %v372 = vpack.c.bf16 %v355, %v354
  %v373 = vpack.c.bf16 %v357, %v356
  %v374 = vld [vmem:[%s1 + $0x40] sm:$0xf]
  %v375 = vld [vmem:[%s1 + $0x44] sm:$0xf]
  %v376 = vld [vmem:[%s1 + $0x48] sm:$0xf]
  %v377 = vld [vmem:[%s1 + $0x4c] sm:$0xf]
  %v378 = vld [vmem:[%s1 + $0x50] sm:$0xf]
  %v379 = vld [vmem:[%s1 + $0x54] sm:$0xf]
  %v380 = vld [vmem:[%s1 + $0x58] sm:$0xf]
  %v381 = vld [vmem:[%s1 + $0x5c] sm:$0xf]
  %v382 = vld [vmem:[%s1 + $0x60] sm:$0xf]
  %v383 = vld [vmem:[%s1 + $0x64] sm:$0xf]
  %v384 = vld [vmem:[%s1 + $0x68] sm:$0xf]
  %v385 = vld [vmem:[%s1 + $0x6c] sm:$0xf]
  %v386 = vld [vmem:[%s1 + $0x70] sm:$0xf]
  %v387 = vld [vmem:[%s1 + $0x74] sm:$0xf]
  %v388 = vld [vmem:[%s1 + $0x78] sm:$0xf]
  %v389 = vld [vmem:[%s1 + $0x7c] sm:$0xf]
  %v390 = vld [vmem:[%s2 + $0x1] sm:$0x1]
  %v391 = vlaneseq
  %v392 = vshrl.u32 %v391, 7
  %v393 = vsub.s32 0, %v392
  %v394 = vrot.slane %v390, %v393
  %v411 = vunpack.c.l.b16 %v374
  %v412 = vunpack.c.l.b16 %v375
  %v413 = vunpack.c.l.b16 %v376
  %v414 = vunpack.c.l.b16 %v377
  %v415 = vunpack.c.l.b16 %v378
  %v416 = vunpack.c.l.b16 %v379
  %v417 = vunpack.c.l.b16 %v380
  %v418 = vunpack.c.l.b16 %v381
  %v419 = vunpack.c.l.b16 %v382
  %v420 = vunpack.c.l.b16 %v383
  %v421 = vunpack.c.l.b16 %v384
  %v422 = vunpack.c.l.b16 %v385
  %v423 = vunpack.c.l.b16 %v386
  %v424 = vunpack.c.l.b16 %v387
  %v425 = vunpack.c.l.b16 %v388
  %v426 = vunpack.c.l.b16 %v389
  %v427 = vpack.c.b16 %v412, %v411
  %v428 = vpack.c.b16 %v414, %v413
  %v429 = vpack.c.b16 %v416, %v415
  %v430 = vpack.c.b16 %v418, %v417
  %v431 = vpack.c.b16 %v420, %v419
  %v432 = vpack.c.b16 %v422, %v421
  %v433 = vpack.c.b16 %v424, %v423
  %v434 = vpack.c.b16 %v426, %v425
  %443 = vmatprep.subr.bf16.mxu0 0
  %444 = vmatpush1.bf16.msra.mxu0 %v427
  %445 = vmatprep.subr.bf16.mxu0 0
  %446 = vmatpush1.bf16.msra.mxu0 %v428
  %447 = vmatprep.subr.bf16.mxu0 0
  %448 = vmatpush1.bf16.msra.mxu0 %v429
  %449 = vmatprep.subr.bf16.mxu0 0
  %450 = vmatpush1.bf16.msra.mxu0 %v430
  %451 = vmatprep.subr.bf16.mxu0 0
  %452 = vmatpush1.bf16.msra.mxu0 %v431
  %453 = vmatprep.subr.bf16.mxu0 0
  %454 = vmatpush1.bf16.msra.mxu0 %v432
  %455 = vmatprep.subr.bf16.mxu0 0
  %456 = vmatpush1.bf16.msra.mxu0 %v433
  %457 = vmatprep.subr.bf16.mxu0 0
  %458 = vmatpush1.bf16.msra.mxu0 %v434
  %459 = vmatprep.subr.bf16.mxu0 0
  %460 = vmatpush1.bf16.msra.mxu0 0
  %461 = vmatprep.subr.bf16.mxu0 0
  %462 = vmatpush1.bf16.msra.mxu0 0
  %463 = vmatprep.subr.bf16.mxu0 0
  %464 = vmatpush1.bf16.msra.mxu0 0
  %465 = vmatprep.subr.bf16.mxu0 0
  %466 = vmatpush1.bf16.msra.mxu0 0
  %467 = vmatprep.subr.bf16.mxu0 0
  %468 = vmatpush1.bf16.msra.mxu0 0
  %469 = vmatprep.subr.bf16.mxu0 0
  %470 = vmatpush1.bf16.msra.mxu0 0
  %471 = vmatprep.subr.bf16.mxu0 0
  %472 = vmatpush1.bf16.msra.mxu0 0
  %473 = vmatprep.subr.bf16.mxu0 0
  %474 = vmatpush1.bf16.msra.mxu0 0
  %475 = vmatprep.mubr.bf16.mxu0 0
  %476 = vmatmul.mubr.bf16.gmra.mrb[0].mxu0 %v358
  %v477 = vpop.f32.mrb[0].mxu0
  %v478 = vadd.f32 %v394, %v477
  %v479 = vpop.f32.mrb[0].mxu0
  %v480 = vpop.f32.mrb[0].mxu0
  %v481 = vadd.f32 %v394, %v480
  %v482 = vpop.f32.mrb[0].mxu0
  %483 = vmatprep.mubr.bf16.mxu0 0
  %484 = vmatmul.mubr.bf16.gmra.mrb[0].mxu0 %v359
  %v485 = vpop.f32.mrb[0].mxu0
  %v486 = vadd.f32 %v394, %v485
  %v487 = vpop.f32.mrb[0].mxu0
  %v488 = vpop.f32.mrb[0].mxu0
  %v489 = vadd.f32 %v394, %v488
  %v490 = vpop.f32.mrb[0].mxu0
  %491 = vmatprep.mubr.bf16.mxu0 0
  %492 = vmatmul.mubr.bf16.gmra.mrb[0].mxu0 %v360
  %v493 = vpop.f32.mrb[0].mxu0
  %v494 = vadd.f32 %v394, %v493
  %v495 = vpop.f32.mrb[0].mxu0
  %v496 = vpop.f32.mrb[0].mxu0
  %v497 = vadd.f32 %v394, %v496
  %v498 = vpop.f32.mrb[0].mxu0
  %499 = vmatprep.mubr.bf16.mxu0 0
  %500 = vmatmul.mubr.bf16.gmra.mrb[0].mxu0 %v361
  %v501 = vpop.f32.mrb[0].mxu0
  %v502 = vadd.f32 %v394, %v501
  %v503 = vpop.f32.mrb[0].mxu0
  %v504 = vpop.f32.mrb[0].mxu0
  %v505 = vadd.f32 %v394, %v504
  %v506 = vpop.f32.mrb[0].mxu0
  %507 = vmatprep.mubr.bf16.mxu0 0
  %508 = vmatmul.mubr.bf16.gmra.mrb[0].mxu0 %v362
  %v509 = vpop.f32.mrb[0].mxu0
  %v510 = vadd.f32 %v394, %v509
  %v511 = vpop.f32.mrb[0].mxu0
  %v512 = vpop.f32.mrb[0].mxu0
  %v513 = vadd.f32 %v394, %v512
  %v514 = vpop.f32.mrb[0].mxu0
  %515 = vmatprep.mubr.bf16.mxu0 0
  %516 = vmatmul.mubr.bf16.gmra.mrb[0].mxu0 %v363
  %v517 = vpop.f32.mrb[0].mxu0
  %v518 = vadd.f32 %v394, %v517
  %v519 = vpop.f32.mrb[0].mxu0
  %v520 = vpop.f32.mrb[0].mxu0
  %v521 = vadd.f32 %v394, %v520
  %v522 = vpop.f32.mrb[0].mxu0
  %523 = vmatprep.mubr.bf16.mxu0 0
  %524 = vmatmul.mubr.bf16.gmra.mrb[0].mxu0 %v364
  %v525 = vpop.f32.mrb[0].mxu0
  %v526 = vadd.f32 %v394, %v525
  %v527 = vpop.f32.mrb[0].mxu0
  %v528 = vpop.f32.mrb[0].mxu0
  %v529 = vadd.f32 %v394, %v528
  %v530 = vpop.f32.mrb[0].mxu0
  %531 = vmatprep.mubr.bf16.mxu0 0
  %532 = vmatmul.mubr.bf16.gmra.mrb[0].mxu0 %v365
  %v533 = vpop.f32.mrb[0].mxu0
  %v534 = vadd.f32 %v394, %v533
  %v535 = vpop.f32.mrb[0].mxu0
  %v536 = vpop.f32.mrb[0].mxu0
  %v537 = vadd.f32 %v394, %v536
  %v538 = vpop.f32.mrb[0].mxu0
  %539 = vmatprep.mubr.bf16.mxu0 0
  %540 = vmatmul.mubr.bf16.gmra.mrb[0].mxu0 %v366
  %v541 = vpop.f32.mrb[0].mxu0
  %v542 = vadd.f32 %v394, %v541
  %v543 = vpop.f32.mrb[0].mxu0
  %v544 = vpop.f32.mrb[0].mxu0
  %v545 = vadd.f32 %v394, %v544
  %v546 = vpop.f32.mrb[0].mxu0
  %547 = vmatprep.mubr.bf16.mxu0 0
  %548 = vmatmul.mubr.bf16.gmra.mrb[0].mxu0 %v367
  %v549 = vpop.f32.mrb[0].mxu0
  %v550 = vadd.f32 %v394, %v549
  %v551 = vpop.f32.mrb[0].mxu0
  %v552 = vpop.f32.mrb[0].mxu0
  %v553 = vadd.f32 %v394, %v552
  %v554 = vpop.f32.mrb[0].mxu0
  %555 = vmatprep.mubr.bf16.mxu0 0
  %556 = vmatmul.mubr.bf16.gmra.mrb[0].mxu0 %v368
  %v557 = vpop.f32.mrb[0].mxu0
  %v558 = vadd.f32 %v394, %v557
  %v559 = vpop.f32.mrb[0].mxu0
  %v560 = vpop.f32.mrb[0].mxu0
  %v561 = vadd.f32 %v394, %v560
  %v562 = vpop.f32.mrb[0].mxu0
  %563 = vmatprep.mubr.bf16.mxu0 0
  %564 = vmatmul.mubr.bf16.gmra.mrb[0].mxu0 %v369
  %v565 = vpop.f32.mrb[0].mxu0
  %v566 = vadd.f32 %v394, %v565
  %v567 = vpop.f32.mrb[0].mxu0
  %v568 = vpop.f32.mrb[0].mxu0
  %v569 = vadd.f32 %v394, %v568
  %v570 = vpop.f32.mrb[0].mxu0
  %571 = vmatprep.mubr.bf16.mxu0 0
  %572 = vmatmul.mubr.bf16.gmra.mrb[0].mxu0 %v370
  %v573 = vpop.f32.mrb[0].mxu0
  %v574 = vadd.f32 %v394, %v573
  %v575 = vpop.f32.mrb[0].mxu0
  %v576 = vpop.f32.mrb[0].mxu0
  %v577 = vadd.f32 %v394, %v576
  %v578 = vpop.f32.mrb[0].mxu0
  %579 = vmatprep.mubr.bf16.mxu0 0
  %580 = vmatmul.mubr.bf16.gmra.mrb[0].mxu0 %v371
  %v581 = vpop.f32.mrb[0].mxu0
  %v582 = vadd.f32 %v394, %v581
  %v583 = vpop.f32.mrb[0].mxu0
  %v584 = vpop.f32.mrb[0].mxu0
  %v585 = vadd.f32 %v394, %v584
  %v586 = vpop.f32.mrb[0].mxu0
  %587 = vmatprep.mubr.bf16.mxu0 0
  %588 = vmatmul.mubr.bf16.gmra.mrb[0].mxu0 %v372
  %v589 = vpop.f32.mrb[0].mxu0
  %v590 = vadd.f32 %v394, %v589
  %v591 = vpop.f32.mrb[0].mxu0
  %v592 = vpop.f32.mrb[0].mxu0
  %v593 = vadd.f32 %v394, %v592
  %v594 = vpop.f32.mrb[0].mxu0
  %595 = vmatprep.mubr.bf16.mxu0 0
  %596 = vmatmul.mubr.bf16.gmra.mrb[0].mxu0 %v373
  %v597 = vpop.f32.mrb[0].mxu0
  %v598 = vadd.f32 %v394, %v597
  %v599 = vpop.f32.mrb[0].mxu0
  %v600 = vpop.f32.mrb[0].mxu0
  %v601 = vadd.f32 %v394, %v600
  %v602 = vpop.f32.mrb[0].mxu0
  %603 = vdwg.mxu0
  %v604 = vmax.f32 %v478, 0.0
  %v605 = vmax.f32 %v481, 0.0
  %v606 = vmax.f32 %v486, 0.0
  %v607 = vmax.f32 %v489, 0.0
  %v608 = vmax.f32 %v494, 0.0
  %v609 = vmax.f32 %v497, 0.0
  %v610 = vmax.f32 %v502, 0.0
  %v611 = vmax.f32 %v505, 0.0
  %v612 = vmax.f32 %v510, 0.0
  %v613 = vmax.f32 %v513, 0.0
  %v614 = vmax.f32 %v518, 0.0
  %v615 = vmax.f32 %v521, 0.0
  %v616 = vmax.f32 %v526, 0.0
  %v617 = vmax.f32 %v529, 0.0
  %v618 = vmax.f32 %v534, 0.0
  %v619 = vmax.f32 %v537, 0.0
  %v620 = vmax.f32 %v542, 0.0
  %v621 = vmax.f32 %v545, 0.0
  %v622 = vmax.f32 %v550, 0.0
  %v623 = vmax.f32 %v553, 0.0
  %v624 = vmax.f32 %v558, 0.0
  %v625 = vmax.f32 %v561, 0.0
  %v626 = vmax.f32 %v566, 0.0
  %v627 = vmax.f32 %v569, 0.0
  %v628 = vmax.f32 %v574, 0.0
  %v629 = vmax.f32 %v577, 0.0
  %v630 = vmax.f32 %v582, 0.0
  %v631 = vmax.f32 %v585, 0.0
  %v632 = vmax.f32 %v590, 0.0
  %v633 = vmax.f32 %v593, 0.0
  %v634 = vmax.f32 %v598, 0.0
  %v635 = vmax.f32 %v601, 0.0
  %v636 = vpack.c.bf16 %v605, %v604
  %v637 = vpack.c.bf16 %v607, %v606
  %v638 = vpack.c.bf16 %v609, %v608
  %v639 = vpack.c.bf16 %v611, %v610
  %v640 = vpack.c.bf16 %v613, %v612
  %v641 = vpack.c.bf16 %v615, %v614
  %v642 = vpack.c.bf16 %v617, %v616
  %v643 = vpack.c.bf16 %v619, %v618
  %v644 = vpack.c.bf16 %v621, %v620
  %v645 = vpack.c.bf16 %v623, %v622
  %v646 = vpack.c.bf16 %v625, %v624
  %v647 = vpack.c.bf16 %v627, %v626
  %v648 = vpack.c.bf16 %v629, %v628
  %v649 = vpack.c.bf16 %v631, %v630
  %v650 = vpack.c.bf16 %v633, %v632
  %v651 = vpack.c.bf16 %v635, %v634
  %v652 = vld [vmem:[%s1 + $0x80] sm:$0xf]
  %v653 = vld [vmem:[%s1 + $0x84] sm:$0xf]
  %v654 = vld [vmem:[%s1 + $0x88] sm:$0xf]
  %v655 = vld [vmem:[%s1 + $0x8c] sm:$0xf]
  %v656 = vld [vmem:[%s1 + $0x90] sm:$0xf]
  %v657 = vld [vmem:[%s1 + $0x94] sm:$0xf]
  %v658 = vld [vmem:[%s1 + $0x98] sm:$0xf]
  %v659 = vld [vmem:[%s1 + $0x9c] sm:$0xf]
  %v660 = vld [vmem:[%s1 + $0xa0] sm:$0xf]
  %v661 = vld [vmem:[%s1 + $0xa4] sm:$0xf]
  %v662 = vld [vmem:[%s1 + $0xa8] sm:$0xf]
  %v663 = vld [vmem:[%s1 + $0xac] sm:$0xf]
  %v664 = vld [vmem:[%s1 + $0xb0] sm:$0xf]
  %v665 = vld [vmem:[%s1 + $0xb4] sm:$0xf]
  %v666 = vld [vmem:[%s1 + $0xb8] sm:$0xf]
  %v667 = vld [vmem:[%s1 + $0xbc] sm:$0xf]
  %v668 = vld [vmem:[%s2 + $0x2] sm:$0x1]
  %v669 = vlaneseq
  %v670 = vshrl.u32 %v669, 7
  %v671 = vsub.s32 0, %v670
  %v672 = vrot.slane %v668, %v671
  %v689 = vunpack.c.l.b16 %v652
  %v690 = vunpack.c.l.b16 %v653
  %v691 = vunpack.c.l.b16 %v654
  %v692 = vunpack.c.l.b16 %v655
  %v693 = vunpack.c.l.b16 %v656
  %v694 = vunpack.c.l.b16 %v657
  %v695 = vunpack.c.l.b16 %v658
  %v696 = vunpack.c.l.b16 %v659
  %v697 = vunpack.c.l.b16 %v660
  %v698 = vunpack.c.l.b16 %v661
  %v699 = vunpack.c.l.b16 %v662
  %v700 = vunpack.c.l.b16 %v663
  %v701 = vunpack.c.l.b16 %v664
  %v702 = vunpack.c.l.b16 %v665
  %v703 = vunpack.c.l.b16 %v666
  %v704 = vunpack.c.l.b16 %v667
  %v705 = vpack.c.b16 %v690, %v689
  %v706 = vpack.c.b16 %v692, %v691
  %v707 = vpack.c.b16 %v694, %v693
  %v708 = vpack.c.b16 %v696, %v695
  %v709 = vpack.c.b16 %v698, %v697
  %v710 = vpack.c.b16 %v700, %v699
  %v711 = vpack.c.b16 %v702, %v701
  %v712 = vpack.c.b16 %v704, %v703
  %721 = vmatprep.subr.bf16.mxu0 0
  %722 = vmatpush1.bf16.msra.mxu0 %v705
  %723 = vmatprep.subr.bf16.mxu0 0
  %724 = vmatpush1.bf16.msra.mxu0 %v706
  %725 = vmatprep.subr.bf16.mxu0 0
  %726 = vmatpush1.bf16.msra.mxu0 %v707
  %727 = vmatprep.subr.bf16.mxu0 0
  %728 = vmatpush1.bf16.msra.mxu0 %v708
  %729 = vmatprep.subr.bf16.mxu0 0
  %730 = vmatpush1.bf16.msra.mxu0 %v709
  %731 = vmatprep.subr.bf16.mxu0 0
  %732 = vmatpush1.bf16.msra.mxu0 %v710
  %733 = vmatprep.subr.bf16.mxu0 0
  %734 = vmatpush1.bf16.msra.mxu0 %v711
  %735 = vmatprep.subr.bf16.mxu0 0
  %736 = vmatpush1.bf16.msra.mxu0 %v712
  %737 = vmatprep.subr.bf16.mxu0 0
  %738 = vmatpush1.bf16.msra.mxu0 0
  %739 = vmatprep.subr.bf16.mxu0 0
  %740 = vmatpush1.bf16.msra.mxu0 0
  %741 = vmatprep.subr.bf16.mxu0 0
  %742 = vmatpush1.bf16.msra.mxu0 0
  %743 = vmatprep.subr.bf16.mxu0 0
  %744 = vmatpush1.bf16.msra.mxu0 0
  %745 = vmatprep.subr.bf16.mxu0 0
  %746 = vmatpush1.bf16.msra.mxu0 0
  %747 = vmatprep.subr.bf16.mxu0 0
  %748 = vmatpush1.bf16.msra.mxu0 0
  %749 = vmatprep.subr.bf16.mxu0 0
  %750 = vmatpush1.bf16.msra.mxu0 0
  %751 = vmatprep.subr.bf16.mxu0 0
  %752 = vmatpush1.bf16.msra.mxu0 0
  %753 = vmatprep.mubr.bf16.mxu0 0
  %754 = vmatmul.mubr.bf16.gmra.mrb[0].mxu0 %v636
  %v755 = vpop.f32.mrb[0].mxu0
  %v756 = vadd.f32 %v672, %v755
  %v757 = vpop.f32.mrb[0].mxu0
  %v758 = vpop.f32.mrb[0].mxu0
  %v759 = vadd.f32 %v672, %v758
  %v760 = vpop.f32.mrb[0].mxu0
  %761 = vmatprep.mubr.bf16.mxu0 0
  %762 = vmatmul.mubr.bf16.gmra.mrb[0].mxu0 %v637
  %v763 = vpop.f32.mrb[0].mxu0
  %v764 = vadd.f32 %v672, %v763
  %v765 = vpop.f32.mrb[0].mxu0
  %v766 = vpop.f32.mrb[0].mxu0
  %v767 = vadd.f32 %v672, %v766
  %v768 = vpop.f32.mrb[0].mxu0
  %769 = vmatprep.mubr.bf16.mxu0 0
  %770 = vmatmul.mubr.bf16.gmra.mrb[0].mxu0 %v638
  %v771 = vpop.f32.mrb[0].mxu0
  %v772 = vadd.f32 %v672, %v771
  %v773 = vpop.f32.mrb[0].mxu0
  %v774 = vpop.f32.mrb[0].mxu0
  %v775 = vadd.f32 %v672, %v774
  %v776 = vpop.f32.mrb[0].mxu0
  %777 = vmatprep.mubr.bf16.mxu0 0
  %778 = vmatmul.mubr.bf16.gmra.mrb[0].mxu0 %v639
  %v779 = vpop.f32.mrb[0].mxu0
  %v780 = vadd.f32 %v672, %v779
  %v781 = vpop.f32.mrb[0].mxu0
  %v782 = vpop.f32.mrb[0].mxu0
  %v783 = vadd.f32 %v672, %v782
  %v784 = vpop.f32.mrb[0].mxu0
  %785 = vmatprep.mubr.bf16.mxu0 0
  %786 = vmatmul.mubr.bf16.gmra.mrb[0].mxu0 %v640
  %v787 = vpop.f32.mrb[0].mxu0
  %v788 = vadd.f32 %v672, %v787
  %v789 = vpop.f32.mrb[0].mxu0
  %v790 = vpop.f32.mrb[0].mxu0
  %v791 = vadd.f32 %v672, %v790
  %v792 = vpop.f32.mrb[0].mxu0
  %793 = vmatprep.mubr.bf16.mxu0 0
  %794 = vmatmul.mubr.bf16.gmra.mrb[0].mxu0 %v641
  %v795 = vpop.f32.mrb[0].mxu0
  %v796 = vadd.f32 %v672, %v795
  %v797 = vpop.f32.mrb[0].mxu0
  %v798 = vpop.f32.mrb[0].mxu0
  %v799 = vadd.f32 %v672, %v798
  %v800 = vpop.f32.mrb[0].mxu0
  %801 = vmatprep.mubr.bf16.mxu0 0
  %802 = vmatmul.mubr.bf16.gmra.mrb[0].mxu0 %v642
  %v803 = vpop.f32.mrb[0].mxu0
  %v804 = vadd.f32 %v672, %v803
  %v805 = vpop.f32.mrb[0].mxu0
  %v806 = vpop.f32.mrb[0].mxu0
  %v807 = vadd.f32 %v672, %v806
  %v808 = vpop.f32.mrb[0].mxu0
  %809 = vmatprep.mubr.bf16.mxu0 0
  %810 = vmatmul.mubr.bf16.gmra.mrb[0].mxu0 %v643
  %v811 = vpop.f32.mrb[0].mxu0
  %v812 = vadd.f32 %v672, %v811
  %v813 = vpop.f32.mrb[0].mxu0
  %v814 = vpop.f32.mrb[0].mxu0
  %v815 = vadd.f32 %v672, %v814
  %v816 = vpop.f32.mrb[0].mxu0
  %817 = vmatprep.mubr.bf16.mxu0 0
  %818 = vmatmul.mubr.bf16.gmra.mrb[0].mxu0 %v644
  %v819 = vpop.f32.mrb[0].mxu0
  %v820 = vadd.f32 %v672, %v819
  %v821 = vpop.f32.mrb[0].mxu0
  %v822 = vpop.f32.mrb[0].mxu0
  %v823 = vadd.f32 %v672, %v822
  %v824 = vpop.f32.mrb[0].mxu0
  %825 = vmatprep.mubr.bf16.mxu0 0
  %826 = vmatmul.mubr.bf16.gmra.mrb[0].mxu0 %v645
  %v827 = vpop.f32.mrb[0].mxu0
  %v828 = vadd.f32 %v672, %v827
  %v829 = vpop.f32.mrb[0].mxu0
  %v830 = vpop.f32.mrb[0].mxu0
  %v831 = vadd.f32 %v672, %v830
  %v832 = vpop.f32.mrb[0].mxu0
  %833 = vmatprep.mubr.bf16.mxu0 0
  %834 = vmatmul.mubr.bf16.gmra.mrb[0].mxu0 %v646
  %v835 = vpop.f32.mrb[0].mxu0
  %v836 = vadd.f32 %v672, %v835
  %v837 = vpop.f32.mrb[0].mxu0
  %v838 = vpop.f32.mrb[0].mxu0
  %v839 = vadd.f32 %v672, %v838
  %v840 = vpop.f32.mrb[0].mxu0
  %841 = vmatprep.mubr.bf16.mxu0 0
  %842 = vmatmul.mubr.bf16.gmra.mrb[0].mxu0 %v647
  %v843 = vpop.f32.mrb[0].mxu0
  %v844 = vadd.f32 %v672, %v843
  %v845 = vpop.f32.mrb[0].mxu0
  %v846 = vpop.f32.mrb[0].mxu0
  %v847 = vadd.f32 %v672, %v846
  %v848 = vpop.f32.mrb[0].mxu0
  %849 = vmatprep.mubr.bf16.mxu0 0
  %850 = vmatmul.mubr.bf16.gmra.mrb[0].mxu0 %v648
  %v851 = vpop.f32.mrb[0].mxu0
  %v852 = vadd.f32 %v672, %v851
  %v853 = vpop.f32.mrb[0].mxu0
  %v854 = vpop.f32.mrb[0].mxu0
  %v855 = vadd.f32 %v672, %v854
  %v856 = vpop.f32.mrb[0].mxu0
  %857 = vmatprep.mubr.bf16.mxu0 0
  %858 = vmatmul.mubr.bf16.gmra.mrb[0].mxu0 %v649
  %v859 = vpop.f32.mrb[0].mxu0
  %v860 = vadd.f32 %v672, %v859
  %v861 = vpop.f32.mrb[0].mxu0
  %v862 = vpop.f32.mrb[0].mxu0
  %v863 = vadd.f32 %v672, %v862
  %v864 = vpop.f32.mrb[0].mxu0
  %865 = vmatprep.mubr.bf16.mxu0 0
  %866 = vmatmul.mubr.bf16.gmra.mrb[0].mxu0 %v650
  %v867 = vpop.f32.mrb[0].mxu0
  %v868 = vadd.f32 %v672, %v867
  %v869 = vpop.f32.mrb[0].mxu0
  %v870 = vpop.f32.mrb[0].mxu0
  %v871 = vadd.f32 %v672, %v870
  %v872 = vpop.f32.mrb[0].mxu0
  %873 = vmatprep.mubr.bf16.mxu0 0
  %874 = vmatmul.mubr.bf16.gmra.mrb[0].mxu0 %v651
  %v875 = vpop.f32.mrb[0].mxu0
  %v876 = vadd.f32 %v672, %v875
  %v877 = vpop.f32.mrb[0].mxu0
  %v878 = vpop.f32.mrb[0].mxu0
  %v879 = vadd.f32 %v672, %v878
  %v880 = vpop.f32.mrb[0].mxu0
  %881 = vdwg.mxu0
  %v882 = vpack.c.bf16 %v759, %v756
  %v883 = vpack.c.bf16 %v767, %v764
  %v884 = vpack.c.bf16 %v775, %v772
  %v885 = vpack.c.bf16 %v783, %v780
  %v886 = vpack.c.bf16 %v791, %v788
  %v887 = vpack.c.bf16 %v799, %v796
  %v888 = vpack.c.bf16 %v807, %v804
  %v889 = vpack.c.bf16 %v815, %v812
  %v890 = vpack.c.bf16 %v823, %v820
  %v891 = vpack.c.bf16 %v831, %v828
  %v892 = vpack.c.bf16 %v839, %v836
  %v893 = vpack.c.bf16 %v847, %v844
  %v894 = vpack.c.bf16 %v855, %v852
  %v895 = vpack.c.bf16 %v863, %v860
  %v896 = vpack.c.bf16 %v871, %v868
  %v897 = vpack.c.bf16 %v879, %v876
  %v898 = vld [vmem:[%s1 + $0xc0] sm:$0xf]
  %v899 = vld [vmem:[%s1 + $0xc4] sm:$0xf]
  %v900 = vld [vmem:[%s1 + $0xc8] sm:$0xf]
  %v901 = vld [vmem:[%s1 + $0xcc] sm:$0xf]
  %v902 = vld [vmem:[%s1 + $0xd0] sm:$0xf]
  %v903 = vld [vmem:[%s1 + $0xd4] sm:$0xf]
  %v904 = vld [vmem:[%s1 + $0xd8] sm:$0xf]
  %v905 = vld [vmem:[%s1 + $0xdc] sm:$0xf]
  %v906 = vld [vmem:[%s1 + $0xe0] sm:$0xf]
  %v907 = vld [vmem:[%s1 + $0xe4] sm:$0xf]
  %v908 = vld [vmem:[%s1 + $0xe8] sm:$0xf]
  %v909 = vld [vmem:[%s1 + $0xec] sm:$0xf]
  %v910 = vld [vmem:[%s1 + $0xf0] sm:$0xf]
  %v911 = vld [vmem:[%s1 + $0xf4] sm:$0xf]
  %v912 = vld [vmem:[%s1 + $0xf8] sm:$0xf]
  %v913 = vld [vmem:[%s1 + $0xfc] sm:$0xf]
  %v914 = vld [vmem:[%s2 + $0x3] sm:$0x1]
  %v915 = vlaneseq
  %v916 = vshrl.u32 %v915, 7
  %v917 = vsub.s32 0, %v916
  %v918 = vrot.slane %v914, %v917
  %v935 = vunpack.c.l.b16 %v898
  %v936 = vunpack.c.l.b16 %v899
  %v937 = vunpack.c.l.b16 %v900
  %v938 = vunpack.c.l.b16 %v901
  %v939 = vunpack.c.l.b16 %v902
  %v940 = vunpack.c.l.b16 %v903
  %v941 = vunpack.c.l.b16 %v904
  %v942 = vunpack.c.l.b16 %v905
  %v943 = vunpack.c.l.b16 %v906
  %v944 = vunpack.c.l.b16 %v907
  %v945 = vunpack.c.l.b16 %v908
  %v946 = vunpack.c.l.b16 %v909
  %v947 = vunpack.c.l.b16 %v910
  %v948 = vunpack.c.l.b16 %v911
  %v949 = vunpack.c.l.b16 %v912
  %v950 = vunpack.c.l.b16 %v913
  %v951 = vpack.c.b16 %v936, %v935
  %v952 = vpack.c.b16 %v938, %v937
  %v953 = vpack.c.b16 %v940, %v939
  %v954 = vpack.c.b16 %v942, %v941
  %v955 = vpack.c.b16 %v944, %v943
  %v956 = vpack.c.b16 %v946, %v945
  %v957 = vpack.c.b16 %v948, %v947
  %v958 = vpack.c.b16 %v950, %v949
  %967 = vmatprep.subr.bf16.mxu0 0
  %968 = vmatpush1.bf16.msra.mxu0 %v951
  %969 = vmatprep.subr.bf16.mxu0 0
  %970 = vmatpush1.bf16.msra.mxu0 %v952
  %971 = vmatprep.subr.bf16.mxu0 0
  %972 = vmatpush1.bf16.msra.mxu0 %v953
  %973 = vmatprep.subr.bf16.mxu0 0
  %974 = vmatpush1.bf16.msra.mxu0 %v954
  %975 = vmatprep.subr.bf16.mxu0 0
  %976 = vmatpush1.bf16.msra.mxu0 %v955
  %977 = vmatprep.subr.bf16.mxu0 0
  %978 = vmatpush1.bf16.msra.mxu0 %v956
  %979 = vmatprep.subr.bf16.mxu0 0
  %980 = vmatpush1.bf16.msra.mxu0 %v957
  %981 = vmatprep.subr.bf16.mxu0 0
  %982 = vmatpush1.bf16.msra.mxu0 %v958
  %983 = vmatprep.subr.bf16.mxu0 0
  %984 = vmatpush1.bf16.msra.mxu0 0
  %985 = vmatprep.subr.bf16.mxu0 0
  %986 = vmatpush1.bf16.msra.mxu0 0
  %987 = vmatprep.subr.bf16.mxu0 0
  %988 = vmatpush1.bf16.msra.mxu0 0
  %989 = vmatprep.subr.bf16.mxu0 0
  %990 = vmatpush1.bf16.msra.mxu0 0
  %991 = vmatprep.subr.bf16.mxu0 0
  %992 = vmatpush1.bf16.msra.mxu0 0
  %993 = vmatprep.subr.bf16.mxu0 0
  %994 = vmatpush1.bf16.msra.mxu0 0
  %995 = vmatprep.subr.bf16.mxu0 0
  %996 = vmatpush1.bf16.msra.mxu0 0
  %997 = vmatprep.subr.bf16.mxu0 0
  %998 = vmatpush1.bf16.msra.mxu0 0
  %999 = vmatprep.mubr.bf16.mxu0 0
  %1000 = vmatmul.mubr.bf16.gmra.mrb[0].mxu0 %v882
  %v1001 = vpop.f32.mrb[0].mxu0
  %v1002 = vadd.f32 %v918, %v1001
  %v1003 = vpop.f32.mrb[0].mxu0
  %v1004 = vpop.f32.mrb[0].mxu0
  %v1005 = vadd.f32 %v918, %v1004
  %v1006 = vpop.f32.mrb[0].mxu0
  %1007 = vmatprep.mubr.bf16.mxu0 0
  %1008 = vmatmul.mubr.bf16.gmra.mrb[0].mxu0 %v883
  %v1009 = vpop.f32.mrb[0].mxu0
  %v1010 = vadd.f32 %v918, %v1009
  %v1011 = vpop.f32.mrb[0].mxu0
  %v1012 = vpop.f32.mrb[0].mxu0
  %v1013 = vadd.f32 %v918, %v1012
  %v1014 = vpop.f32.mrb[0].mxu0
  %1015 = vmatprep.mubr.bf16.mxu0 0
  %1016 = vmatmul.mubr.bf16.gmra.mrb[0].mxu0 %v884
  %v1017 = vpop.f32.mrb[0].mxu0
  %v1018 = vadd.f32 %v918, %v1017
  %v1019 = vpop.f32.mrb[0].mxu0
  %v1020 = vpop.f32.mrb[0].mxu0
  %v1021 = vadd.f32 %v918, %v1020
  %v1022 = vpop.f32.mrb[0].mxu0
  %1023 = vmatprep.mubr.bf16.mxu0 0
  %1024 = vmatmul.mubr.bf16.gmra.mrb[0].mxu0 %v885
  %v1025 = vpop.f32.mrb[0].mxu0
  %v1026 = vadd.f32 %v918, %v1025
  %v1027 = vpop.f32.mrb[0].mxu0
  %v1028 = vpop.f32.mrb[0].mxu0
  %v1029 = vadd.f32 %v918, %v1028
  %v1030 = vpop.f32.mrb[0].mxu0
  %1031 = vmatprep.mubr.bf16.mxu0 0
  %1032 = vmatmul.mubr.bf16.gmra.mrb[0].mxu0 %v886
  %v1033 = vpop.f32.mrb[0].mxu0
  %v1034 = vadd.f32 %v918, %v1033
  %v1035 = vpop.f32.mrb[0].mxu0
  %v1036 = vpop.f32.mrb[0].mxu0
  %v1037 = vadd.f32 %v918, %v1036
  %v1038 = vpop.f32.mrb[0].mxu0
  %1039 = vmatprep.mubr.bf16.mxu0 0
  %1040 = vmatmul.mubr.bf16.gmra.mrb[0].mxu0 %v887
  %v1041 = vpop.f32.mrb[0].mxu0
  %v1042 = vadd.f32 %v918, %v1041
  %v1043 = vpop.f32.mrb[0].mxu0
  %v1044 = vpop.f32.mrb[0].mxu0
  %v1045 = vadd.f32 %v918, %v1044
  %v1046 = vpop.f32.mrb[0].mxu0
  %1047 = vmatprep.mubr.bf16.mxu0 0
  %1048 = vmatmul.mubr.bf16.gmra.mrb[0].mxu0 %v888
  %v1049 = vpop.f32.mrb[0].mxu0
  %v1050 = vadd.f32 %v918, %v1049
  %v1051 = vpop.f32.mrb[0].mxu0
  %v1052 = vpop.f32.mrb[0].mxu0
  %v1053 = vadd.f32 %v918, %v1052
  %v1054 = vpop.f32.mrb[0].mxu0
  %1055 = vmatprep.mubr.bf16.mxu0 0
  %1056 = vmatmul.mubr.bf16.gmra.mrb[0].mxu0 %v889
  %v1057 = vpop.f32.mrb[0].mxu0
  %v1058 = vadd.f32 %v918, %v1057
  %v1059 = vpop.f32.mrb[0].mxu0
  %v1060 = vpop.f32.mrb[0].mxu0
  %v1061 = vadd.f32 %v918, %v1060
  %v1062 = vpop.f32.mrb[0].mxu0
  %1063 = vmatprep.mubr.bf16.mxu0 0
  %1064 = vmatmul.mubr.bf16.gmra.mrb[0].mxu0 %v890
  %v1065 = vpop.f32.mrb[0].mxu0
  %v1066 = vadd.f32 %v918, %v1065
  %v1067 = vpop.f32.mrb[0].mxu0
  %v1068 = vpop.f32.mrb[0].mxu0
  %v1069 = vadd.f32 %v918, %v1068
  %v1070 = vpop.f32.mrb[0].mxu0
  %1071 = vmatprep.mubr.bf16.mxu0 0
  %1072 = vmatmul.mubr.bf16.gmra.mrb[0].mxu0 %v891
  %v1073 = vpop.f32.mrb[0].mxu0
  %v1074 = vadd.f32 %v918, %v1073
  %v1075 = vpop.f32.mrb[0].mxu0
  %v1076 = vpop.f32.mrb[0].mxu0
  %v1077 = vadd.f32 %v918, %v1076
  %v1078 = vpop.f32.mrb[0].mxu0
  %1079 = vmatprep.mubr.bf16.mxu0 0
  %1080 = vmatmul.mubr.bf16.gmra.mrb[0].mxu0 %v892
  %v1081 = vpop.f32.mrb[0].mxu0
  %v1082 = vadd.f32 %v918, %v1081
  %v1083 = vpop.f32.mrb[0].mxu0
  %v1084 = vpop.f32.mrb[0].mxu0
  %v1085 = vadd.f32 %v918, %v1084
  %v1086 = vpop.f32.mrb[0].mxu0
  %1087 = vmatprep.mubr.bf16.mxu0 0
  %1088 = vmatmul.mubr.bf16.gmra.mrb[0].mxu0 %v893
  %v1089 = vpop.f32.mrb[0].mxu0
  %v1090 = vadd.f32 %v918, %v1089
  %v1091 = vpop.f32.mrb[0].mxu0
  %v1092 = vpop.f32.mrb[0].mxu0
  %v1093 = vadd.f32 %v918, %v1092
  %v1094 = vpop.f32.mrb[0].mxu0
  %1095 = vmatprep.mubr.bf16.mxu0 0
  %1096 = vmatmul.mubr.bf16.gmra.mrb[0].mxu0 %v894
  %v1097 = vpop.f32.mrb[0].mxu0
  %v1098 = vadd.f32 %v918, %v1097
  %v1099 = vpop.f32.mrb[0].mxu0
  %v1100 = vpop.f32.mrb[0].mxu0
  %v1101 = vadd.f32 %v918, %v1100
  %v1102 = vpop.f32.mrb[0].mxu0
  %1103 = vmatprep.mubr.bf16.mxu0 0
  %1104 = vmatmul.mubr.bf16.gmra.mrb[0].mxu0 %v895
  %v1105 = vpop.f32.mrb[0].mxu0
  %v1106 = vadd.f32 %v918, %v1105
  %v1107 = vpop.f32.mrb[0].mxu0
  %v1108 = vpop.f32.mrb[0].mxu0
  %v1109 = vadd.f32 %v918, %v1108
  %v1110 = vpop.f32.mrb[0].mxu0
  %1111 = vmatprep.mubr.bf16.mxu0 0
  %1112 = vmatmul.mubr.bf16.gmra.mrb[0].mxu0 %v896
  %v1113 = vpop.f32.mrb[0].mxu0
  %v1114 = vadd.f32 %v918, %v1113
  %v1115 = vpop.f32.mrb[0].mxu0
  %v1116 = vpop.f32.mrb[0].mxu0
  %v1117 = vadd.f32 %v918, %v1116
  %v1118 = vpop.f32.mrb[0].mxu0
  %1119 = vmatprep.mubr.bf16.mxu0 0
  %1120 = vmatmul.mubr.bf16.gmra.mrb[0].mxu0 %v897
  %v1121 = vpop.f32.mrb[0].mxu0
  %v1122 = vadd.f32 %v918, %v1121
  %v1123 = vpop.f32.mrb[0].mxu0
  %v1124 = vpop.f32.mrb[0].mxu0
  %v1125 = vadd.f32 %v918, %v1124
  %v1126 = vpop.f32.mrb[0].mxu0
  %1127 = vdwg.mxu0
  %v1128 = vmax.f32 %v1002, 0.0
  %v1129 = vmax.f32 %v1005, 0.0
  %v1130 = vmax.f32 %v1010, 0.0
  %v1131 = vmax.f32 %v1013, 0.0
  %v1132 = vmax.f32 %v1018, 0.0
  %v1133 = vmax.f32 %v1021, 0.0
  %v1134 = vmax.f32 %v1026, 0.0
  %v1135 = vmax.f32 %v1029, 0.0
  %v1136 = vmax.f32 %v1034, 0.0
  %v1137 = vmax.f32 %v1037, 0.0
  %v1138 = vmax.f32 %v1042, 0.0
  %v1139 = vmax.f32 %v1045, 0.0
  %v1140 = vmax.f32 %v1050, 0.0
  %v1141 = vmax.f32 %v1053, 0.0
  %v1142 = vmax.f32 %v1058, 0.0
  %v1143 = vmax.f32 %v1061, 0.0
  %v1144 = vmax.f32 %v1066, 0.0
  %v1145 = vmax.f32 %v1069, 0.0
  %v1146 = vmax.f32 %v1074, 0.0
  %v1147 = vmax.f32 %v1077, 0.0
  %v1148 = vmax.f32 %v1082, 0.0
  %v1149 = vmax.f32 %v1085, 0.0
  %v1150 = vmax.f32 %v1090, 0.0
  %v1151 = vmax.f32 %v1093, 0.0
  %v1152 = vmax.f32 %v1098, 0.0
  %v1153 = vmax.f32 %v1101, 0.0
  %v1154 = vmax.f32 %v1106, 0.0
  %v1155 = vmax.f32 %v1109, 0.0
  %v1156 = vmax.f32 %v1114, 0.0
  %v1157 = vmax.f32 %v1117, 0.0
  %v1158 = vmax.f32 %v1122, 0.0
  %v1159 = vmax.f32 %v1125, 0.0
  %v1160 = vpack.c.bf16 %v1129, %v1128
  %v1161 = vpack.c.bf16 %v1131, %v1130
  %v1162 = vpack.c.bf16 %v1133, %v1132
  %v1163 = vpack.c.bf16 %v1135, %v1134
  %v1164 = vpack.c.bf16 %v1137, %v1136
  %v1165 = vpack.c.bf16 %v1139, %v1138
  %v1166 = vpack.c.bf16 %v1141, %v1140
  %v1167 = vpack.c.bf16 %v1143, %v1142
  %v1168 = vpack.c.bf16 %v1145, %v1144
  %v1169 = vpack.c.bf16 %v1147, %v1146
  %v1170 = vpack.c.bf16 %v1149, %v1148
  %v1171 = vpack.c.bf16 %v1151, %v1150
  %v1172 = vpack.c.bf16 %v1153, %v1152
  %v1173 = vpack.c.bf16 %v1155, %v1154
  %v1174 = vpack.c.bf16 %v1157, %v1156
  %v1175 = vpack.c.bf16 %v1159, %v1158
  %v1176 = vld [vmem:[%s1 + $0x100] sm:$0xf]
  %v1177 = vld [vmem:[%s1 + $0x104] sm:$0xf]
  %v1178 = vld [vmem:[%s1 + $0x108] sm:$0xf]
  %v1179 = vld [vmem:[%s1 + $0x10c] sm:$0xf]
  %v1180 = vld [vmem:[%s1 + $0x110] sm:$0xf]
  %v1181 = vld [vmem:[%s1 + $0x114] sm:$0xf]
  %v1182 = vld [vmem:[%s1 + $0x118] sm:$0xf]
  %v1183 = vld [vmem:[%s1 + $0x11c] sm:$0xf]
  %v1184 = vld [vmem:[%s1 + $0x120] sm:$0xf]
  %v1185 = vld [vmem:[%s1 + $0x124] sm:$0xf]
  %v1186 = vld [vmem:[%s1 + $0x128] sm:$0xf]
  %v1187 = vld [vmem:[%s1 + $0x12c] sm:$0xf]
  %v1188 = vld [vmem:[%s1 + $0x130] sm:$0xf]
  %v1189 = vld [vmem:[%s1 + $0x134] sm:$0xf]
  %v1190 = vld [vmem:[%s1 + $0x138] sm:$0xf]
  %v1191 = vld [vmem:[%s1 + $0x13c] sm:$0xf]
  %v1192 = vld [vmem:[%s2 + $0x4] sm:$0x1]
  %v1193 = vlaneseq
  %v1194 = vshrl.u32 %v1193, 7
  %v1195 = vsub.s32 0, %v1194
  %v1196 = vrot.slane %v1192, %v1195
  %v1213 = vunpack.c.l.b16 %v1176
  %v1214 = vunpack.c.l.b16 %v1177
  %v1215 = vunpack.c.l.b16 %v1178
  %v1216 = vunpack.c.l.b16 %v1179
  %v1217 = vunpack.c.l.b16 %v1180
  %v1218 = vunpack.c.l.b16 %v1181
  %v1219 = vunpack.c.l.b16 %v1182
  %v1220 = vunpack.c.l.b16 %v1183
  %v1221 = vunpack.c.l.b16 %v1184
  %v1222 = vunpack.c.l.b16 %v1185
  %v1223 = vunpack.c.l.b16 %v1186
  %v1224 = vunpack.c.l.b16 %v1187
  %v1225 = vunpack.c.l.b16 %v1188
  %v1226 = vunpack.c.l.b16 %v1189
  %v1227 = vunpack.c.l.b16 %v1190
  %v1228 = vunpack.c.l.b16 %v1191
  %v1229 = vpack.c.b16 %v1214, %v1213
  %v1230 = vpack.c.b16 %v1216, %v1215
  %v1231 = vpack.c.b16 %v1218, %v1217
  %v1232 = vpack.c.b16 %v1220, %v1219
  %v1233 = vpack.c.b16 %v1222, %v1221
  %v1234 = vpack.c.b16 %v1224, %v1223
  %v1235 = vpack.c.b16 %v1226, %v1225
  %v1236 = vpack.c.b16 %v1228, %v1227
  %1245 = vmatprep.subr.bf16.mxu0 0
  %1246 = vmatpush1.bf16.msra.mxu0 %v1229
  %1247 = vmatprep.subr.bf16.mxu0 0
  %1248 = vmatpush1.bf16.msra.mxu0 %v1230
  %1249 = vmatprep.subr.bf16.mxu0 0
  %1250 = vmatpush1.bf16.msra.mxu0 %v1231
  %1251 = vmatprep.subr.bf16.mxu0 0
  %1252 = vmatpush1.bf16.msra.mxu0 %v1232
  %1253 = vmatprep.subr.bf16.mxu0 0
  %1254 = vmatpush1.bf16.msra.mxu0 %v1233
  %1255 = vmatprep.subr.bf16.mxu0 0
  %1256 = vmatpush1.bf16.msra.mxu0 %v1234
  %1257 = vmatprep.subr.bf16.mxu0 0
  %1258 = vmatpush1.bf16.msra.mxu0 %v1235
  %1259 = vmatprep.subr.bf16.mxu0 0
  %1260 = vmatpush1.bf16.msra.mxu0 %v1236
  %1261 = vmatprep.subr.bf16.mxu0 0
  %1262 = vmatpush1.bf16.msra.mxu0 0
  %1263 = vmatprep.subr.bf16.mxu0 0
  %1264 = vmatpush1.bf16.msra.mxu0 0
  %1265 = vmatprep.subr.bf16.mxu0 0
  %1266 = vmatpush1.bf16.msra.mxu0 0
  %1267 = vmatprep.subr.bf16.mxu0 0
  %1268 = vmatpush1.bf16.msra.mxu0 0
  %1269 = vmatprep.subr.bf16.mxu0 0
  %1270 = vmatpush1.bf16.msra.mxu0 0
  %1271 = vmatprep.subr.bf16.mxu0 0
  %1272 = vmatpush1.bf16.msra.mxu0 0
  %1273 = vmatprep.subr.bf16.mxu0 0
  %1274 = vmatpush1.bf16.msra.mxu0 0
  %1275 = vmatprep.subr.bf16.mxu0 0
  %1276 = vmatpush1.bf16.msra.mxu0 0
  %1277 = vmatprep.mubr.bf16.mxu0 0
  %1278 = vmatmul.mubr.bf16.gmra.mrb[0].mxu0 %v1160
  %v1279 = vpop.f32.mrb[0].mxu0
  %v1280 = vadd.f32 %v1196, %v1279
  %v1281 = vpop.f32.mrb[0].mxu0
  %v1282 = vpop.f32.mrb[0].mxu0
  %v1283 = vadd.f32 %v1196, %v1282
  %v1284 = vpop.f32.mrb[0].mxu0
  %1285 = vmatprep.mubr.bf16.mxu0 0
  %1286 = vmatmul.mubr.bf16.gmra.mrb[0].mxu0 %v1161
  %v1287 = vpop.f32.mrb[0].mxu0
  %v1288 = vadd.f32 %v1196, %v1287
  %v1289 = vpop.f32.mrb[0].mxu0
  %v1290 = vpop.f32.mrb[0].mxu0
  %v1291 = vadd.f32 %v1196, %v1290
  %v1292 = vpop.f32.mrb[0].mxu0
  %1293 = vmatprep.mubr.bf16.mxu0 0
  %1294 = vmatmul.mubr.bf16.gmra.mrb[0].mxu0 %v1162
  %v1295 = vpop.f32.mrb[0].mxu0
  %v1296 = vadd.f32 %v1196, %v1295
  %v1297 = vpop.f32.mrb[0].mxu0
  %v1298 = vpop.f32.mrb[0].mxu0
  %v1299 = vadd.f32 %v1196, %v1298
  %v1300 = vpop.f32.mrb[0].mxu0
  %1301 = vmatprep.mubr.bf16.mxu0 0
  %1302 = vmatmul.mubr.bf16.gmra.mrb[0].mxu0 %v1163
  %v1303 = vpop.f32.mrb[0].mxu0
  %v1304 = vadd.f32 %v1196, %v1303
  %v1305 = vpop.f32.mrb[0].mxu0
  %v1306 = vpop.f32.mrb[0].mxu0
  %v1307 = vadd.f32 %v1196, %v1306
  %v1308 = vpop.f32.mrb[0].mxu0
  %1309 = vmatprep.mubr.bf16.mxu0 0
  %1310 = vmatmul.mubr.bf16.gmra.mrb[0].mxu0 %v1164
  %v1311 = vpop.f32.mrb[0].mxu0
  %v1312 = vadd.f32 %v1196, %v1311
  %v1313 = vpop.f32.mrb[0].mxu0
  %v1314 = vpop.f32.mrb[0].mxu0
  %v1315 = vadd.f32 %v1196, %v1314
  %v1316 = vpop.f32.mrb[0].mxu0
  %1317 = vmatprep.mubr.bf16.mxu0 0
  %1318 = vmatmul.mubr.bf16.gmra.mrb[0].mxu0 %v1165
  %v1319 = vpop.f32.mrb[0].mxu0
  %v1320 = vadd.f32 %v1196, %v1319
  %v1321 = vpop.f32.mrb[0].mxu0
  %v1322 = vpop.f32.mrb[0].mxu0
  %v1323 = vadd.f32 %v1196, %v1322
  %v1324 = vpop.f32.mrb[0].mxu0
  %1325 = vmatprep.mubr.bf16.mxu0 0
  %1326 = vmatmul.mubr.bf16.gmra.mrb[0].mxu0 %v1166
  %v1327 = vpop.f32.mrb[0].mxu0
  %v1328 = vadd.f32 %v1196, %v1327
  %v1329 = vpop.f32.mrb[0].mxu0
  %v1330 = vpop.f32.mrb[0].mxu0
  %v1331 = vadd.f32 %v1196, %v1330
  %v1332 = vpop.f32.mrb[0].mxu0
  %1333 = vmatprep.mubr.bf16.mxu0 0
  %1334 = vmatmul.mubr.bf16.gmra.mrb[0].mxu0 %v1167
  %v1335 = vpop.f32.mrb[0].mxu0
  %v1336 = vadd.f32 %v1196, %v1335
  %v1337 = vpop.f32.mrb[0].mxu0
  %v1338 = vpop.f32.mrb[0].mxu0
  %v1339 = vadd.f32 %v1196, %v1338
  %v1340 = vpop.f32.mrb[0].mxu0
  %1341 = vmatprep.mubr.bf16.mxu0 0
  %1342 = vmatmul.mubr.bf16.gmra.mrb[0].mxu0 %v1168
  %v1343 = vpop.f32.mrb[0].mxu0
  %v1344 = vadd.f32 %v1196, %v1343
  %v1345 = vpop.f32.mrb[0].mxu0
  %v1346 = vpop.f32.mrb[0].mxu0
  %v1347 = vadd.f32 %v1196, %v1346
  %v1348 = vpop.f32.mrb[0].mxu0
  %1349 = vmatprep.mubr.bf16.mxu0 0
  %1350 = vmatmul.mubr.bf16.gmra.mrb[0].mxu0 %v1169
  %v1351 = vpop.f32.mrb[0].mxu0
  %v1352 = vadd.f32 %v1196, %v1351
  %v1353 = vpop.f32.mrb[0].mxu0
  %v1354 = vpop.f32.mrb[0].mxu0
  %v1355 = vadd.f32 %v1196, %v1354
  %v1356 = vpop.f32.mrb[0].mxu0
  %1357 = vmatprep.mubr.bf16.mxu0 0
  %1358 = vmatmul.mubr.bf16.gmra.mrb[0].mxu0 %v1170
  %v1359 = vpop.f32.mrb[0].mxu0
  %v1360 = vadd.f32 %v1196, %v1359
  %v1361 = vpop.f32.mrb[0].mxu0
  %v1362 = vpop.f32.mrb[0].mxu0
  %v1363 = vadd.f32 %v1196, %v1362
  %v1364 = vpop.f32.mrb[0].mxu0
  %1365 = vmatprep.mubr.bf16.mxu0 0
  %1366 = vmatmul.mubr.bf16.gmra.mrb[0].mxu0 %v1171
  %v1367 = vpop.f32.mrb[0].mxu0
  %v1368 = vadd.f32 %v1196, %v1367
  %v1369 = vpop.f32.mrb[0].mxu0
  %v1370 = vpop.f32.mrb[0].mxu0
  %v1371 = vadd.f32 %v1196, %v1370
  %v1372 = vpop.f32.mrb[0].mxu0
  %1373 = vmatprep.mubr.bf16.mxu0 0
  %1374 = vmatmul.mubr.bf16.gmra.mrb[0].mxu0 %v1172
  %v1375 = vpop.f32.mrb[0].mxu0
  %v1376 = vadd.f32 %v1196, %v1375
  %v1377 = vpop.f32.mrb[0].mxu0
  %v1378 = vpop.f32.mrb[0].mxu0
  %v1379 = vadd.f32 %v1196, %v1378
  %v1380 = vpop.f32.mrb[0].mxu0
  %1381 = vmatprep.mubr.bf16.mxu0 0
  %1382 = vmatmul.mubr.bf16.gmra.mrb[0].mxu0 %v1173
  %v1383 = vpop.f32.mrb[0].mxu0
  %v1384 = vadd.f32 %v1196, %v1383
  %v1385 = vpop.f32.mrb[0].mxu0
  %v1386 = vpop.f32.mrb[0].mxu0
  %v1387 = vadd.f32 %v1196, %v1386
  %v1388 = vpop.f32.mrb[0].mxu0
  %1389 = vmatprep.mubr.bf16.mxu0 0
  %1390 = vmatmul.mubr.bf16.gmra.mrb[0].mxu0 %v1174
  %v1391 = vpop.f32.mrb[0].mxu0
  %v1392 = vadd.f32 %v1196, %v1391
  %v1393 = vpop.f32.mrb[0].mxu0
  %v1394 = vpop.f32.mrb[0].mxu0
  %v1395 = vadd.f32 %v1196, %v1394
  %v1396 = vpop.f32.mrb[0].mxu0
  %1397 = vmatprep.mubr.bf16.mxu0 0
  %1398 = vmatmul.mubr.bf16.gmra.mrb[0].mxu0 %v1175
  %v1399 = vpop.f32.mrb[0].mxu0
  %v1400 = vadd.f32 %v1196, %v1399
  %v1401 = vpop.f32.mrb[0].mxu0
  %v1402 = vpop.f32.mrb[0].mxu0
  %v1403 = vadd.f32 %v1196, %v1402
  %v1404 = vpop.f32.mrb[0].mxu0
  %1405 = vdwg.mxu0
  %v1406 = vmax.f32 %v1280, 0.0
  %v1407 = vmax.f32 %v1283, 0.0
  %v1408 = vmax.f32 %v1288, 0.0
  %v1409 = vmax.f32 %v1291, 0.0
  %v1410 = vmax.f32 %v1296, 0.0
  %v1411 = vmax.f32 %v1299, 0.0
  %v1412 = vmax.f32 %v1304, 0.0
  %v1413 = vmax.f32 %v1307, 0.0
  %v1414 = vmax.f32 %v1312, 0.0
  %v1415 = vmax.f32 %v1315, 0.0
  %v1416 = vmax.f32 %v1320, 0.0
  %v1417 = vmax.f32 %v1323, 0.0
  %v1418 = vmax.f32 %v1328, 0.0
  %v1419 = vmax.f32 %v1331, 0.0
  %v1420 = vmax.f32 %v1336, 0.0
  %v1421 = vmax.f32 %v1339, 0.0
  %v1422 = vmax.f32 %v1344, 0.0
  %v1423 = vmax.f32 %v1347, 0.0
  %v1424 = vmax.f32 %v1352, 0.0
  %v1425 = vmax.f32 %v1355, 0.0
  %v1426 = vmax.f32 %v1360, 0.0
  %v1427 = vmax.f32 %v1363, 0.0
  %v1428 = vmax.f32 %v1368, 0.0
  %v1429 = vmax.f32 %v1371, 0.0
  %v1430 = vmax.f32 %v1376, 0.0
  %v1431 = vmax.f32 %v1379, 0.0
  %v1432 = vmax.f32 %v1384, 0.0
  %v1433 = vmax.f32 %v1387, 0.0
  %v1434 = vmax.f32 %v1392, 0.0
  %v1435 = vmax.f32 %v1395, 0.0
  %v1436 = vmax.f32 %v1400, 0.0
  %v1437 = vmax.f32 %v1403, 0.0
  %v1438 = vpack.c.bf16 %v1407, %v1406
  %v1439 = vpack.c.bf16 %v1409, %v1408
  %v1440 = vpack.c.bf16 %v1411, %v1410
  %v1441 = vpack.c.bf16 %v1413, %v1412
  %v1442 = vpack.c.bf16 %v1415, %v1414
  %v1443 = vpack.c.bf16 %v1417, %v1416
  %v1444 = vpack.c.bf16 %v1419, %v1418
  %v1445 = vpack.c.bf16 %v1421, %v1420
  %v1446 = vpack.c.bf16 %v1423, %v1422
  %v1447 = vpack.c.bf16 %v1425, %v1424
  %v1448 = vpack.c.bf16 %v1427, %v1426
  %v1449 = vpack.c.bf16 %v1429, %v1428
  %v1450 = vpack.c.bf16 %v1431, %v1430
  %v1451 = vpack.c.bf16 %v1433, %v1432
  %v1452 = vpack.c.bf16 %v1435, %v1434
  %v1453 = vpack.c.bf16 %v1437, %v1436
  %v1454 = vld [vmem:[%s1 + $0x140] sm:$0xf]
  %v1455 = vld [vmem:[%s1 + $0x144] sm:$0xf]
  %v1456 = vld [vmem:[%s1 + $0x148] sm:$0xf]
  %v1457 = vld [vmem:[%s1 + $0x14c] sm:$0xf]
  %v1458 = vld [vmem:[%s1 + $0x150] sm:$0xf]
  %v1459 = vld [vmem:[%s1 + $0x154] sm:$0xf]
  %v1460 = vld [vmem:[%s1 + $0x158] sm:$0xf]
  %v1461 = vld [vmem:[%s1 + $0x15c] sm:$0xf]
  %v1462 = vld [vmem:[%s1 + $0x160] sm:$0xf]
  %v1463 = vld [vmem:[%s1 + $0x164] sm:$0xf]
  %v1464 = vld [vmem:[%s1 + $0x168] sm:$0xf]
  %v1465 = vld [vmem:[%s1 + $0x16c] sm:$0xf]
  %v1466 = vld [vmem:[%s1 + $0x170] sm:$0xf]
  %v1467 = vld [vmem:[%s1 + $0x174] sm:$0xf]
  %v1468 = vld [vmem:[%s1 + $0x178] sm:$0xf]
  %v1469 = vld [vmem:[%s1 + $0x17c] sm:$0xf]
  %v1470 = vld [vmem:[%s2 + $0x5] sm:$0x1]
  %v1471 = vlaneseq
  %v1472 = vshrl.u32 %v1471, 7
  %v1473 = vsub.s32 0, %v1472
  %v1474 = vrot.slane %v1470, %v1473
  %v1491 = vunpack.c.l.b16 %v1454
  %v1492 = vunpack.c.l.b16 %v1455
  %v1493 = vunpack.c.l.b16 %v1456
  %v1494 = vunpack.c.l.b16 %v1457
  %v1495 = vunpack.c.l.b16 %v1458
  %v1496 = vunpack.c.l.b16 %v1459
  %v1497 = vunpack.c.l.b16 %v1460
  %v1498 = vunpack.c.l.b16 %v1461
  %v1499 = vunpack.c.l.b16 %v1462
  %v1500 = vunpack.c.l.b16 %v1463
  %v1501 = vunpack.c.l.b16 %v1464
  %v1502 = vunpack.c.l.b16 %v1465
  %v1503 = vunpack.c.l.b16 %v1466
  %v1504 = vunpack.c.l.b16 %v1467
  %v1505 = vunpack.c.l.b16 %v1468
  %v1506 = vunpack.c.l.b16 %v1469
  %v1507 = vpack.c.b16 %v1492, %v1491
  %v1508 = vpack.c.b16 %v1494, %v1493
  %v1509 = vpack.c.b16 %v1496, %v1495
  %v1510 = vpack.c.b16 %v1498, %v1497
  %v1511 = vpack.c.b16 %v1500, %v1499
  %v1512 = vpack.c.b16 %v1502, %v1501
  %v1513 = vpack.c.b16 %v1504, %v1503
  %v1514 = vpack.c.b16 %v1506, %v1505
  %1523 = vmatprep.subr.bf16.mxu0 0
  %1524 = vmatpush1.bf16.msra.mxu0 %v1507
  %1525 = vmatprep.subr.bf16.mxu0 0
  %1526 = vmatpush1.bf16.msra.mxu0 %v1508
  %1527 = vmatprep.subr.bf16.mxu0 0
  %1528 = vmatpush1.bf16.msra.mxu0 %v1509
  %1529 = vmatprep.subr.bf16.mxu0 0
  %1530 = vmatpush1.bf16.msra.mxu0 %v1510
  %1531 = vmatprep.subr.bf16.mxu0 0
  %1532 = vmatpush1.bf16.msra.mxu0 %v1511
  %1533 = vmatprep.subr.bf16.mxu0 0
  %1534 = vmatpush1.bf16.msra.mxu0 %v1512
  %1535 = vmatprep.subr.bf16.mxu0 0
  %1536 = vmatpush1.bf16.msra.mxu0 %v1513
  %1537 = vmatprep.subr.bf16.mxu0 0
  %1538 = vmatpush1.bf16.msra.mxu0 %v1514
  %1539 = vmatprep.subr.bf16.mxu0 0
  %1540 = vmatpush1.bf16.msra.mxu0 0
  %1541 = vmatprep.subr.bf16.mxu0 0
  %1542 = vmatpush1.bf16.msra.mxu0 0
  %1543 = vmatprep.subr.bf16.mxu0 0
  %1544 = vmatpush1.bf16.msra.mxu0 0
  %1545 = vmatprep.subr.bf16.mxu0 0
  %1546 = vmatpush1.bf16.msra.mxu0 0
  %1547 = vmatprep.subr.bf16.mxu0 0
  %1548 = vmatpush1.bf16.msra.mxu0 0
  %1549 = vmatprep.subr.bf16.mxu0 0
  %1550 = vmatpush1.bf16.msra.mxu0 0
  %1551 = vmatprep.subr.bf16.mxu0 0
  %1552 = vmatpush1.bf16.msra.mxu0 0
  %1553 = vmatprep.subr.bf16.mxu0 0
  %1554 = vmatpush1.bf16.msra.mxu0 0
  %1555 = vmatprep.mubr.bf16.mxu0 0
  %1556 = vmatmul.mubr.bf16.gmra.mrb[0].mxu0 %v1438
  %v1557 = vpop.f32.mrb[0].mxu0
  %v1558 = vadd.f32 %v1474, %v1557
  %v1559 = vpop.f32.mrb[0].mxu0
  %v1560 = vpop.f32.mrb[0].mxu0
  %v1561 = vadd.f32 %v1474, %v1560
  %v1562 = vpop.f32.mrb[0].mxu0
  %1563 = vmatprep.mubr.bf16.mxu0 0
  %1564 = vmatmul.mubr.bf16.gmra.mrb[0].mxu0 %v1439
  %v1565 = vpop.f32.mrb[0].mxu0
  %v1566 = vadd.f32 %v1474, %v1565
  %v1567 = vpop.f32.mrb[0].mxu0
  %v1568 = vpop.f32.mrb[0].mxu0
  %v1569 = vadd.f32 %v1474, %v1568
  %v1570 = vpop.f32.mrb[0].mxu0
  %1571 = vmatprep.mubr.bf16.mxu0 0
  %1572 = vmatmul.mubr.bf16.gmra.mrb[0].mxu0 %v1440
  %v1573 = vpop.f32.mrb[0].mxu0
  %v1574 = vadd.f32 %v1474, %v1573
  %v1575 = vpop.f32.mrb[0].mxu0
  %v1576 = vpop.f32.mrb[0].mxu0
  %v1577 = vadd.f32 %v1474, %v1576
  %v1578 = vpop.f32.mrb[0].mxu0
  %1579 = vmatprep.mubr.bf16.mxu0 0
  %1580 = vmatmul.mubr.bf16.gmra.mrb[0].mxu0 %v1441
  %v1581 = vpop.f32.mrb[0].mxu0
  %v1582 = vadd.f32 %v1474, %v1581
  %v1583 = vpop.f32.mrb[0].mxu0
  %v1584 = vpop.f32.mrb[0].mxu0
  %v1585 = vadd.f32 %v1474, %v1584
  %v1586 = vpop.f32.mrb[0].mxu0
  %1587 = vmatprep.mubr.bf16.mxu0 0
  %1588 = vmatmul.mubr.bf16.gmra.mrb[0].mxu0 %v1442
  %v1589 = vpop.f32.mrb[0].mxu0
  %v1590 = vadd.f32 %v1474, %v1589
  %v1591 = vpop.f32.mrb[0].mxu0
  %v1592 = vpop.f32.mrb[0].mxu0
  %v1593 = vadd.f32 %v1474, %v1592
  %v1594 = vpop.f32.mrb[0].mxu0
  %1595 = vmatprep.mubr.bf16.mxu0 0
  %1596 = vmatmul.mubr.bf16.gmra.mrb[0].mxu0 %v1443
  %v1597 = vpop.f32.mrb[0].mxu0
  %v1598 = vadd.f32 %v1474, %v1597
  %v1599 = vpop.f32.mrb[0].mxu0
  %v1600 = vpop.f32.mrb[0].mxu0
  %v1601 = vadd.f32 %v1474, %v1600
  %v1602 = vpop.f32.mrb[0].mxu0
  %1603 = vmatprep.mubr.bf16.mxu0 0
  %1604 = vmatmul.mubr.bf16.gmra.mrb[0].mxu0 %v1444
  %v1605 = vpop.f32.mrb[0].mxu0
  %v1606 = vadd.f32 %v1474, %v1605
  %v1607 = vpop.f32.mrb[0].mxu0
  %v1608 = vpop.f32.mrb[0].mxu0
  %v1609 = vadd.f32 %v1474, %v1608
  %v1610 = vpop.f32.mrb[0].mxu0
  %1611 = vmatprep.mubr.bf16.mxu0 0
  %1612 = vmatmul.mubr.bf16.gmra.mrb[0].mxu0 %v1445
  %v1613 = vpop.f32.mrb[0].mxu0
  %v1614 = vadd.f32 %v1474, %v1613
  %v1615 = vpop.f32.mrb[0].mxu0
  %v1616 = vpop.f32.mrb[0].mxu0
  %v1617 = vadd.f32 %v1474, %v1616
  %v1618 = vpop.f32.mrb[0].mxu0
  %1619 = vmatprep.mubr.bf16.mxu0 0
  %1620 = vmatmul.mubr.bf16.gmra.mrb[0].mxu0 %v1446
  %v1621 = vpop.f32.mrb[0].mxu0
  %v1622 = vadd.f32 %v1474, %v1621
  %v1623 = vpop.f32.mrb[0].mxu0
  %v1624 = vpop.f32.mrb[0].mxu0
  %v1625 = vadd.f32 %v1474, %v1624
  %v1626 = vpop.f32.mrb[0].mxu0
  %1627 = vmatprep.mubr.bf16.mxu0 0
  %1628 = vmatmul.mubr.bf16.gmra.mrb[0].mxu0 %v1447
  %v1629 = vpop.f32.mrb[0].mxu0
  %v1630 = vadd.f32 %v1474, %v1629
  %v1631 = vpop.f32.mrb[0].mxu0
  %v1632 = vpop.f32.mrb[0].mxu0
  %v1633 = vadd.f32 %v1474, %v1632
  %v1634 = vpop.f32.mrb[0].mxu0
  %1635 = vmatprep.mubr.bf16.mxu0 0
  %1636 = vmatmul.mubr.bf16.gmra.mrb[0].mxu0 %v1448
  %v1637 = vpop.f32.mrb[0].mxu0
  %v1638 = vadd.f32 %v1474, %v1637
  %v1639 = vpop.f32.mrb[0].mxu0
  %v1640 = vpop.f32.mrb[0].mxu0
  %v1641 = vadd.f32 %v1474, %v1640
  %v1642 = vpop.f32.mrb[0].mxu0
  %1643 = vmatprep.mubr.bf16.mxu0 0
  %1644 = vmatmul.mubr.bf16.gmra.mrb[0].mxu0 %v1449
  %v1645 = vpop.f32.mrb[0].mxu0
  %v1646 = vadd.f32 %v1474, %v1645
  %v1647 = vpop.f32.mrb[0].mxu0
  %v1648 = vpop.f32.mrb[0].mxu0
  %v1649 = vadd.f32 %v1474, %v1648
  %v1650 = vpop.f32.mrb[0].mxu0
  %1651 = vmatprep.mubr.bf16.mxu0 0
  %1652 = vmatmul.mubr.bf16.gmra.mrb[0].mxu0 %v1450
  %v1653 = vpop.f32.mrb[0].mxu0
  %v1654 = vadd.f32 %v1474, %v1653
  %v1655 = vpop.f32.mrb[0].mxu0
  %v1656 = vpop.f32.mrb[0].mxu0
  %v1657 = vadd.f32 %v1474, %v1656
  %v1658 = vpop.f32.mrb[0].mxu0
  %1659 = vmatprep.mubr.bf16.mxu0 0
  %1660 = vmatmul.mubr.bf16.gmra.mrb[0].mxu0 %v1451
  %v1661 = vpop.f32.mrb[0].mxu0
  %v1662 = vadd.f32 %v1474, %v1661
  %v1663 = vpop.f32.mrb[0].mxu0
  %v1664 = vpop.f32.mrb[0].mxu0
  %v1665 = vadd.f32 %v1474, %v1664
  %v1666 = vpop.f32.mrb[0].mxu0
  %1667 = vmatprep.mubr.bf16.mxu0 0
  %1668 = vmatmul.mubr.bf16.gmra.mrb[0].mxu0 %v1452
  %v1669 = vpop.f32.mrb[0].mxu0
  %v1670 = vadd.f32 %v1474, %v1669
  %v1671 = vpop.f32.mrb[0].mxu0
  %v1672 = vpop.f32.mrb[0].mxu0
  %v1673 = vadd.f32 %v1474, %v1672
  %v1674 = vpop.f32.mrb[0].mxu0
  %1675 = vmatprep.mubr.bf16.mxu0 0
  %1676 = vmatmul.mubr.bf16.gmra.mrb[0].mxu0 %v1453
  %v1677 = vpop.f32.mrb[0].mxu0
  %v1678 = vadd.f32 %v1474, %v1677
  %v1679 = vpop.f32.mrb[0].mxu0
  %v1680 = vpop.f32.mrb[0].mxu0
  %v1681 = vadd.f32 %v1474, %v1680
  %v1682 = vpop.f32.mrb[0].mxu0
  %1683 = vdwg.mxu0
  %v1684 = vxor.u32 %v1558, 2147483648
  %v1685 = vxor.u32 %v1561, 2147483648
  %v1686 = vxor.u32 %v1566, 2147483648
  %v1687 = vxor.u32 %v1569, 2147483648
  %v1688 = vxor.u32 %v1574, 2147483648
  %v1689 = vxor.u32 %v1577, 2147483648
  %v1690 = vxor.u32 %v1582, 2147483648
  %v1691 = vxor.u32 %v1585, 2147483648
  %v1692 = vxor.u32 %v1590, 2147483648
  %v1693 = vxor.u32 %v1593, 2147483648
  %v1694 = vxor.u32 %v1598, 2147483648
  %v1695 = vxor.u32 %v1601, 2147483648
  %v1696 = vxor.u32 %v1606, 2147483648
  %v1697 = vxor.u32 %v1609, 2147483648
  %v1698 = vxor.u32 %v1614, 2147483648
  %v1699 = vxor.u32 %v1617, 2147483648
  %v1700 = vxor.u32 %v1622, 2147483648
  %v1701 = vxor.u32 %v1625, 2147483648
  %v1702 = vxor.u32 %v1630, 2147483648
  %v1703 = vxor.u32 %v1633, 2147483648
  %v1704 = vxor.u32 %v1638, 2147483648
  %v1705 = vxor.u32 %v1641, 2147483648
  %v1706 = vxor.u32 %v1646, 2147483648
  %v1707 = vxor.u32 %v1649, 2147483648
  %v1708 = vxor.u32 %v1654, 2147483648
  %v1709 = vxor.u32 %v1657, 2147483648
  %v1710 = vxor.u32 %v1662, 2147483648
  %v1711 = vxor.u32 %v1665, 2147483648
  %v1712 = vxor.u32 %v1670, 2147483648
  %v1713 = vxor.u32 %v1673, 2147483648
  %v1714 = vxor.u32 %v1678, 2147483648
  %v1715 = vxor.u32 %v1681, 2147483648
  %v1716 = vmul.f32 %v1684, 1.442695
  %v1717 = vpow.pop %v1716
  %v1718 = vmul.f32 %v1685, 1.442695
  %v1719 = vpow.pop %v1718
  %v1720 = vmul.f32 %v1686, 1.442695
  %v1721 = vpow.pop %v1720
  %v1722 = vmul.f32 %v1687, 1.442695
  %v1723 = vpow.pop %v1722
  %v1724 = vmul.f32 %v1688, 1.442695
  %v1725 = vpow.pop %v1724
  %v1726 = vmul.f32 %v1689, 1.442695
  %v1727 = vpow.pop %v1726
  %v1728 = vmul.f32 %v1690, 1.442695
  %v1729 = vpow.pop %v1728
  %v1730 = vmul.f32 %v1691, 1.442695
  %v1731 = vpow.pop %v1730
  %v1732 = vmul.f32 %v1692, 1.442695
  %v1733 = vpow.pop %v1732
  %v1734 = vmul.f32 %v1693, 1.442695
  %v1735 = vpow.pop %v1734
  %v1736 = vmul.f32 %v1694, 1.442695
  %v1737 = vpow.pop %v1736
  %v1738 = vmul.f32 %v1695, 1.442695
  %v1739 = vpow.pop %v1738
  %v1740 = vmul.f32 %v1696, 1.442695
  %v1741 = vpow.pop %v1740
  %v1742 = vmul.f32 %v1697, 1.442695
  %v1743 = vpow.pop %v1742
  %v1744 = vmul.f32 %v1698, 1.442695
  %v1745 = vpow.pop %v1744
  %v1746 = vmul.f32 %v1699, 1.442695
  %v1747 = vpow.pop %v1746
  %v1748 = vmul.f32 %v1700, 1.442695
  %v1749 = vpow.pop %v1748
  %v1750 = vmul.f32 %v1701, 1.442695
  %v1751 = vpow.pop %v1750
  %v1752 = vmul.f32 %v1702, 1.442695
  %v1753 = vpow.pop %v1752
  %v1754 = vmul.f32 %v1703, 1.442695
  %v1755 = vpow.pop %v1754
  %v1756 = vmul.f32 %v1704, 1.442695
  %v1757 = vpow.pop %v1756
  %v1758 = vmul.f32 %v1705, 1.442695
  %v1759 = vpow.pop %v1758
  %v1760 = vmul.f32 %v1706, 1.442695
  %v1761 = vpow.pop %v1760
  %v1762 = vmul.f32 %v1707, 1.442695
  %v1763 = vpow.pop %v1762
  %v1764 = vmul.f32 %v1708, 1.442695
  %v1765 = vpow.pop %v1764
  %v1766 = vmul.f32 %v1709, 1.442695
  %v1767 = vpow.pop %v1766
  %v1768 = vmul.f32 %v1710, 1.442695
  %v1769 = vpow.pop %v1768
  %v1770 = vmul.f32 %v1711, 1.442695
  %v1771 = vpow.pop %v1770
  %v1772 = vmul.f32 %v1712, 1.442695
  %v1773 = vpow.pop %v1772
  %v1774 = vmul.f32 %v1713, 1.442695
  %v1775 = vpow.pop %v1774
  %v1776 = vmul.f32 %v1714, 1.442695
  %v1777 = vpow.pop %v1776
  %v1778 = vmul.f32 %v1715, 1.442695
  %v1779 = vpow.pop %v1778
  %v1780 = vadd.f32 %v1717, 1.0
  %v1781 = vadd.f32 %v1719, 1.0
  %v1782 = vadd.f32 %v1721, 1.0
  %v1783 = vadd.f32 %v1723, 1.0
  %v1784 = vadd.f32 %v1725, 1.0
  %v1785 = vadd.f32 %v1727, 1.0
  %v1786 = vadd.f32 %v1729, 1.0
  %v1787 = vadd.f32 %v1731, 1.0
  %v1788 = vadd.f32 %v1733, 1.0
  %v1789 = vadd.f32 %v1735, 1.0
  %v1790 = vadd.f32 %v1737, 1.0
  %v1791 = vadd.f32 %v1739, 1.0
  %v1792 = vadd.f32 %v1741, 1.0
  %v1793 = vadd.f32 %v1743, 1.0
  %v1794 = vadd.f32 %v1745, 1.0
  %v1795 = vadd.f32 %v1747, 1.0
  %v1796 = vadd.f32 %v1749, 1.0
  %v1797 = vadd.f32 %v1751, 1.0
  %v1798 = vadd.f32 %v1753, 1.0
  %v1799 = vadd.f32 %v1755, 1.0
  %v1800 = vadd.f32 %v1757, 1.0
  %v1801 = vadd.f32 %v1759, 1.0
  %v1802 = vadd.f32 %v1761, 1.0
  %v1803 = vadd.f32 %v1763, 1.0
  %v1804 = vadd.f32 %v1765, 1.0
  %v1805 = vadd.f32 %v1767, 1.0
  %v1806 = vadd.f32 %v1769, 1.0
  %v1807 = vadd.f32 %v1771, 1.0
  %v1808 = vadd.f32 %v1773, 1.0
  %v1809 = vadd.f32 %v1775, 1.0
  %v1810 = vadd.f32 %v1777, 1.0
  %v1811 = vadd.f32 %v1779, 1.0
  %v1812 = vrcp.pop %v1780
  %v1813 = vmul.f32 1.0, %v1812
  %v1814 = vrcp.pop %v1781
  %v1815 = vmul.f32 1.0, %v1814
  %v1816 = vrcp.pop %v1782
  %v1817 = vmul.f32 1.0, %v1816
  %v1818 = vrcp.pop %v1783
  %v1819 = vmul.f32 1.0, %v1818
  %v1820 = vrcp.pop %v1784
  %v1821 = vmul.f32 1.0, %v1820
  %v1822 = vrcp.pop %v1785
  %v1823 = vmul.f32 1.0, %v1822
  %v1824 = vrcp.pop %v1786
  %v1825 = vmul.f32 1.0, %v1824
  %v1826 = vrcp.pop %v1787
  %v1827 = vmul.f32 1.0, %v1826
  %v1828 = vrcp.pop %v1788
  %v1829 = vmul.f32 1.0, %v1828
  %v1830 = vrcp.pop %v1789
  %v1831 = vmul.f32 1.0, %v1830
  %v1832 = vrcp.pop %v1790
  %v1833 = vmul.f32 1.0, %v1832
  %v1834 = vrcp.pop %v1791
  %v1835 = vmul.f32 1.0, %v1834
  %v1836 = vrcp.pop %v1792
  %v1837 = vmul.f32 1.0, %v1836
  %v1838 = vrcp.pop %v1793
  %v1839 = vmul.f32 1.0, %v1838
  %v1840 = vrcp.pop %v1794
  %v1841 = vmul.f32 1.0, %v1840
  %v1842 = vrcp.pop %v1795
  %v1843 = vmul.f32 1.0, %v1842
  %v1844 = vrcp.pop %v1796
  %v1845 = vmul.f32 1.0, %v1844
  %v1846 = vrcp.pop %v1797
  %v1847 = vmul.f32 1.0, %v1846
  %v1848 = vrcp.pop %v1798
  %v1849 = vmul.f32 1.0, %v1848
  %v1850 = vrcp.pop %v1799
  %v1851 = vmul.f32 1.0, %v1850
  %v1852 = vrcp.pop %v1800
  %v1853 = vmul.f32 1.0, %v1852
  %v1854 = vrcp.pop %v1801
  %v1855 = vmul.f32 1.0, %v1854
  %v1856 = vrcp.pop %v1802
  %v1857 = vmul.f32 1.0, %v1856
  %v1858 = vrcp.pop %v1803
  %v1859 = vmul.f32 1.0, %v1858
  %v1860 = vrcp.pop %v1804
  %v1861 = vmul.f32 1.0, %v1860
  %v1862 = vrcp.pop %v1805
  %v1863 = vmul.f32 1.0, %v1862
  %v1864 = vrcp.pop %v1806
  %v1865 = vmul.f32 1.0, %v1864
  %v1866 = vrcp.pop %v1807
  %v1867 = vmul.f32 1.0, %v1866
  %v1868 = vrcp.pop %v1808
  %v1869 = vmul.f32 1.0, %v1868
  %v1870 = vrcp.pop %v1809
  %v1871 = vmul.f32 1.0, %v1870
  %v1872 = vrcp.pop %v1810
  %v1873 = vmul.f32 1.0, %v1872
  %v1874 = vrcp.pop %v1811
  %v1875 = vmul.f32 1.0, %v1874
  %1876 = vst.msk [vmem:[%s3] sm:$0xff] %vm116, %v1813
  %1877 = vst.msk [vmem:[%s3 + $0x8] sm:$0xff] %vm116, %v1815
  %1878 = vst.msk [vmem:[%s3 + $0x10] sm:$0xff] %vm116, %v1817
  %1879 = vst.msk [vmem:[%s3 + $0x18] sm:$0xff] %vm116, %v1819
  %1880 = vst.msk [vmem:[%s3 + $0x20] sm:$0xff] %vm116, %v1821
  %1881 = vst.msk [vmem:[%s3 + $0x28] sm:$0xff] %vm116, %v1823
  %1882 = vst.msk [vmem:[%s3 + $0x30] sm:$0xff] %vm116, %v1825
  %1883 = vst.msk [vmem:[%s3 + $0x38] sm:$0xff] %vm116, %v1827
  %1884 = vst.msk [vmem:[%s3 + $0x40] sm:$0xff] %vm116, %v1829
  %1885 = vst.msk [vmem:[%s3 + $0x48] sm:$0xff] %vm116, %v1831
  %1886 = vst.msk [vmem:[%s3 + $0x50] sm:$0xff] %vm116, %v1833
  %1887 = vst.msk [vmem:[%s3 + $0x58] sm:$0xff] %vm116, %v1835
  %1888 = vst.msk [vmem:[%s3 + $0x60] sm:$0xff] %vm116, %v1837
  %1889 = vst.msk [vmem:[%s3 + $0x68] sm:$0xff] %vm116, %v1839
  %1890 = vst.msk [vmem:[%s3 + $0x70] sm:$0xff] %vm116, %v1841
  %1891 = vst.msk [vmem:[%s3 + $0x78] sm:$0xff] %vm116, %v1843
  %1892 = vst.msk [vmem:[%s3 + $0x80] sm:$0xff] %vm116, %v1845
  %1893 = vst.msk [vmem:[%s3 + $0x88] sm:$0xff] %vm116, %v1847
  %1894 = vst.msk [vmem:[%s3 + $0x90] sm:$0xff] %vm116, %v1849
  %1895 = vst.msk [vmem:[%s3 + $0x98] sm:$0xff] %vm116, %v1851
  %1896 = vst.msk [vmem:[%s3 + $0xa0] sm:$0xff] %vm116, %v1853
  %1897 = vst.msk [vmem:[%s3 + $0xa8] sm:$0xff] %vm116, %v1855
  %1898 = vst.msk [vmem:[%s3 + $0xb0] sm:$0xff] %vm116, %v1857
  %1899 = vst.msk [vmem:[%s3 + $0xb8] sm:$0xff] %vm116, %v1859
  %1900 = vst.msk [vmem:[%s3 + $0xc0] sm:$0xff] %vm116, %v1861
  %1901 = vst.msk [vmem:[%s3 + $0xc8] sm:$0xff] %vm116, %v1863
  %1902 = vst.msk [vmem:[%s3 + $0xd0] sm:$0xff] %vm116, %v1865
  %1903 = vst.msk [vmem:[%s3 + $0xd8] sm:$0xff] %vm116, %v1867
  %1904 = vst.msk [vmem:[%s3 + $0xe0] sm:$0xff] %vm116, %v1869
  %1905 = vst.msk [vmem:[%s3 + $0xe8] sm:$0xff] %vm116, %v1871
  %1906 = vst.msk [vmem:[%s3 + $0xf0] sm:$0xff] %vm116, %v1873
  %1907 = vst.msk [vmem:[%s3 + $0xf8] sm:$0xff] %vm116, %v1875
  %s1908 = scalar_lea.vmem %s0, 256
  %v1909 = vld [vmem:[%s1908] sm:$0xff]
  %v1910 = vld [vmem:[%s1908 + $0x8] sm:$0xff]
  %v1911 = vld [vmem:[%s1908 + $0x10] sm:$0xff]
  %v1912 = vld [vmem:[%s1908 + $0x18] sm:$0xff]
  %v1913 = vld [vmem:[%s1908 + $0x20] sm:$0xff]
  %v1914 = vld [vmem:[%s1908 + $0x28] sm:$0xff]
  %v1915 = vld [vmem:[%s1908 + $0x30] sm:$0xff]
  %v1916 = vld [vmem:[%s1908 + $0x38] sm:$0xff]
  %v1917 = vld [vmem:[%s1908 + $0x40] sm:$0xff]
  %v1918 = vld [vmem:[%s1908 + $0x48] sm:$0xff]
  %v1919 = vld [vmem:[%s1908 + $0x50] sm:$0xff]
  %v1920 = vld [vmem:[%s1908 + $0x58] sm:$0xff]
  %v1921 = vld [vmem:[%s1908 + $0x60] sm:$0xff]
  %v1922 = vld [vmem:[%s1908 + $0x68] sm:$0xff]
  %v1923 = vld [vmem:[%s1908 + $0x70] sm:$0xff]
  %v1924 = vld [vmem:[%s1908 + $0x78] sm:$0xff]
  %v1925 = vld [vmem:[%s1908 + $0x80] sm:$0xff]
  %v1926 = vld [vmem:[%s1908 + $0x88] sm:$0xff]
  %v1927 = vld [vmem:[%s1908 + $0x90] sm:$0xff]
  %v1928 = vld [vmem:[%s1908 + $0x98] sm:$0xff]
  %v1929 = vld [vmem:[%s1908 + $0xa0] sm:$0xff]
  %v1930 = vld [vmem:[%s1908 + $0xa8] sm:$0xff]
  %v1931 = vld [vmem:[%s1908 + $0xb0] sm:$0xff]
  %v1932 = vld [vmem:[%s1908 + $0xb8] sm:$0xff]
  %v1933 = vld [vmem:[%s1908 + $0xc0] sm:$0xff]
  %v1934 = vld [vmem:[%s1908 + $0xc8] sm:$0xff]
  %v1935 = vld [vmem:[%s1908 + $0xd0] sm:$0xff]
  %v1936 = vld [vmem:[%s1908 + $0xd8] sm:$0xff]
  %v1937 = vld [vmem:[%s1908 + $0xe0] sm:$0xff]
  %v1938 = vld [vmem:[%s1908 + $0xe8] sm:$0xff]
  %v1939 = vld [vmem:[%s1908 + $0xf0] sm:$0xff]
  %v1940 = vld [vmem:[%s1908 + $0xf8] sm:$0xff]
  %v1941 = vpack.c.bf16 %v1910, %v1909
  %v1942 = vpack.c.bf16 %v1912, %v1911
  %v1943 = vpack.c.bf16 %v1914, %v1913
  %v1944 = vpack.c.bf16 %v1916, %v1915
  %v1945 = vpack.c.bf16 %v1918, %v1917
  %v1946 = vpack.c.bf16 %v1920, %v1919
  %v1947 = vpack.c.bf16 %v1922, %v1921
  %v1948 = vpack.c.bf16 %v1924, %v1923
  %v1949 = vpack.c.bf16 %v1926, %v1925
  %v1950 = vpack.c.bf16 %v1928, %v1927
  %v1951 = vpack.c.bf16 %v1930, %v1929
  %v1952 = vpack.c.bf16 %v1932, %v1931
  %v1953 = vpack.c.bf16 %v1934, %v1933
  %v1954 = vpack.c.bf16 %v1936, %v1935
  %v1955 = vpack.c.bf16 %v1938, %v1937
  %v1956 = vpack.c.bf16 %v1940, %v1939
  %v1957 = vld [vmem:[%s1] sm:$0xf]
  %v1958 = vld [vmem:[%s1 + $0x4] sm:$0xf]
  %v1959 = vld [vmem:[%s1 + $0x8] sm:$0xf]
  %v1960 = vld [vmem:[%s1 + $0xc] sm:$0xf]
  %v1961 = vld [vmem:[%s1 + $0x10] sm:$0xf]
  %v1962 = vld [vmem:[%s1 + $0x14] sm:$0xf]
  %v1963 = vld [vmem:[%s1 + $0x18] sm:$0xf]
  %v1964 = vld [vmem:[%s1 + $0x1c] sm:$0xf]
  %v1965 = vld [vmem:[%s1 + $0x20] sm:$0xf]
  %v1966 = vld [vmem:[%s1 + $0x24] sm:$0xf]
  %v1967 = vld [vmem:[%s1 + $0x28] sm:$0xf]
  %v1968 = vld [vmem:[%s1 + $0x2c] sm:$0xf]
  %v1969 = vld [vmem:[%s2] sm:$0x1]
  %v1970 = vlaneseq
  %v1971 = vshrl.u32 %v1970, 7
  %v1972 = vsub.s32 0, %v1971
  %v1973 = vrot.slane %v1969, %v1972
  %v1986 = vunpack.c.l.b16 %v1957
  %v1987 = vunpack.c.l.b16 %v1958
  %v1988 = vunpack.c.l.b16 %v1959
  %v1989 = vunpack.c.l.b16 %v1960
  %v1990 = vunpack.c.l.b16 %v1961
  %v1991 = vunpack.c.l.b16 %v1962
  %v1992 = vunpack.c.l.b16 %v1963
  %v1993 = vunpack.c.l.b16 %v1964
  %v1994 = vunpack.c.l.b16 %v1965
  %v1995 = vunpack.c.l.b16 %v1966
  %v1996 = vunpack.c.l.b16 %v1967
  %v1997 = vunpack.c.l.b16 %v1968
  %v1998 = vpack.c.b16 %v1987, %v1986
  %v1999 = vpack.c.b16 %v1989, %v1988
  %v2000 = vpack.c.b16 %v1991, %v1990
  %v2001 = vpack.c.b16 %v1993, %v1992
  %v2002 = vpack.c.b16 %v1995, %v1994
  %v2003 = vpack.c.b16 %v1997, %v1996
  %v2011 = vsel %vm116, %v1941, 0
  %v2014 = vsel %vm116, %v1942, 0
  %v2017 = vsel %vm116, %v1943, 0
  %v2020 = vsel %vm116, %v1944, 0
  %v2023 = vsel %vm116, %v1945, 0
  %v2026 = vsel %vm116, %v1946, 0
  %v2029 = vsel %vm116, %v1947, 0
  %v2032 = vsel %vm116, %v1948, 0
  %v2035 = vsel %vm116, %v1949, 0
  %v2038 = vsel %vm116, %v1950, 0
  %v2041 = vsel %vm116, %v1951, 0
  %v2044 = vsel %vm116, %v1952, 0
  %v2047 = vsel %vm116, %v1953, 0
  %v2050 = vsel %vm116, %v1954, 0
  %v2053 = vsel %vm116, %v1955, 0
  %v2056 = vsel %vm116, %v1956, 0
  %2058 = vmatprep.subr.bf16.mxu0 0
  %2059 = vmatpush1.bf16.msra.mxu0 %v1998
  %2060 = vmatprep.subr.bf16.mxu0 0
  %2061 = vmatpush1.bf16.msra.mxu0 %v1999
  %2062 = vmatprep.subr.bf16.mxu0 0
  %2063 = vmatpush1.bf16.msra.mxu0 %v2000
  %2064 = vmatprep.subr.bf16.mxu0 0
  %2065 = vmatpush1.bf16.msra.mxu0 %v2001
  %2066 = vmatprep.subr.bf16.mxu0 0
  %2067 = vmatpush1.bf16.msra.mxu0 %v2002
  %2068 = vmatprep.subr.bf16.mxu0 0
  %2069 = vmatpush1.bf16.msra.mxu0 %v2003
  %2070 = vmatprep.subr.bf16.mxu0 0
  %2071 = vmatpush1.bf16.msra.mxu0 0
  %2072 = vmatprep.subr.bf16.mxu0 0
  %2073 = vmatpush1.bf16.msra.mxu0 0
  %2074 = vmatprep.subr.bf16.mxu0 0
  %2075 = vmatpush1.bf16.msra.mxu0 0
  %2076 = vmatprep.subr.bf16.mxu0 0
  %2077 = vmatpush1.bf16.msra.mxu0 0
  %2078 = vmatprep.subr.bf16.mxu0 0
  %2079 = vmatpush1.bf16.msra.mxu0 0
  %2080 = vmatprep.subr.bf16.mxu0 0
  %2081 = vmatpush1.bf16.msra.mxu0 0
  %2082 = vmatprep.subr.bf16.mxu0 0
  %2083 = vmatpush1.bf16.msra.mxu0 0
  %2084 = vmatprep.subr.bf16.mxu0 0
  %2085 = vmatpush1.bf16.msra.mxu0 0
  %2086 = vmatprep.subr.bf16.mxu0 0
  %2087 = vmatpush1.bf16.msra.mxu0 0
  %2088 = vmatprep.subr.bf16.mxu0 0
  %2089 = vmatpush1.bf16.msra.mxu0 0
  %2090 = vmatprep.mubr.bf16.mxu0 0
  %2091 = vmatmul.mubr.bf16.gmra.mrb[0].mxu0 %v2011
  %v2092 = vpop.f32.mrb[0].mxu0
  %v2093 = vadd.f32 %v1973, %v2092
  %v2094 = vpop.f32.mrb[0].mxu0
  %v2095 = vpop.f32.mrb[0].mxu0
  %v2096 = vadd.f32 %v1973, %v2095
  %v2097 = vpop.f32.mrb[0].mxu0
  %2098 = vmatprep.mubr.bf16.mxu0 0
  %2099 = vmatmul.mubr.bf16.gmra.mrb[0].mxu0 %v2014
  %v2100 = vpop.f32.mrb[0].mxu0
  %v2101 = vadd.f32 %v1973, %v2100
  %v2102 = vpop.f32.mrb[0].mxu0
  %v2103 = vpop.f32.mrb[0].mxu0
  %v2104 = vadd.f32 %v1973, %v2103
  %v2105 = vpop.f32.mrb[0].mxu0
  %2106 = vmatprep.mubr.bf16.mxu0 0
  %2107 = vmatmul.mubr.bf16.gmra.mrb[0].mxu0 %v2017
  %v2108 = vpop.f32.mrb[0].mxu0
  %v2109 = vadd.f32 %v1973, %v2108
  %v2110 = vpop.f32.mrb[0].mxu0
  %v2111 = vpop.f32.mrb[0].mxu0
  %v2112 = vadd.f32 %v1973, %v2111
  %v2113 = vpop.f32.mrb[0].mxu0
  %2114 = vmatprep.mubr.bf16.mxu0 0
  %2115 = vmatmul.mubr.bf16.gmra.mrb[0].mxu0 %v2020
  %v2116 = vpop.f32.mrb[0].mxu0
  %v2117 = vadd.f32 %v1973, %v2116
  %v2118 = vpop.f32.mrb[0].mxu0
  %v2119 = vpop.f32.mrb[0].mxu0
  %v2120 = vadd.f32 %v1973, %v2119
  %v2121 = vpop.f32.mrb[0].mxu0
  %2122 = vmatprep.mubr.bf16.mxu0 0
  %2123 = vmatmul.mubr.bf16.gmra.mrb[0].mxu0 %v2023
  %v2124 = vpop.f32.mrb[0].mxu0
  %v2125 = vadd.f32 %v1973, %v2124
  %v2126 = vpop.f32.mrb[0].mxu0
  %v2127 = vpop.f32.mrb[0].mxu0
  %v2128 = vadd.f32 %v1973, %v2127
  %v2129 = vpop.f32.mrb[0].mxu0
  %2130 = vmatprep.mubr.bf16.mxu0 0
  %2131 = vmatmul.mubr.bf16.gmra.mrb[0].mxu0 %v2026
  %v2132 = vpop.f32.mrb[0].mxu0
  %v2133 = vadd.f32 %v1973, %v2132
  %v2134 = vpop.f32.mrb[0].mxu0
  %v2135 = vpop.f32.mrb[0].mxu0
  %v2136 = vadd.f32 %v1973, %v2135
  %v2137 = vpop.f32.mrb[0].mxu0
  %2138 = vmatprep.mubr.bf16.mxu0 0
  %2139 = vmatmul.mubr.bf16.gmra.mrb[0].mxu0 %v2029
  %v2140 = vpop.f32.mrb[0].mxu0
  %v2141 = vadd.f32 %v1973, %v2140
  %v2142 = vpop.f32.mrb[0].mxu0
  %v2143 = vpop.f32.mrb[0].mxu0
  %v2144 = vadd.f32 %v1973, %v2143
  %v2145 = vpop.f32.mrb[0].mxu0
  %2146 = vmatprep.mubr.bf16.mxu0 0
  %2147 = vmatmul.mubr.bf16.gmra.mrb[0].mxu0 %v2032
  %v2148 = vpop.f32.mrb[0].mxu0
  %v2149 = vadd.f32 %v1973, %v2148
  %v2150 = vpop.f32.mrb[0].mxu0
  %v2151 = vpop.f32.mrb[0].mxu0
  %v2152 = vadd.f32 %v1973, %v2151
  %v2153 = vpop.f32.mrb[0].mxu0
  %2154 = vmatprep.mubr.bf16.mxu0 0
  %2155 = vmatmul.mubr.bf16.gmra.mrb[0].mxu0 %v2035
  %v2156 = vpop.f32.mrb[0].mxu0
  %v2157 = vadd.f32 %v1973, %v2156
  %v2158 = vpop.f32.mrb[0].mxu0
  %v2159 = vpop.f32.mrb[0].mxu0
  %v2160 = vadd.f32 %v1973, %v2159
  %v2161 = vpop.f32.mrb[0].mxu0
  %2162 = vmatprep.mubr.bf16.mxu0 0
  %2163 = vmatmul.mubr.bf16.gmra.mrb[0].mxu0 %v2038
  %v2164 = vpop.f32.mrb[0].mxu0
  %v2165 = vadd.f32 %v1973, %v2164
  %v2166 = vpop.f32.mrb[0].mxu0
  %v2167 = vpop.f32.mrb[0].mxu0
  %v2168 = vadd.f32 %v1973, %v2167
  %v2169 = vpop.f32.mrb[0].mxu0
  %2170 = vmatprep.mubr.bf16.mxu0 0
  %2171 = vmatmul.mubr.bf16.gmra.mrb[0].mxu0 %v2041
  %v2172 = vpop.f32.mrb[0].mxu0
  %v2173 = vadd.f32 %v1973, %v2172
  %v2174 = vpop.f32.mrb[0].mxu0
  %v2175 = vpop.f32.mrb[0].mxu0
  %v2176 = vadd.f32 %v1973, %v2175
  %v2177 = vpop.f32.mrb[0].mxu0
  %2178 = vmatprep.mubr.bf16.mxu0 0
  %2179 = vmatmul.mubr.bf16.gmra.mrb[0].mxu0 %v2044
  %v2180 = vpop.f32.mrb[0].mxu0
  %v2181 = vadd.f32 %v1973, %v2180
  %v2182 = vpop.f32.mrb[0].mxu0
  %v2183 = vpop.f32.mrb[0].mxu0
  %v2184 = vadd.f32 %v1973, %v2183
  %v2185 = vpop.f32.mrb[0].mxu0
  %2186 = vmatprep.mubr.bf16.mxu0 0
  %2187 = vmatmul.mubr.bf16.gmra.mrb[0].mxu0 %v2047
  %v2188 = vpop.f32.mrb[0].mxu0
  %v2189 = vadd.f32 %v1973, %v2188
  %v2190 = vpop.f32.mrb[0].mxu0
  %v2191 = vpop.f32.mrb[0].mxu0
  %v2192 = vadd.f32 %v1973, %v2191
  %v2193 = vpop.f32.mrb[0].mxu0
  %2194 = vmatprep.mubr.bf16.mxu0 0
  %2195 = vmatmul.mubr.bf16.gmra.mrb[0].mxu0 %v2050
  %v2196 = vpop.f32.mrb[0].mxu0
  %v2197 = vadd.f32 %v1973, %v2196
  %v2198 = vpop.f32.mrb[0].mxu0
  %v2199 = vpop.f32.mrb[0].mxu0
  %v2200 = vadd.f32 %v1973, %v2199
  %v2201 = vpop.f32.mrb[0].mxu0
  %2202 = vmatprep.mubr.bf16.mxu0 0
  %2203 = vmatmul.mubr.bf16.gmra.mrb[0].mxu0 %v2053
  %v2204 = vpop.f32.mrb[0].mxu0
  %v2205 = vadd.f32 %v1973, %v2204
  %v2206 = vpop.f32.mrb[0].mxu0
  %v2207 = vpop.f32.mrb[0].mxu0
  %v2208 = vadd.f32 %v1973, %v2207
  %v2209 = vpop.f32.mrb[0].mxu0
  %2210 = vmatprep.mubr.bf16.mxu0 0
  %2211 = vmatmul.mubr.bf16.gmra.mrb[0].mxu0 %v2056
  %v2212 = vpop.f32.mrb[0].mxu0
  %v2213 = vadd.f32 %v1973, %v2212
  %v2214 = vpop.f32.mrb[0].mxu0
  %v2215 = vpop.f32.mrb[0].mxu0
  %v2216 = vadd.f32 %v1973, %v2215
  %v2217 = vpop.f32.mrb[0].mxu0
  %2218 = vdwg.mxu0
  %v2219 = vmax.f32 %v2093, 0.0
  %v2220 = vmax.f32 %v2096, 0.0
  %v2221 = vmax.f32 %v2101, 0.0
  %v2222 = vmax.f32 %v2104, 0.0
  %v2223 = vmax.f32 %v2109, 0.0
  %v2224 = vmax.f32 %v2112, 0.0
  %v2225 = vmax.f32 %v2117, 0.0
  %v2226 = vmax.f32 %v2120, 0.0
  %v2227 = vmax.f32 %v2125, 0.0
  %v2228 = vmax.f32 %v2128, 0.0
  %v2229 = vmax.f32 %v2133, 0.0
  %v2230 = vmax.f32 %v2136, 0.0
  %v2231 = vmax.f32 %v2141, 0.0
  %v2232 = vmax.f32 %v2144, 0.0
  %v2233 = vmax.f32 %v2149, 0.0
  %v2234 = vmax.f32 %v2152, 0.0
  %v2235 = vmax.f32 %v2157, 0.0
  %v2236 = vmax.f32 %v2160, 0.0
  %v2237 = vmax.f32 %v2165, 0.0
  %v2238 = vmax.f32 %v2168, 0.0
  %v2239 = vmax.f32 %v2173, 0.0
  %v2240 = vmax.f32 %v2176, 0.0
  %v2241 = vmax.f32 %v2181, 0.0
  %v2242 = vmax.f32 %v2184, 0.0
  %v2243 = vmax.f32 %v2189, 0.0
  %v2244 = vmax.f32 %v2192, 0.0
  %v2245 = vmax.f32 %v2197, 0.0
  %v2246 = vmax.f32 %v2200, 0.0
  %v2247 = vmax.f32 %v2205, 0.0
  %v2248 = vmax.f32 %v2208, 0.0
  %v2249 = vmax.f32 %v2213, 0.0
  %v2250 = vmax.f32 %v2216, 0.0
  %v2251 = vpack.c.bf16 %v2220, %v2219
  %v2252 = vpack.c.bf16 %v2222, %v2221
  %v2253 = vpack.c.bf16 %v2224, %v2223
  %v2254 = vpack.c.bf16 %v2226, %v2225
  %v2255 = vpack.c.bf16 %v2228, %v2227
  %v2256 = vpack.c.bf16 %v2230, %v2229
  %v2257 = vpack.c.bf16 %v2232, %v2231
  %v2258 = vpack.c.bf16 %v2234, %v2233
  %v2259 = vpack.c.bf16 %v2236, %v2235
  %v2260 = vpack.c.bf16 %v2238, %v2237
  %v2261 = vpack.c.bf16 %v2240, %v2239
  %v2262 = vpack.c.bf16 %v2242, %v2241
  %v2263 = vpack.c.bf16 %v2244, %v2243
  %v2264 = vpack.c.bf16 %v2246, %v2245
  %v2265 = vpack.c.bf16 %v2248, %v2247
  %v2266 = vpack.c.bf16 %v2250, %v2249
  %v2267 = vld [vmem:[%s1 + $0x40] sm:$0xf]
  %v2268 = vld [vmem:[%s1 + $0x44] sm:$0xf]
  %v2269 = vld [vmem:[%s1 + $0x48] sm:$0xf]
  %v2270 = vld [vmem:[%s1 + $0x4c] sm:$0xf]
  %v2271 = vld [vmem:[%s1 + $0x50] sm:$0xf]
  %v2272 = vld [vmem:[%s1 + $0x54] sm:$0xf]
  %v2273 = vld [vmem:[%s1 + $0x58] sm:$0xf]
  %v2274 = vld [vmem:[%s1 + $0x5c] sm:$0xf]
  %v2275 = vld [vmem:[%s1 + $0x60] sm:$0xf]
  %v2276 = vld [vmem:[%s1 + $0x64] sm:$0xf]
  %v2277 = vld [vmem:[%s1 + $0x68] sm:$0xf]
  %v2278 = vld [vmem:[%s1 + $0x6c] sm:$0xf]
  %v2279 = vld [vmem:[%s1 + $0x70] sm:$0xf]
  %v2280 = vld [vmem:[%s1 + $0x74] sm:$0xf]
  %v2281 = vld [vmem:[%s1 + $0x78] sm:$0xf]
  %v2282 = vld [vmem:[%s1 + $0x7c] sm:$0xf]
  %v2283 = vld [vmem:[%s2 + $0x1] sm:$0x1]
  %v2284 = vlaneseq
  %v2285 = vshrl.u32 %v2284, 7
  %v2286 = vsub.s32 0, %v2285
  %v2287 = vrot.slane %v2283, %v2286
  %v2304 = vunpack.c.l.b16 %v2267
  %v2305 = vunpack.c.l.b16 %v2268
  %v2306 = vunpack.c.l.b16 %v2269
  %v2307 = vunpack.c.l.b16 %v2270
  %v2308 = vunpack.c.l.b16 %v2271
  %v2309 = vunpack.c.l.b16 %v2272
  %v2310 = vunpack.c.l.b16 %v2273
  %v2311 = vunpack.c.l.b16 %v2274
  %v2312 = vunpack.c.l.b16 %v2275
  %v2313 = vunpack.c.l.b16 %v2276
  %v2314 = vunpack.c.l.b16 %v2277
  %v2315 = vunpack.c.l.b16 %v2278
  %v2316 = vunpack.c.l.b16 %v2279
  %v2317 = vunpack.c.l.b16 %v2280
  %v2318 = vunpack.c.l.b16 %v2281
  %v2319 = vunpack.c.l.b16 %v2282
  %v2320 = vpack.c.b16 %v2305, %v2304
  %v2321 = vpack.c.b16 %v2307, %v2306
  %v2322 = vpack.c.b16 %v2309, %v2308
  %v2323 = vpack.c.b16 %v2311, %v2310
  %v2324 = vpack.c.b16 %v2313, %v2312
  %v2325 = vpack.c.b16 %v2315, %v2314
  %v2326 = vpack.c.b16 %v2317, %v2316
  %v2327 = vpack.c.b16 %v2319, %v2318
  %2336 = vmatprep.subr.bf16.mxu0 0
  %2337 = vmatpush1.bf16.msra.mxu0 %v2320
  %2338 = vmatprep.subr.bf16.mxu0 0
  %2339 = vmatpush1.bf16.msra.mxu0 %v2321
  %2340 = vmatprep.subr.bf16.mxu0 0
  %2341 = vmatpush1.bf16.msra.mxu0 %v2322
  %2342 = vmatprep.subr.bf16.mxu0 0
  %2343 = vmatpush1.bf16.msra.mxu0 %v2323
  %2344 = vmatprep.subr.bf16.mxu0 0
  %2345 = vmatpush1.bf16.msra.mxu0 %v2324
  %2346 = vmatprep.subr.bf16.mxu0 0
  %2347 = vmatpush1.bf16.msra.mxu0 %v2325
  %2348 = vmatprep.subr.bf16.mxu0 0
  %2349 = vmatpush1.bf16.msra.mxu0 %v2326
  %2350 = vmatprep.subr.bf16.mxu0 0
  %2351 = vmatpush1.bf16.msra.mxu0 %v2327
  %2352 = vmatprep.subr.bf16.mxu0 0
  %2353 = vmatpush1.bf16.msra.mxu0 0
  %2354 = vmatprep.subr.bf16.mxu0 0
  %2355 = vmatpush1.bf16.msra.mxu0 0
  %2356 = vmatprep.subr.bf16.mxu0 0
  %2357 = vmatpush1.bf16.msra.mxu0 0
  %2358 = vmatprep.subr.bf16.mxu0 0
  %2359 = vmatpush1.bf16.msra.mxu0 0
  %2360 = vmatprep.subr.bf16.mxu0 0
  %2361 = vmatpush1.bf16.msra.mxu0 0
  %2362 = vmatprep.subr.bf16.mxu0 0
  %2363 = vmatpush1.bf16.msra.mxu0 0
  %2364 = vmatprep.subr.bf16.mxu0 0
  %2365 = vmatpush1.bf16.msra.mxu0 0
  %2366 = vmatprep.subr.bf16.mxu0 0
  %2367 = vmatpush1.bf16.msra.mxu0 0
  %2368 = vmatprep.mubr.bf16.mxu0 0
  %2369 = vmatmul.mubr.bf16.gmra.mrb[0].mxu0 %v2251
  %v2370 = vpop.f32.mrb[0].mxu0
  %v2371 = vadd.f32 %v2287, %v2370
  %v2372 = vpop.f32.mrb[0].mxu0
  %v2373 = vpop.f32.mrb[0].mxu0
  %v2374 = vadd.f32 %v2287, %v2373
  %v2375 = vpop.f32.mrb[0].mxu0
  %2376 = vmatprep.mubr.bf16.mxu0 0
  %2377 = vmatmul.mubr.bf16.gmra.mrb[0].mxu0 %v2252
  %v2378 = vpop.f32.mrb[0].mxu0
  %v2379 = vadd.f32 %v2287, %v2378
  %v2380 = vpop.f32.mrb[0].mxu0
  %v2381 = vpop.f32.mrb[0].mxu0
  %v2382 = vadd.f32 %v2287, %v2381
  %v2383 = vpop.f32.mrb[0].mxu0
  %2384 = vmatprep.mubr.bf16.mxu0 0
  %2385 = vmatmul.mubr.bf16.gmra.mrb[0].mxu0 %v2253
  %v2386 = vpop.f32.mrb[0].mxu0
  %v2387 = vadd.f32 %v2287, %v2386
  %v2388 = vpop.f32.mrb[0].mxu0
  %v2389 = vpop.f32.mrb[0].mxu0
  %v2390 = vadd.f32 %v2287, %v2389
  %v2391 = vpop.f32.mrb[0].mxu0
  %2392 = vmatprep.mubr.bf16.mxu0 0
  %2393 = vmatmul.mubr.bf16.gmra.mrb[0].mxu0 %v2254
  %v2394 = vpop.f32.mrb[0].mxu0
  %v2395 = vadd.f32 %v2287, %v2394
  %v2396 = vpop.f32.mrb[0].mxu0
  %v2397 = vpop.f32.mrb[0].mxu0
  %v2398 = vadd.f32 %v2287, %v2397
  %v2399 = vpop.f32.mrb[0].mxu0
  %2400 = vmatprep.mubr.bf16.mxu0 0
  %2401 = vmatmul.mubr.bf16.gmra.mrb[0].mxu0 %v2255
  %v2402 = vpop.f32.mrb[0].mxu0
  %v2403 = vadd.f32 %v2287, %v2402
  %v2404 = vpop.f32.mrb[0].mxu0
  %v2405 = vpop.f32.mrb[0].mxu0
  %v2406 = vadd.f32 %v2287, %v2405
  %v2407 = vpop.f32.mrb[0].mxu0
  %2408 = vmatprep.mubr.bf16.mxu0 0
  %2409 = vmatmul.mubr.bf16.gmra.mrb[0].mxu0 %v2256
  %v2410 = vpop.f32.mrb[0].mxu0
  %v2411 = vadd.f32 %v2287, %v2410
  %v2412 = vpop.f32.mrb[0].mxu0
  %v2413 = vpop.f32.mrb[0].mxu0
  %v2414 = vadd.f32 %v2287, %v2413
  %v2415 = vpop.f32.mrb[0].mxu0
  %2416 = vmatprep.mubr.bf16.mxu0 0
  %2417 = vmatmul.mubr.bf16.gmra.mrb[0].mxu0 %v2257
  %v2418 = vpop.f32.mrb[0].mxu0
  %v2419 = vadd.f32 %v2287, %v2418
  %v2420 = vpop.f32.mrb[0].mxu0
  %v2421 = vpop.f32.mrb[0].mxu0
  %v2422 = vadd.f32 %v2287, %v2421
  %v2423 = vpop.f32.mrb[0].mxu0
  %2424 = vmatprep.mubr.bf16.mxu0 0
  %2425 = vmatmul.mubr.bf16.gmra.mrb[0].mxu0 %v2258
  %v2426 = vpop.f32.mrb[0].mxu0
  %v2427 = vadd.f32 %v2287, %v2426
  %v2428 = vpop.f32.mrb[0].mxu0
  %v2429 = vpop.f32.mrb[0].mxu0
  %v2430 = vadd.f32 %v2287, %v2429
  %v2431 = vpop.f32.mrb[0].mxu0
  %2432 = vmatprep.mubr.bf16.mxu0 0
  %2433 = vmatmul.mubr.bf16.gmra.mrb[0].mxu0 %v2259
  %v2434 = vpop.f32.mrb[0].mxu0
  %v2435 = vadd.f32 %v2287, %v2434
  %v2436 = vpop.f32.mrb[0].mxu0
  %v2437 = vpop.f32.mrb[0].mxu0
  %v2438 = vadd.f32 %v2287, %v2437
  %v2439 = vpop.f32.mrb[0].mxu0
  %2440 = vmatprep.mubr.bf16.mxu0 0
  %2441 = vmatmul.mubr.bf16.gmra.mrb[0].mxu0 %v2260
  %v2442 = vpop.f32.mrb[0].mxu0
  %v2443 = vadd.f32 %v2287, %v2442
  %v2444 = vpop.f32.mrb[0].mxu0
  %v2445 = vpop.f32.mrb[0].mxu0
  %v2446 = vadd.f32 %v2287, %v2445
  %v2447 = vpop.f32.mrb[0].mxu0
  %2448 = vmatprep.mubr.bf16.mxu0 0
  %2449 = vmatmul.mubr.bf16.gmra.mrb[0].mxu0 %v2261
  %v2450 = vpop.f32.mrb[0].mxu0
  %v2451 = vadd.f32 %v2287, %v2450
  %v2452 = vpop.f32.mrb[0].mxu0
  %v2453 = vpop.f32.mrb[0].mxu0
  %v2454 = vadd.f32 %v2287, %v2453
  %v2455 = vpop.f32.mrb[0].mxu0
  %2456 = vmatprep.mubr.bf16.mxu0 0
  %2457 = vmatmul.mubr.bf16.gmra.mrb[0].mxu0 %v2262
  %v2458 = vpop.f32.mrb[0].mxu0
  %v2459 = vadd.f32 %v2287, %v2458
  %v2460 = vpop.f32.mrb[0].mxu0
  %v2461 = vpop.f32.mrb[0].mxu0
  %v2462 = vadd.f32 %v2287, %v2461
  %v2463 = vpop.f32.mrb[0].mxu0
  %2464 = vmatprep.mubr.bf16.mxu0 0
  %2465 = vmatmul.mubr.bf16.gmra.mrb[0].mxu0 %v2263
  %v2466 = vpop.f32.mrb[0].mxu0
  %v2467 = vadd.f32 %v2287, %v2466
  %v2468 = vpop.f32.mrb[0].mxu0
  %v2469 = vpop.f32.mrb[0].mxu0
  %v2470 = vadd.f32 %v2287, %v2469
  %v2471 = vpop.f32.mrb[0].mxu0
  %2472 = vmatprep.mubr.bf16.mxu0 0
  %2473 = vmatmul.mubr.bf16.gmra.mrb[0].mxu0 %v2264
  %v2474 = vpop.f32.mrb[0].mxu0
  %v2475 = vadd.f32 %v2287, %v2474
  %v2476 = vpop.f32.mrb[0].mxu0
  %v2477 = vpop.f32.mrb[0].mxu0
  %v2478 = vadd.f32 %v2287, %v2477
  %v2479 = vpop.f32.mrb[0].mxu0
  %2480 = vmatprep.mubr.bf16.mxu0 0
  %2481 = vmatmul.mubr.bf16.gmra.mrb[0].mxu0 %v2265
  %v2482 = vpop.f32.mrb[0].mxu0
  %v2483 = vadd.f32 %v2287, %v2482
  %v2484 = vpop.f32.mrb[0].mxu0
  %v2485 = vpop.f32.mrb[0].mxu0
  %v2486 = vadd.f32 %v2287, %v2485
  %v2487 = vpop.f32.mrb[0].mxu0
  %2488 = vmatprep.mubr.bf16.mxu0 0
  %2489 = vmatmul.mubr.bf16.gmra.mrb[0].mxu0 %v2266
  %v2490 = vpop.f32.mrb[0].mxu0
  %v2491 = vadd.f32 %v2287, %v2490
  %v2492 = vpop.f32.mrb[0].mxu0
  %v2493 = vpop.f32.mrb[0].mxu0
  %v2494 = vadd.f32 %v2287, %v2493
  %v2495 = vpop.f32.mrb[0].mxu0
  %2496 = vdwg.mxu0
  %v2497 = vmax.f32 %v2371, 0.0
  %v2498 = vmax.f32 %v2374, 0.0
  %v2499 = vmax.f32 %v2379, 0.0
  %v2500 = vmax.f32 %v2382, 0.0
  %v2501 = vmax.f32 %v2387, 0.0
  %v2502 = vmax.f32 %v2390, 0.0
  %v2503 = vmax.f32 %v2395, 0.0
  %v2504 = vmax.f32 %v2398, 0.0
  %v2505 = vmax.f32 %v2403, 0.0
  %v2506 = vmax.f32 %v2406, 0.0
  %v2507 = vmax.f32 %v2411, 0.0
  %v2508 = vmax.f32 %v2414, 0.0
  %v2509 = vmax.f32 %v2419, 0.0
  %v2510 = vmax.f32 %v2422, 0.0
  %v2511 = vmax.f32 %v2427, 0.0
  %v2512 = vmax.f32 %v2430, 0.0
  %v2513 = vmax.f32 %v2435, 0.0
  %v2514 = vmax.f32 %v2438, 0.0
  %v2515 = vmax.f32 %v2443, 0.0
  %v2516 = vmax.f32 %v2446, 0.0
  %v2517 = vmax.f32 %v2451, 0.0
  %v2518 = vmax.f32 %v2454, 0.0
  %v2519 = vmax.f32 %v2459, 0.0
  %v2520 = vmax.f32 %v2462, 0.0
  %v2521 = vmax.f32 %v2467, 0.0
  %v2522 = vmax.f32 %v2470, 0.0
  %v2523 = vmax.f32 %v2475, 0.0
  %v2524 = vmax.f32 %v2478, 0.0
  %v2525 = vmax.f32 %v2483, 0.0
  %v2526 = vmax.f32 %v2486, 0.0
  %v2527 = vmax.f32 %v2491, 0.0
  %v2528 = vmax.f32 %v2494, 0.0
  %v2529 = vpack.c.bf16 %v2498, %v2497
  %v2530 = vpack.c.bf16 %v2500, %v2499
  %v2531 = vpack.c.bf16 %v2502, %v2501
  %v2532 = vpack.c.bf16 %v2504, %v2503
  %v2533 = vpack.c.bf16 %v2506, %v2505
  %v2534 = vpack.c.bf16 %v2508, %v2507
  %v2535 = vpack.c.bf16 %v2510, %v2509
  %v2536 = vpack.c.bf16 %v2512, %v2511
  %v2537 = vpack.c.bf16 %v2514, %v2513
  %v2538 = vpack.c.bf16 %v2516, %v2515
  %v2539 = vpack.c.bf16 %v2518, %v2517
  %v2540 = vpack.c.bf16 %v2520, %v2519
  %v2541 = vpack.c.bf16 %v2522, %v2521
  %v2542 = vpack.c.bf16 %v2524, %v2523
  %v2543 = vpack.c.bf16 %v2526, %v2525
  %v2544 = vpack.c.bf16 %v2528, %v2527
  %v2545 = vld [vmem:[%s1 + $0x80] sm:$0xf]
  %v2546 = vld [vmem:[%s1 + $0x84] sm:$0xf]
  %v2547 = vld [vmem:[%s1 + $0x88] sm:$0xf]
  %v2548 = vld [vmem:[%s1 + $0x8c] sm:$0xf]
  %v2549 = vld [vmem:[%s1 + $0x90] sm:$0xf]
  %v2550 = vld [vmem:[%s1 + $0x94] sm:$0xf]
  %v2551 = vld [vmem:[%s1 + $0x98] sm:$0xf]
  %v2552 = vld [vmem:[%s1 + $0x9c] sm:$0xf]
  %v2553 = vld [vmem:[%s1 + $0xa0] sm:$0xf]
  %v2554 = vld [vmem:[%s1 + $0xa4] sm:$0xf]
  %v2555 = vld [vmem:[%s1 + $0xa8] sm:$0xf]
  %v2556 = vld [vmem:[%s1 + $0xac] sm:$0xf]
  %v2557 = vld [vmem:[%s1 + $0xb0] sm:$0xf]
  %v2558 = vld [vmem:[%s1 + $0xb4] sm:$0xf]
  %v2559 = vld [vmem:[%s1 + $0xb8] sm:$0xf]
  %v2560 = vld [vmem:[%s1 + $0xbc] sm:$0xf]
  %v2561 = vld [vmem:[%s2 + $0x2] sm:$0x1]
  %v2562 = vlaneseq
  %v2563 = vshrl.u32 %v2562, 7
  %v2564 = vsub.s32 0, %v2563
  %v2565 = vrot.slane %v2561, %v2564
  %v2582 = vunpack.c.l.b16 %v2545
  %v2583 = vunpack.c.l.b16 %v2546
  %v2584 = vunpack.c.l.b16 %v2547
  %v2585 = vunpack.c.l.b16 %v2548
  %v2586 = vunpack.c.l.b16 %v2549
  %v2587 = vunpack.c.l.b16 %v2550
  %v2588 = vunpack.c.l.b16 %v2551
  %v2589 = vunpack.c.l.b16 %v2552
  %v2590 = vunpack.c.l.b16 %v2553
  %v2591 = vunpack.c.l.b16 %v2554
  %v2592 = vunpack.c.l.b16 %v2555
  %v2593 = vunpack.c.l.b16 %v2556
  %v2594 = vunpack.c.l.b16 %v2557
  %v2595 = vunpack.c.l.b16 %v2558
  %v2596 = vunpack.c.l.b16 %v2559
  %v2597 = vunpack.c.l.b16 %v2560
  %v2598 = vpack.c.b16 %v2583, %v2582
  %v2599 = vpack.c.b16 %v2585, %v2584
  %v2600 = vpack.c.b16 %v2587, %v2586
  %v2601 = vpack.c.b16 %v2589, %v2588
  %v2602 = vpack.c.b16 %v2591, %v2590
  %v2603 = vpack.c.b16 %v2593, %v2592
  %v2604 = vpack.c.b16 %v2595, %v2594
  %v2605 = vpack.c.b16 %v2597, %v2596
  %2614 = vmatprep.subr.bf16.mxu0 0
  %2615 = vmatpush1.bf16.msra.mxu0 %v2598
  %2616 = vmatprep.subr.bf16.mxu0 0
  %2617 = vmatpush1.bf16.msra.mxu0 %v2599
  %2618 = vmatprep.subr.bf16.mxu0 0
  %2619 = vmatpush1.bf16.msra.mxu0 %v2600
  %2620 = vmatprep.subr.bf16.mxu0 0
  %2621 = vmatpush1.bf16.msra.mxu0 %v2601
  %2622 = vmatprep.subr.bf16.mxu0 0
  %2623 = vmatpush1.bf16.msra.mxu0 %v2602
  %2624 = vmatprep.subr.bf16.mxu0 0
  %2625 = vmatpush1.bf16.msra.mxu0 %v2603
  %2626 = vmatprep.subr.bf16.mxu0 0
  %2627 = vmatpush1.bf16.msra.mxu0 %v2604
  %2628 = vmatprep.subr.bf16.mxu0 0
  %2629 = vmatpush1.bf16.msra.mxu0 %v2605
  %2630 = vmatprep.subr.bf16.mxu0 0
  %2631 = vmatpush1.bf16.msra.mxu0 0
  %2632 = vmatprep.subr.bf16.mxu0 0
  %2633 = vmatpush1.bf16.msra.mxu0 0
  %2634 = vmatprep.subr.bf16.mxu0 0
  %2635 = vmatpush1.bf16.msra.mxu0 0
  %2636 = vmatprep.subr.bf16.mxu0 0
  %2637 = vmatpush1.bf16.msra.mxu0 0
  %2638 = vmatprep.subr.bf16.mxu0 0
  %2639 = vmatpush1.bf16.msra.mxu0 0
  %2640 = vmatprep.subr.bf16.mxu0 0
  %2641 = vmatpush1.bf16.msra.mxu0 0
  %2642 = vmatprep.subr.bf16.mxu0 0
  %2643 = vmatpush1.bf16.msra.mxu0 0
  %2644 = vmatprep.subr.bf16.mxu0 0
  %2645 = vmatpush1.bf16.msra.mxu0 0
  %2646 = vmatprep.mubr.bf16.mxu0 0
  %2647 = vmatmul.mubr.bf16.gmra.mrb[0].mxu0 %v2529
  %v2648 = vpop.f32.mrb[0].mxu0
  %v2649 = vadd.f32 %v2565, %v2648
  %v2650 = vpop.f32.mrb[0].mxu0
  %v2651 = vpop.f32.mrb[0].mxu0
  %v2652 = vadd.f32 %v2565, %v2651
  %v2653 = vpop.f32.mrb[0].mxu0
  %2654 = vmatprep.mubr.bf16.mxu0 0
  %2655 = vmatmul.mubr.bf16.gmra.mrb[0].mxu0 %v2530
  %v2656 = vpop.f32.mrb[0].mxu0
  %v2657 = vadd.f32 %v2565, %v2656
  %v2658 = vpop.f32.mrb[0].mxu0
  %v2659 = vpop.f32.mrb[0].mxu0
  %v2660 = vadd.f32 %v2565, %v2659
  %v2661 = vpop.f32.mrb[0].mxu0
  %2662 = vmatprep.mubr.bf16.mxu0 0
  %2663 = vmatmul.mubr.bf16.gmra.mrb[0].mxu0 %v2531
  %v2664 = vpop.f32.mrb[0].mxu0
  %v2665 = vadd.f32 %v2565, %v2664
  %v2666 = vpop.f32.mrb[0].mxu0
  %v2667 = vpop.f32.mrb[0].mxu0
  %v2668 = vadd.f32 %v2565, %v2667
  %v2669 = vpop.f32.mrb[0].mxu0
  %2670 = vmatprep.mubr.bf16.mxu0 0
  %2671 = vmatmul.mubr.bf16.gmra.mrb[0].mxu0 %v2532
  %v2672 = vpop.f32.mrb[0].mxu0
  %v2673 = vadd.f32 %v2565, %v2672
  %v2674 = vpop.f32.mrb[0].mxu0
  %v2675 = vpop.f32.mrb[0].mxu0
  %v2676 = vadd.f32 %v2565, %v2675
  %v2677 = vpop.f32.mrb[0].mxu0
  %2678 = vmatprep.mubr.bf16.mxu0 0
  %2679 = vmatmul.mubr.bf16.gmra.mrb[0].mxu0 %v2533
  %v2680 = vpop.f32.mrb[0].mxu0
  %v2681 = vadd.f32 %v2565, %v2680
  %v2682 = vpop.f32.mrb[0].mxu0
  %v2683 = vpop.f32.mrb[0].mxu0
  %v2684 = vadd.f32 %v2565, %v2683
  %v2685 = vpop.f32.mrb[0].mxu0
  %2686 = vmatprep.mubr.bf16.mxu0 0
  %2687 = vmatmul.mubr.bf16.gmra.mrb[0].mxu0 %v2534
  %v2688 = vpop.f32.mrb[0].mxu0
  %v2689 = vadd.f32 %v2565, %v2688
  %v2690 = vpop.f32.mrb[0].mxu0
  %v2691 = vpop.f32.mrb[0].mxu0
  %v2692 = vadd.f32 %v2565, %v2691
  %v2693 = vpop.f32.mrb[0].mxu0
  %2694 = vmatprep.mubr.bf16.mxu0 0
  %2695 = vmatmul.mubr.bf16.gmra.mrb[0].mxu0 %v2535
  %v2696 = vpop.f32.mrb[0].mxu0
  %v2697 = vadd.f32 %v2565, %v2696
  %v2698 = vpop.f32.mrb[0].mxu0
  %v2699 = vpop.f32.mrb[0].mxu0
  %v2700 = vadd.f32 %v2565, %v2699
  %v2701 = vpop.f32.mrb[0].mxu0
  %2702 = vmatprep.mubr.bf16.mxu0 0
  %2703 = vmatmul.mubr.bf16.gmra.mrb[0].mxu0 %v2536
  %v2704 = vpop.f32.mrb[0].mxu0
  %v2705 = vadd.f32 %v2565, %v2704
  %v2706 = vpop.f32.mrb[0].mxu0
  %v2707 = vpop.f32.mrb[0].mxu0
  %v2708 = vadd.f32 %v2565, %v2707
  %v2709 = vpop.f32.mrb[0].mxu0
  %2710 = vmatprep.mubr.bf16.mxu0 0
  %2711 = vmatmul.mubr.bf16.gmra.mrb[0].mxu0 %v2537
  %v2712 = vpop.f32.mrb[0].mxu0
  %v2713 = vadd.f32 %v2565, %v2712
  %v2714 = vpop.f32.mrb[0].mxu0
  %v2715 = vpop.f32.mrb[0].mxu0
  %v2716 = vadd.f32 %v2565, %v2715
  %v2717 = vpop.f32.mrb[0].mxu0
  %2718 = vmatprep.mubr.bf16.mxu0 0
  %2719 = vmatmul.mubr.bf16.gmra.mrb[0].mxu0 %v2538
  %v2720 = vpop.f32.mrb[0].mxu0
  %v2721 = vadd.f32 %v2565, %v2720
  %v2722 = vpop.f32.mrb[0].mxu0
  %v2723 = vpop.f32.mrb[0].mxu0
  %v2724 = vadd.f32 %v2565, %v2723
  %v2725 = vpop.f32.mrb[0].mxu0
  %2726 = vmatprep.mubr.bf16.mxu0 0
  %2727 = vmatmul.mubr.bf16.gmra.mrb[0].mxu0 %v2539
  %v2728 = vpop.f32.mrb[0].mxu0
  %v2729 = vadd.f32 %v2565, %v2728
  %v2730 = vpop.f32.mrb[0].mxu0
  %v2731 = vpop.f32.mrb[0].mxu0
  %v2732 = vadd.f32 %v2565, %v2731
  %v2733 = vpop.f32.mrb[0].mxu0
  %2734 = vmatprep.mubr.bf16.mxu0 0
  %2735 = vmatmul.mubr.bf16.gmra.mrb[0].mxu0 %v2540
  %v2736 = vpop.f32.mrb[0].mxu0
  %v2737 = vadd.f32 %v2565, %v2736
  %v2738 = vpop.f32.mrb[0].mxu0
  %v2739 = vpop.f32.mrb[0].mxu0
  %v2740 = vadd.f32 %v2565, %v2739
  %v2741 = vpop.f32.mrb[0].mxu0
  %2742 = vmatprep.mubr.bf16.mxu0 0
  %2743 = vmatmul.mubr.bf16.gmra.mrb[0].mxu0 %v2541
  %v2744 = vpop.f32.mrb[0].mxu0
  %v2745 = vadd.f32 %v2565, %v2744
  %v2746 = vpop.f32.mrb[0].mxu0
  %v2747 = vpop.f32.mrb[0].mxu0
  %v2748 = vadd.f32 %v2565, %v2747
  %v2749 = vpop.f32.mrb[0].mxu0
  %2750 = vmatprep.mubr.bf16.mxu0 0
  %2751 = vmatmul.mubr.bf16.gmra.mrb[0].mxu0 %v2542
  %v2752 = vpop.f32.mrb[0].mxu0
  %v2753 = vadd.f32 %v2565, %v2752
  %v2754 = vpop.f32.mrb[0].mxu0
  %v2755 = vpop.f32.mrb[0].mxu0
  %v2756 = vadd.f32 %v2565, %v2755
  %v2757 = vpop.f32.mrb[0].mxu0
  %2758 = vmatprep.mubr.bf16.mxu0 0
  %2759 = vmatmul.mubr.bf16.gmra.mrb[0].mxu0 %v2543
  %v2760 = vpop.f32.mrb[0].mxu0
  %v2761 = vadd.f32 %v2565, %v2760
  %v2762 = vpop.f32.mrb[0].mxu0
  %v2763 = vpop.f32.mrb[0].mxu0
  %v2764 = vadd.f32 %v2565, %v2763
  %v2765 = vpop.f32.mrb[0].mxu0
  %2766 = vmatprep.mubr.bf16.mxu0 0
  %2767 = vmatmul.mubr.bf16.gmra.mrb[0].mxu0 %v2544
  %v2768 = vpop.f32.mrb[0].mxu0
  %v2769 = vadd.f32 %v2565, %v2768
  %v2770 = vpop.f32.mrb[0].mxu0
  %v2771 = vpop.f32.mrb[0].mxu0
  %v2772 = vadd.f32 %v2565, %v2771
  %v2773 = vpop.f32.mrb[0].mxu0
  %2774 = vdwg.mxu0
  %v2775 = vpack.c.bf16 %v2652, %v2649
  %v2776 = vpack.c.bf16 %v2660, %v2657
  %v2777 = vpack.c.bf16 %v2668, %v2665
  %v2778 = vpack.c.bf16 %v2676, %v2673
  %v2779 = vpack.c.bf16 %v2684, %v2681
  %v2780 = vpack.c.bf16 %v2692, %v2689
  %v2781 = vpack.c.bf16 %v2700, %v2697
  %v2782 = vpack.c.bf16 %v2708, %v2705
  %v2783 = vpack.c.bf16 %v2716, %v2713
  %v2784 = vpack.c.bf16 %v2724, %v2721
  %v2785 = vpack.c.bf16 %v2732, %v2729
  %v2786 = vpack.c.bf16 %v2740, %v2737
  %v2787 = vpack.c.bf16 %v2748, %v2745
  %v2788 = vpack.c.bf16 %v2756, %v2753
  %v2789 = vpack.c.bf16 %v2764, %v2761
  %v2790 = vpack.c.bf16 %v2772, %v2769
  %v2791 = vld [vmem:[%s1 + $0xc0] sm:$0xf]
  %v2792 = vld [vmem:[%s1 + $0xc4] sm:$0xf]
  %v2793 = vld [vmem:[%s1 + $0xc8] sm:$0xf]
  %v2794 = vld [vmem:[%s1 + $0xcc] sm:$0xf]
  %v2795 = vld [vmem:[%s1 + $0xd0] sm:$0xf]
  %v2796 = vld [vmem:[%s1 + $0xd4] sm:$0xf]
  %v2797 = vld [vmem:[%s1 + $0xd8] sm:$0xf]
  %v2798 = vld [vmem:[%s1 + $0xdc] sm:$0xf]
  %v2799 = vld [vmem:[%s1 + $0xe0] sm:$0xf]
  %v2800 = vld [vmem:[%s1 + $0xe4] sm:$0xf]
  %v2801 = vld [vmem:[%s1 + $0xe8] sm:$0xf]
  %v2802 = vld [vmem:[%s1 + $0xec] sm:$0xf]
  %v2803 = vld [vmem:[%s1 + $0xf0] sm:$0xf]
  %v2804 = vld [vmem:[%s1 + $0xf4] sm:$0xf]
  %v2805 = vld [vmem:[%s1 + $0xf8] sm:$0xf]
  %v2806 = vld [vmem:[%s1 + $0xfc] sm:$0xf]
  %v2807 = vld [vmem:[%s2 + $0x3] sm:$0x1]
  %v2808 = vlaneseq
  %v2809 = vshrl.u32 %v2808, 7
  %v2810 = vsub.s32 0, %v2809
  %v2811 = vrot.slane %v2807, %v2810
  %v2828 = vunpack.c.l.b16 %v2791
  %v2829 = vunpack.c.l.b16 %v2792
  %v2830 = vunpack.c.l.b16 %v2793
  %v2831 = vunpack.c.l.b16 %v2794
  %v2832 = vunpack.c.l.b16 %v2795
  %v2833 = vunpack.c.l.b16 %v2796
  %v2834 = vunpack.c.l.b16 %v2797
  %v2835 = vunpack.c.l.b16 %v2798
  %v2836 = vunpack.c.l.b16 %v2799
  %v2837 = vunpack.c.l.b16 %v2800
  %v2838 = vunpack.c.l.b16 %v2801
  %v2839 = vunpack.c.l.b16 %v2802
  %v2840 = vunpack.c.l.b16 %v2803
  %v2841 = vunpack.c.l.b16 %v2804
  %v2842 = vunpack.c.l.b16 %v2805
  %v2843 = vunpack.c.l.b16 %v2806
  %v2844 = vpack.c.b16 %v2829, %v2828
  %v2845 = vpack.c.b16 %v2831, %v2830
  %v2846 = vpack.c.b16 %v2833, %v2832
  %v2847 = vpack.c.b16 %v2835, %v2834
  %v2848 = vpack.c.b16 %v2837, %v2836
  %v2849 = vpack.c.b16 %v2839, %v2838
  %v2850 = vpack.c.b16 %v2841, %v2840
  %v2851 = vpack.c.b16 %v2843, %v2842
  %2860 = vmatprep.subr.bf16.mxu0 0
  %2861 = vmatpush1.bf16.msra.mxu0 %v2844
  %2862 = vmatprep.subr.bf16.mxu0 0
  %2863 = vmatpush1.bf16.msra.mxu0 %v2845
  %2864 = vmatprep.subr.bf16.mxu0 0
  %2865 = vmatpush1.bf16.msra.mxu0 %v2846
  %2866 = vmatprep.subr.bf16.mxu0 0
  %2867 = vmatpush1.bf16.msra.mxu0 %v2847
  %2868 = vmatprep.subr.bf16.mxu0 0
  %2869 = vmatpush1.bf16.msra.mxu0 %v2848
  %2870 = vmatprep.subr.bf16.mxu0 0
  %2871 = vmatpush1.bf16.msra.mxu0 %v2849
  %2872 = vmatprep.subr.bf16.mxu0 0
  %2873 = vmatpush1.bf16.msra.mxu0 %v2850
  %2874 = vmatprep.subr.bf16.mxu0 0
  %2875 = vmatpush1.bf16.msra.mxu0 %v2851
  %2876 = vmatprep.subr.bf16.mxu0 0
  %2877 = vmatpush1.bf16.msra.mxu0 0
  %2878 = vmatprep.subr.bf16.mxu0 0
  %2879 = vmatpush1.bf16.msra.mxu0 0
  %2880 = vmatprep.subr.bf16.mxu0 0
  %2881 = vmatpush1.bf16.msra.mxu0 0
  %2882 = vmatprep.subr.bf16.mxu0 0
  %2883 = vmatpush1.bf16.msra.mxu0 0
  %2884 = vmatprep.subr.bf16.mxu0 0
  %2885 = vmatpush1.bf16.msra.mxu0 0
  %2886 = vmatprep.subr.bf16.mxu0 0
  %2887 = vmatpush1.bf16.msra.mxu0 0
  %2888 = vmatprep.subr.bf16.mxu0 0
  %2889 = vmatpush1.bf16.msra.mxu0 0
  %2890 = vmatprep.subr.bf16.mxu0 0
  %2891 = vmatpush1.bf16.msra.mxu0 0
  %2892 = vmatprep.mubr.bf16.mxu0 0
  %2893 = vmatmul.mubr.bf16.gmra.mrb[0].mxu0 %v2775
  %v2894 = vpop.f32.mrb[0].mxu0
  %v2895 = vadd.f32 %v2811, %v2894
  %v2896 = vpop.f32.mrb[0].mxu0
  %v2897 = vpop.f32.mrb[0].mxu0
  %v2898 = vadd.f32 %v2811, %v2897
  %v2899 = vpop.f32.mrb[0].mxu0
  %2900 = vmatprep.mubr.bf16.mxu0 0
  %2901 = vmatmul.mubr.bf16.gmra.mrb[0].mxu0 %v2776
  %v2902 = vpop.f32.mrb[0].mxu0
  %v2903 = vadd.f32 %v2811, %v2902
  %v2904 = vpop.f32.mrb[0].mxu0
  %v2905 = vpop.f32.mrb[0].mxu0
  %v2906 = vadd.f32 %v2811, %v2905
  %v2907 = vpop.f32.mrb[0].mxu0
  %2908 = vmatprep.mubr.bf16.mxu0 0
  %2909 = vmatmul.mubr.bf16.gmra.mrb[0].mxu0 %v2777
  %v2910 = vpop.f32.mrb[0].mxu0
  %v2911 = vadd.f32 %v2811, %v2910
  %v2912 = vpop.f32.mrb[0].mxu0
  %v2913 = vpop.f32.mrb[0].mxu0
  %v2914 = vadd.f32 %v2811, %v2913
  %v2915 = vpop.f32.mrb[0].mxu0
  %2916 = vmatprep.mubr.bf16.mxu0 0
  %2917 = vmatmul.mubr.bf16.gmra.mrb[0].mxu0 %v2778
  %v2918 = vpop.f32.mrb[0].mxu0
  %v2919 = vadd.f32 %v2811, %v2918
  %v2920 = vpop.f32.mrb[0].mxu0
  %v2921 = vpop.f32.mrb[0].mxu0
  %v2922 = vadd.f32 %v2811, %v2921
  %v2923 = vpop.f32.mrb[0].mxu0
  %2924 = vmatprep.mubr.bf16.mxu0 0
  %2925 = vmatmul.mubr.bf16.gmra.mrb[0].mxu0 %v2779
  %v2926 = vpop.f32.mrb[0].mxu0
  %v2927 = vadd.f32 %v2811, %v2926
  %v2928 = vpop.f32.mrb[0].mxu0
  %v2929 = vpop.f32.mrb[0].mxu0
  %v2930 = vadd.f32 %v2811, %v2929
  %v2931 = vpop.f32.mrb[0].mxu0
  %2932 = vmatprep.mubr.bf16.mxu0 0
  %2933 = vmatmul.mubr.bf16.gmra.mrb[0].mxu0 %v2780
  %v2934 = vpop.f32.mrb[0].mxu0
  %v2935 = vadd.f32 %v2811, %v2934
  %v2936 = vpop.f32.mrb[0].mxu0
  %v2937 = vpop.f32.mrb[0].mxu0
  %v2938 = vadd.f32 %v2811, %v2937
  %v2939 = vpop.f32.mrb[0].mxu0
  %2940 = vmatprep.mubr.bf16.mxu0 0
  %2941 = vmatmul.mubr.bf16.gmra.mrb[0].mxu0 %v2781
  %v2942 = vpop.f32.mrb[0].mxu0
  %v2943 = vadd.f32 %v2811, %v2942
  %v2944 = vpop.f32.mrb[0].mxu0
  %v2945 = vpop.f32.mrb[0].mxu0
  %v2946 = vadd.f32 %v2811, %v2945
  %v2947 = vpop.f32.mrb[0].mxu0
  %2948 = vmatprep.mubr.bf16.mxu0 0
  %2949 = vmatmul.mubr.bf16.gmra.mrb[0].mxu0 %v2782
  %v2950 = vpop.f32.mrb[0].mxu0
  %v2951 = vadd.f32 %v2811, %v2950
  %v2952 = vpop.f32.mrb[0].mxu0
  %v2953 = vpop.f32.mrb[0].mxu0
  %v2954 = vadd.f32 %v2811, %v2953
  %v2955 = vpop.f32.mrb[0].mxu0
  %2956 = vmatprep.mubr.bf16.mxu0 0
  %2957 = vmatmul.mubr.bf16.gmra.mrb[0].mxu0 %v2783
  %v2958 = vpop.f32.mrb[0].mxu0
  %v2959 = vadd.f32 %v2811, %v2958
  %v2960 = vpop.f32.mrb[0].mxu0
  %v2961 = vpop.f32.mrb[0].mxu0
  %v2962 = vadd.f32 %v2811, %v2961
  %v2963 = vpop.f32.mrb[0].mxu0
  %2964 = vmatprep.mubr.bf16.mxu0 0
  %2965 = vmatmul.mubr.bf16.gmra.mrb[0].mxu0 %v2784
  %v2966 = vpop.f32.mrb[0].mxu0
  %v2967 = vadd.f32 %v2811, %v2966
  %v2968 = vpop.f32.mrb[0].mxu0
  %v2969 = vpop.f32.mrb[0].mxu0
  %v2970 = vadd.f32 %v2811, %v2969
  %v2971 = vpop.f32.mrb[0].mxu0
  %2972 = vmatprep.mubr.bf16.mxu0 0
  %2973 = vmatmul.mubr.bf16.gmra.mrb[0].mxu0 %v2785
  %v2974 = vpop.f32.mrb[0].mxu0
  %v2975 = vadd.f32 %v2811, %v2974
  %v2976 = vpop.f32.mrb[0].mxu0
  %v2977 = vpop.f32.mrb[0].mxu0
  %v2978 = vadd.f32 %v2811, %v2977
  %v2979 = vpop.f32.mrb[0].mxu0
  %2980 = vmatprep.mubr.bf16.mxu0 0
  %2981 = vmatmul.mubr.bf16.gmra.mrb[0].mxu0 %v2786
  %v2982 = vpop.f32.mrb[0].mxu0
  %v2983 = vadd.f32 %v2811, %v2982
  %v2984 = vpop.f32.mrb[0].mxu0
  %v2985 = vpop.f32.mrb[0].mxu0
  %v2986 = vadd.f32 %v2811, %v2985
  %v2987 = vpop.f32.mrb[0].mxu0
  %2988 = vmatprep.mubr.bf16.mxu0 0
  %2989 = vmatmul.mubr.bf16.gmra.mrb[0].mxu0 %v2787
  %v2990 = vpop.f32.mrb[0].mxu0
  %v2991 = vadd.f32 %v2811, %v2990
  %v2992 = vpop.f32.mrb[0].mxu0
  %v2993 = vpop.f32.mrb[0].mxu0
  %v2994 = vadd.f32 %v2811, %v2993
  %v2995 = vpop.f32.mrb[0].mxu0
  %2996 = vmatprep.mubr.bf16.mxu0 0
  %2997 = vmatmul.mubr.bf16.gmra.mrb[0].mxu0 %v2788
  %v2998 = vpop.f32.mrb[0].mxu0
  %v2999 = vadd.f32 %v2811, %v2998
  %v3000 = vpop.f32.mrb[0].mxu0
  %v3001 = vpop.f32.mrb[0].mxu0
  %v3002 = vadd.f32 %v2811, %v3001
  %v3003 = vpop.f32.mrb[0].mxu0
  %3004 = vmatprep.mubr.bf16.mxu0 0
  %3005 = vmatmul.mubr.bf16.gmra.mrb[0].mxu0 %v2789
  %v3006 = vpop.f32.mrb[0].mxu0
  %v3007 = vadd.f32 %v2811, %v3006
  %v3008 = vpop.f32.mrb[0].mxu0
  %v3009 = vpop.f32.mrb[0].mxu0
  %v3010 = vadd.f32 %v2811, %v3009
  %v3011 = vpop.f32.mrb[0].mxu0
  %3012 = vmatprep.mubr.bf16.mxu0 0
  %3013 = vmatmul.mubr.bf16.gmra.mrb[0].mxu0 %v2790
  %v3014 = vpop.f32.mrb[0].mxu0
  %v3015 = vadd.f32 %v2811, %v3014
  %v3016 = vpop.f32.mrb[0].mxu0
  %v3017 = vpop.f32.mrb[0].mxu0
  %v3018 = vadd.f32 %v2811, %v3017
  %v3019 = vpop.f32.mrb[0].mxu0
  %3020 = vdwg.mxu0
  %v3021 = vmax.f32 %v2895, 0.0
  %v3022 = vmax.f32 %v2898, 0.0
  %v3023 = vmax.f32 %v2903, 0.0
  %v3024 = vmax.f32 %v2906, 0.0
  %v3025 = vmax.f32 %v2911, 0.0
  %v3026 = vmax.f32 %v2914, 0.0
  %v3027 = vmax.f32 %v2919, 0.0
  %v3028 = vmax.f32 %v2922, 0.0
  %v3029 = vmax.f32 %v2927, 0.0
  %v3030 = vmax.f32 %v2930, 0.0
  %v3031 = vmax.f32 %v2935, 0.0
  %v3032 = vmax.f32 %v2938, 0.0
  %v3033 = vmax.f32 %v2943, 0.0
  %v3034 = vmax.f32 %v2946, 0.0
  %v3035 = vmax.f32 %v2951, 0.0
  %v3036 = vmax.f32 %v2954, 0.0
  %v3037 = vmax.f32 %v2959, 0.0
  %v3038 = vmax.f32 %v2962, 0.0
  %v3039 = vmax.f32 %v2967, 0.0
  %v3040 = vmax.f32 %v2970, 0.0
  %v3041 = vmax.f32 %v2975, 0.0
  %v3042 = vmax.f32 %v2978, 0.0
  %v3043 = vmax.f32 %v2983, 0.0
  %v3044 = vmax.f32 %v2986, 0.0
  %v3045 = vmax.f32 %v2991, 0.0
  %v3046 = vmax.f32 %v2994, 0.0
  %v3047 = vmax.f32 %v2999, 0.0
  %v3048 = vmax.f32 %v3002, 0.0
  %v3049 = vmax.f32 %v3007, 0.0
  %v3050 = vmax.f32 %v3010, 0.0
  %v3051 = vmax.f32 %v3015, 0.0
  %v3052 = vmax.f32 %v3018, 0.0
  %v3053 = vpack.c.bf16 %v3022, %v3021
  %v3054 = vpack.c.bf16 %v3024, %v3023
  %v3055 = vpack.c.bf16 %v3026, %v3025
  %v3056 = vpack.c.bf16 %v3028, %v3027
  %v3057 = vpack.c.bf16 %v3030, %v3029
  %v3058 = vpack.c.bf16 %v3032, %v3031
  %v3059 = vpack.c.bf16 %v3034, %v3033
  %v3060 = vpack.c.bf16 %v3036, %v3035
  %v3061 = vpack.c.bf16 %v3038, %v3037
  %v3062 = vpack.c.bf16 %v3040, %v3039
  %v3063 = vpack.c.bf16 %v3042, %v3041
  %v3064 = vpack.c.bf16 %v3044, %v3043
  %v3065 = vpack.c.bf16 %v3046, %v3045
  %v3066 = vpack.c.bf16 %v3048, %v3047
  %v3067 = vpack.c.bf16 %v3050, %v3049
  %v3068 = vpack.c.bf16 %v3052, %v3051
  %v3069 = vld [vmem:[%s1 + $0x100] sm:$0xf]
  %v3070 = vld [vmem:[%s1 + $0x104] sm:$0xf]
  %v3071 = vld [vmem:[%s1 + $0x108] sm:$0xf]
  %v3072 = vld [vmem:[%s1 + $0x10c] sm:$0xf]
  %v3073 = vld [vmem:[%s1 + $0x110] sm:$0xf]
  %v3074 = vld [vmem:[%s1 + $0x114] sm:$0xf]
  %v3075 = vld [vmem:[%s1 + $0x118] sm:$0xf]
  %v3076 = vld [vmem:[%s1 + $0x11c] sm:$0xf]
  %v3077 = vld [vmem:[%s1 + $0x120] sm:$0xf]
  %v3078 = vld [vmem:[%s1 + $0x124] sm:$0xf]
  %v3079 = vld [vmem:[%s1 + $0x128] sm:$0xf]
  %v3080 = vld [vmem:[%s1 + $0x12c] sm:$0xf]
  %v3081 = vld [vmem:[%s1 + $0x130] sm:$0xf]
  %v3082 = vld [vmem:[%s1 + $0x134] sm:$0xf]
  %v3083 = vld [vmem:[%s1 + $0x138] sm:$0xf]
  %v3084 = vld [vmem:[%s1 + $0x13c] sm:$0xf]
  %v3085 = vld [vmem:[%s2 + $0x4] sm:$0x1]
  %v3086 = vlaneseq
  %v3087 = vshrl.u32 %v3086, 7
  %v3088 = vsub.s32 0, %v3087
  %v3089 = vrot.slane %v3085, %v3088
  %v3106 = vunpack.c.l.b16 %v3069
  %v3107 = vunpack.c.l.b16 %v3070
  %v3108 = vunpack.c.l.b16 %v3071
  %v3109 = vunpack.c.l.b16 %v3072
  %v3110 = vunpack.c.l.b16 %v3073
  %v3111 = vunpack.c.l.b16 %v3074
  %v3112 = vunpack.c.l.b16 %v3075
  %v3113 = vunpack.c.l.b16 %v3076
  %v3114 = vunpack.c.l.b16 %v3077
  %v3115 = vunpack.c.l.b16 %v3078
  %v3116 = vunpack.c.l.b16 %v3079
  %v3117 = vunpack.c.l.b16 %v3080
  %v3118 = vunpack.c.l.b16 %v3081
  %v3119 = vunpack.c.l.b16 %v3082
  %v3120 = vunpack.c.l.b16 %v3083
  %v3121 = vunpack.c.l.b16 %v3084
  %v3122 = vpack.c.b16 %v3107, %v3106
  %v3123 = vpack.c.b16 %v3109, %v3108
  %v3124 = vpack.c.b16 %v3111, %v3110
  %v3125 = vpack.c.b16 %v3113, %v3112
  %v3126 = vpack.c.b16 %v3115, %v3114
  %v3127 = vpack.c.b16 %v3117, %v3116
  %v3128 = vpack.c.b16 %v3119, %v3118
  %v3129 = vpack.c.b16 %v3121, %v3120
  %3138 = vmatprep.subr.bf16.mxu0 0
  %3139 = vmatpush1.bf16.msra.mxu0 %v3122
  %3140 = vmatprep.subr.bf16.mxu0 0
  %3141 = vmatpush1.bf16.msra.mxu0 %v3123
  %3142 = vmatprep.subr.bf16.mxu0 0
  %3143 = vmatpush1.bf16.msra.mxu0 %v3124
  %3144 = vmatprep.subr.bf16.mxu0 0
  %3145 = vmatpush1.bf16.msra.mxu0 %v3125
  %3146 = vmatprep.subr.bf16.mxu0 0
  %3147 = vmatpush1.bf16.msra.mxu0 %v3126
  %3148 = vmatprep.subr.bf16.mxu0 0
  %3149 = vmatpush1.bf16.msra.mxu0 %v3127
  %3150 = vmatprep.subr.bf16.mxu0 0
  %3151 = vmatpush1.bf16.msra.mxu0 %v3128
  %3152 = vmatprep.subr.bf16.mxu0 0
  %3153 = vmatpush1.bf16.msra.mxu0 %v3129
  %3154 = vmatprep.subr.bf16.mxu0 0
  %3155 = vmatpush1.bf16.msra.mxu0 0
  %3156 = vmatprep.subr.bf16.mxu0 0
  %3157 = vmatpush1.bf16.msra.mxu0 0
  %3158 = vmatprep.subr.bf16.mxu0 0
  %3159 = vmatpush1.bf16.msra.mxu0 0
  %3160 = vmatprep.subr.bf16.mxu0 0
  %3161 = vmatpush1.bf16.msra.mxu0 0
  %3162 = vmatprep.subr.bf16.mxu0 0
  %3163 = vmatpush1.bf16.msra.mxu0 0
  %3164 = vmatprep.subr.bf16.mxu0 0
  %3165 = vmatpush1.bf16.msra.mxu0 0
  %3166 = vmatprep.subr.bf16.mxu0 0
  %3167 = vmatpush1.bf16.msra.mxu0 0
  %3168 = vmatprep.subr.bf16.mxu0 0
  %3169 = vmatpush1.bf16.msra.mxu0 0
  %3170 = vmatprep.mubr.bf16.mxu0 0
  %3171 = vmatmul.mubr.bf16.gmra.mrb[0].mxu0 %v3053
  %v3172 = vpop.f32.mrb[0].mxu0
  %v3173 = vadd.f32 %v3089, %v3172
  %v3174 = vpop.f32.mrb[0].mxu0
  %v3175 = vpop.f32.mrb[0].mxu0
  %v3176 = vadd.f32 %v3089, %v3175
  %v3177 = vpop.f32.mrb[0].mxu0
  %3178 = vmatprep.mubr.bf16.mxu0 0
  %3179 = vmatmul.mubr.bf16.gmra.mrb[0].mxu0 %v3054
  %v3180 = vpop.f32.mrb[0].mxu0
  %v3181 = vadd.f32 %v3089, %v3180
  %v3182 = vpop.f32.mrb[0].mxu0
  %v3183 = vpop.f32.mrb[0].mxu0
  %v3184 = vadd.f32 %v3089, %v3183
  %v3185 = vpop.f32.mrb[0].mxu0
  %3186 = vmatprep.mubr.bf16.mxu0 0
  %3187 = vmatmul.mubr.bf16.gmra.mrb[0].mxu0 %v3055
  %v3188 = vpop.f32.mrb[0].mxu0
  %v3189 = vadd.f32 %v3089, %v3188
  %v3190 = vpop.f32.mrb[0].mxu0
  %v3191 = vpop.f32.mrb[0].mxu0
  %v3192 = vadd.f32 %v3089, %v3191
  %v3193 = vpop.f32.mrb[0].mxu0
  %3194 = vmatprep.mubr.bf16.mxu0 0
  %3195 = vmatmul.mubr.bf16.gmra.mrb[0].mxu0 %v3056
  %v3196 = vpop.f32.mrb[0].mxu0
  %v3197 = vadd.f32 %v3089, %v3196
  %v3198 = vpop.f32.mrb[0].mxu0
  %v3199 = vpop.f32.mrb[0].mxu0
  %v3200 = vadd.f32 %v3089, %v3199
  %v3201 = vpop.f32.mrb[0].mxu0
  %3202 = vmatprep.mubr.bf16.mxu0 0
  %3203 = vmatmul.mubr.bf16.gmra.mrb[0].mxu0 %v3057
  %v3204 = vpop.f32.mrb[0].mxu0
  %v3205 = vadd.f32 %v3089, %v3204
  %v3206 = vpop.f32.mrb[0].mxu0
  %v3207 = vpop.f32.mrb[0].mxu0
  %v3208 = vadd.f32 %v3089, %v3207
  %v3209 = vpop.f32.mrb[0].mxu0
  %3210 = vmatprep.mubr.bf16.mxu0 0
  %3211 = vmatmul.mubr.bf16.gmra.mrb[0].mxu0 %v3058
  %v3212 = vpop.f32.mrb[0].mxu0
  %v3213 = vadd.f32 %v3089, %v3212
  %v3214 = vpop.f32.mrb[0].mxu0
  %v3215 = vpop.f32.mrb[0].mxu0
  %v3216 = vadd.f32 %v3089, %v3215
  %v3217 = vpop.f32.mrb[0].mxu0
  %3218 = vmatprep.mubr.bf16.mxu0 0
  %3219 = vmatmul.mubr.bf16.gmra.mrb[0].mxu0 %v3059
  %v3220 = vpop.f32.mrb[0].mxu0
  %v3221 = vadd.f32 %v3089, %v3220
  %v3222 = vpop.f32.mrb[0].mxu0
  %v3223 = vpop.f32.mrb[0].mxu0
  %v3224 = vadd.f32 %v3089, %v3223
  %v3225 = vpop.f32.mrb[0].mxu0
  %3226 = vmatprep.mubr.bf16.mxu0 0
  %3227 = vmatmul.mubr.bf16.gmra.mrb[0].mxu0 %v3060
  %v3228 = vpop.f32.mrb[0].mxu0
  %v3229 = vadd.f32 %v3089, %v3228
  %v3230 = vpop.f32.mrb[0].mxu0
  %v3231 = vpop.f32.mrb[0].mxu0
  %v3232 = vadd.f32 %v3089, %v3231
  %v3233 = vpop.f32.mrb[0].mxu0
  %3234 = vmatprep.mubr.bf16.mxu0 0
  %3235 = vmatmul.mubr.bf16.gmra.mrb[0].mxu0 %v3061
  %v3236 = vpop.f32.mrb[0].mxu0
  %v3237 = vadd.f32 %v3089, %v3236
  %v3238 = vpop.f32.mrb[0].mxu0
  %v3239 = vpop.f32.mrb[0].mxu0
  %v3240 = vadd.f32 %v3089, %v3239
  %v3241 = vpop.f32.mrb[0].mxu0
  %3242 = vmatprep.mubr.bf16.mxu0 0
  %3243 = vmatmul.mubr.bf16.gmra.mrb[0].mxu0 %v3062
  %v3244 = vpop.f32.mrb[0].mxu0
  %v3245 = vadd.f32 %v3089, %v3244
  %v3246 = vpop.f32.mrb[0].mxu0
  %v3247 = vpop.f32.mrb[0].mxu0
  %v3248 = vadd.f32 %v3089, %v3247
  %v3249 = vpop.f32.mrb[0].mxu0
  %3250 = vmatprep.mubr.bf16.mxu0 0
  %3251 = vmatmul.mubr.bf16.gmra.mrb[0].mxu0 %v3063
  %v3252 = vpop.f32.mrb[0].mxu0
  %v3253 = vadd.f32 %v3089, %v3252
  %v3254 = vpop.f32.mrb[0].mxu0
  %v3255 = vpop.f32.mrb[0].mxu0
  %v3256 = vadd.f32 %v3089, %v3255
  %v3257 = vpop.f32.mrb[0].mxu0
  %3258 = vmatprep.mubr.bf16.mxu0 0
  %3259 = vmatmul.mubr.bf16.gmra.mrb[0].mxu0 %v3064
  %v3260 = vpop.f32.mrb[0].mxu0
  %v3261 = vadd.f32 %v3089, %v3260
  %v3262 = vpop.f32.mrb[0].mxu0
  %v3263 = vpop.f32.mrb[0].mxu0
  %v3264 = vadd.f32 %v3089, %v3263
  %v3265 = vpop.f32.mrb[0].mxu0
  %3266 = vmatprep.mubr.bf16.mxu0 0
  %3267 = vmatmul.mubr.bf16.gmra.mrb[0].mxu0 %v3065
  %v3268 = vpop.f32.mrb[0].mxu0
  %v3269 = vadd.f32 %v3089, %v3268
  %v3270 = vpop.f32.mrb[0].mxu0
  %v3271 = vpop.f32.mrb[0].mxu0
  %v3272 = vadd.f32 %v3089, %v3271
  %v3273 = vpop.f32.mrb[0].mxu0
  %3274 = vmatprep.mubr.bf16.mxu0 0
  %3275 = vmatmul.mubr.bf16.gmra.mrb[0].mxu0 %v3066
  %v3276 = vpop.f32.mrb[0].mxu0
  %v3277 = vadd.f32 %v3089, %v3276
  %v3278 = vpop.f32.mrb[0].mxu0
  %v3279 = vpop.f32.mrb[0].mxu0
  %v3280 = vadd.f32 %v3089, %v3279
  %v3281 = vpop.f32.mrb[0].mxu0
  %3282 = vmatprep.mubr.bf16.mxu0 0
  %3283 = vmatmul.mubr.bf16.gmra.mrb[0].mxu0 %v3067
  %v3284 = vpop.f32.mrb[0].mxu0
  %v3285 = vadd.f32 %v3089, %v3284
  %v3286 = vpop.f32.mrb[0].mxu0
  %v3287 = vpop.f32.mrb[0].mxu0
  %v3288 = vadd.f32 %v3089, %v3287
  %v3289 = vpop.f32.mrb[0].mxu0
  %3290 = vmatprep.mubr.bf16.mxu0 0
  %3291 = vmatmul.mubr.bf16.gmra.mrb[0].mxu0 %v3068
  %v3292 = vpop.f32.mrb[0].mxu0
  %v3293 = vadd.f32 %v3089, %v3292
  %v3294 = vpop.f32.mrb[0].mxu0
  %v3295 = vpop.f32.mrb[0].mxu0
  %v3296 = vadd.f32 %v3089, %v3295
  %v3297 = vpop.f32.mrb[0].mxu0
  %3298 = vdwg.mxu0
  %v3299 = vmax.f32 %v3173, 0.0
  %v3300 = vmax.f32 %v3176, 0.0
  %v3301 = vmax.f32 %v3181, 0.0
  %v3302 = vmax.f32 %v3184, 0.0
  %v3303 = vmax.f32 %v3189, 0.0
  %v3304 = vmax.f32 %v3192, 0.0
  %v3305 = vmax.f32 %v3197, 0.0
  %v3306 = vmax.f32 %v3200, 0.0
  %v3307 = vmax.f32 %v3205, 0.0
  %v3308 = vmax.f32 %v3208, 0.0
  %v3309 = vmax.f32 %v3213, 0.0
  %v3310 = vmax.f32 %v3216, 0.0
  %v3311 = vmax.f32 %v3221, 0.0
  %v3312 = vmax.f32 %v3224, 0.0
  %v3313 = vmax.f32 %v3229, 0.0
  %v3314 = vmax.f32 %v3232, 0.0
  %v3315 = vmax.f32 %v3237, 0.0
  %v3316 = vmax.f32 %v3240, 0.0
  %v3317 = vmax.f32 %v3245, 0.0
  %v3318 = vmax.f32 %v3248, 0.0
  %v3319 = vmax.f32 %v3253, 0.0
  %v3320 = vmax.f32 %v3256, 0.0
  %v3321 = vmax.f32 %v3261, 0.0
  %v3322 = vmax.f32 %v3264, 0.0
  %v3323 = vmax.f32 %v3269, 0.0
  %v3324 = vmax.f32 %v3272, 0.0
  %v3325 = vmax.f32 %v3277, 0.0
  %v3326 = vmax.f32 %v3280, 0.0
  %v3327 = vmax.f32 %v3285, 0.0
  %v3328 = vmax.f32 %v3288, 0.0
  %v3329 = vmax.f32 %v3293, 0.0
  %v3330 = vmax.f32 %v3296, 0.0
  %v3331 = vpack.c.bf16 %v3300, %v3299
  %v3332 = vpack.c.bf16 %v3302, %v3301
  %v3333 = vpack.c.bf16 %v3304, %v3303
  %v3334 = vpack.c.bf16 %v3306, %v3305
  %v3335 = vpack.c.bf16 %v3308, %v3307
  %v3336 = vpack.c.bf16 %v3310, %v3309
  %v3337 = vpack.c.bf16 %v3312, %v3311
  %v3338 = vpack.c.bf16 %v3314, %v3313
  %v3339 = vpack.c.bf16 %v3316, %v3315
  %v3340 = vpack.c.bf16 %v3318, %v3317
  %v3341 = vpack.c.bf16 %v3320, %v3319
  %v3342 = vpack.c.bf16 %v3322, %v3321
  %v3343 = vpack.c.bf16 %v3324, %v3323
  %v3344 = vpack.c.bf16 %v3326, %v3325
  %v3345 = vpack.c.bf16 %v3328, %v3327
  %v3346 = vpack.c.bf16 %v3330, %v3329
  %v3347 = vld [vmem:[%s1 + $0x140] sm:$0xf]
  %v3348 = vld [vmem:[%s1 + $0x144] sm:$0xf]
  %v3349 = vld [vmem:[%s1 + $0x148] sm:$0xf]
  %v3350 = vld [vmem:[%s1 + $0x14c] sm:$0xf]
  %v3351 = vld [vmem:[%s1 + $0x150] sm:$0xf]
  %v3352 = vld [vmem:[%s1 + $0x154] sm:$0xf]
  %v3353 = vld [vmem:[%s1 + $0x158] sm:$0xf]
  %v3354 = vld [vmem:[%s1 + $0x15c] sm:$0xf]
  %v3355 = vld [vmem:[%s1 + $0x160] sm:$0xf]
  %v3356 = vld [vmem:[%s1 + $0x164] sm:$0xf]
  %v3357 = vld [vmem:[%s1 + $0x168] sm:$0xf]
  %v3358 = vld [vmem:[%s1 + $0x16c] sm:$0xf]
  %v3359 = vld [vmem:[%s1 + $0x170] sm:$0xf]
  %v3360 = vld [vmem:[%s1 + $0x174] sm:$0xf]
  %v3361 = vld [vmem:[%s1 + $0x178] sm:$0xf]
  %v3362 = vld [vmem:[%s1 + $0x17c] sm:$0xf]
  %v3363 = vld [vmem:[%s2 + $0x5] sm:$0x1]
  %v3364 = vlaneseq
  %v3365 = vshrl.u32 %v3364, 7
  %v3366 = vsub.s32 0, %v3365
  %v3367 = vrot.slane %v3363, %v3366
  %v3384 = vunpack.c.l.b16 %v3347
  %v3385 = vunpack.c.l.b16 %v3348
  %v3386 = vunpack.c.l.b16 %v3349
  %v3387 = vunpack.c.l.b16 %v3350
  %v3388 = vunpack.c.l.b16 %v3351
  %v3389 = vunpack.c.l.b16 %v3352
  %v3390 = vunpack.c.l.b16 %v3353
  %v3391 = vunpack.c.l.b16 %v3354
  %v3392 = vunpack.c.l.b16 %v3355
  %v3393 = vunpack.c.l.b16 %v3356
  %v3394 = vunpack.c.l.b16 %v3357
  %v3395 = vunpack.c.l.b16 %v3358
  %v3396 = vunpack.c.l.b16 %v3359
  %v3397 = vunpack.c.l.b16 %v3360
  %v3398 = vunpack.c.l.b16 %v3361
  %v3399 = vunpack.c.l.b16 %v3362
  %v3400 = vpack.c.b16 %v3385, %v3384
  %v3401 = vpack.c.b16 %v3387, %v3386
  %v3402 = vpack.c.b16 %v3389, %v3388
  %v3403 = vpack.c.b16 %v3391, %v3390
  %v3404 = vpack.c.b16 %v3393, %v3392
  %v3405 = vpack.c.b16 %v3395, %v3394
  %v3406 = vpack.c.b16 %v3397, %v3396
  %v3407 = vpack.c.b16 %v3399, %v3398
  %3416 = vmatprep.subr.bf16.mxu0 0
  %3417 = vmatpush1.bf16.msra.mxu0 %v3400
  %3418 = vmatprep.subr.bf16.mxu0 0
  %3419 = vmatpush1.bf16.msra.mxu0 %v3401
  %3420 = vmatprep.subr.bf16.mxu0 0
  %3421 = vmatpush1.bf16.msra.mxu0 %v3402
  %3422 = vmatprep.subr.bf16.mxu0 0
  %3423 = vmatpush1.bf16.msra.mxu0 %v3403
  %3424 = vmatprep.subr.bf16.mxu0 0
  %3425 = vmatpush1.bf16.msra.mxu0 %v3404
  %3426 = vmatprep.subr.bf16.mxu0 0
  %3427 = vmatpush1.bf16.msra.mxu0 %v3405
  %3428 = vmatprep.subr.bf16.mxu0 0
  %3429 = vmatpush1.bf16.msra.mxu0 %v3406
  %3430 = vmatprep.subr.bf16.mxu0 0
  %3431 = vmatpush1.bf16.msra.mxu0 %v3407
  %3432 = vmatprep.subr.bf16.mxu0 0
  %3433 = vmatpush1.bf16.msra.mxu0 0
  %3434 = vmatprep.subr.bf16.mxu0 0
  %3435 = vmatpush1.bf16.msra.mxu0 0
  %3436 = vmatprep.subr.bf16.mxu0 0
  %3437 = vmatpush1.bf16.msra.mxu0 0
  %3438 = vmatprep.subr.bf16.mxu0 0
  %3439 = vmatpush1.bf16.msra.mxu0 0
  %3440 = vmatprep.subr.bf16.mxu0 0
  %3441 = vmatpush1.bf16.msra.mxu0 0
  %3442 = vmatprep.subr.bf16.mxu0 0
  %3443 = vmatpush1.bf16.msra.mxu0 0
  %3444 = vmatprep.subr.bf16.mxu0 0
  %3445 = vmatpush1.bf16.msra.mxu0 0
  %3446 = vmatprep.subr.bf16.mxu0 0
  %3447 = vmatpush1.bf16.msra.mxu0 0
  %3448 = vmatprep.mubr.bf16.mxu0 0
  %3449 = vmatmul.mubr.bf16.gmra.mrb[0].mxu0 %v3331
  %v3450 = vpop.f32.mrb[0].mxu0
  %v3451 = vadd.f32 %v3367, %v3450
  %v3452 = vpop.f32.mrb[0].mxu0
  %v3453 = vpop.f32.mrb[0].mxu0
  %v3454 = vadd.f32 %v3367, %v3453
  %v3455 = vpop.f32.mrb[0].mxu0
  %3456 = vmatprep.mubr.bf16.mxu0 0
  %3457 = vmatmul.mubr.bf16.gmra.mrb[0].mxu0 %v3332
  %v3458 = vpop.f32.mrb[0].mxu0
  %v3459 = vadd.f32 %v3367, %v3458
  %v3460 = vpop.f32.mrb[0].mxu0
  %v3461 = vpop.f32.mrb[0].mxu0
  %v3462 = vadd.f32 %v3367, %v3461
  %v3463 = vpop.f32.mrb[0].mxu0
  %3464 = vmatprep.mubr.bf16.mxu0 0
  %3465 = vmatmul.mubr.bf16.gmra.mrb[0].mxu0 %v3333
  %v3466 = vpop.f32.mrb[0].mxu0
  %v3467 = vadd.f32 %v3367, %v3466
  %v3468 = vpop.f32.mrb[0].mxu0
  %v3469 = vpop.f32.mrb[0].mxu0
  %v3470 = vadd.f32 %v3367, %v3469
  %v3471 = vpop.f32.mrb[0].mxu0
  %3472 = vmatprep.mubr.bf16.mxu0 0
  %3473 = vmatmul.mubr.bf16.gmra.mrb[0].mxu0 %v3334
  %v3474 = vpop.f32.mrb[0].mxu0
  %v3475 = vadd.f32 %v3367, %v3474
  %v3476 = vpop.f32.mrb[0].mxu0
  %v3477 = vpop.f32.mrb[0].mxu0
  %v3478 = vadd.f32 %v3367, %v3477
  %v3479 = vpop.f32.mrb[0].mxu0
  %3480 = vmatprep.mubr.bf16.mxu0 0
  %3481 = vmatmul.mubr.bf16.gmra.mrb[0].mxu0 %v3335
  %v3482 = vpop.f32.mrb[0].mxu0
  %v3483 = vadd.f32 %v3367, %v3482
  %v3484 = vpop.f32.mrb[0].mxu0
  %v3485 = vpop.f32.mrb[0].mxu0
  %v3486 = vadd.f32 %v3367, %v3485
  %v3487 = vpop.f32.mrb[0].mxu0
  %3488 = vmatprep.mubr.bf16.mxu0 0
  %3489 = vmatmul.mubr.bf16.gmra.mrb[0].mxu0 %v3336
  %v3490 = vpop.f32.mrb[0].mxu0
  %v3491 = vadd.f32 %v3367, %v3490
  %v3492 = vpop.f32.mrb[0].mxu0
  %v3493 = vpop.f32.mrb[0].mxu0
  %v3494 = vadd.f32 %v3367, %v3493
  %v3495 = vpop.f32.mrb[0].mxu0
  %3496 = vmatprep.mubr.bf16.mxu0 0
  %3497 = vmatmul.mubr.bf16.gmra.mrb[0].mxu0 %v3337
  %v3498 = vpop.f32.mrb[0].mxu0
  %v3499 = vadd.f32 %v3367, %v3498
  %v3500 = vpop.f32.mrb[0].mxu0
  %v3501 = vpop.f32.mrb[0].mxu0
  %v3502 = vadd.f32 %v3367, %v3501
  %v3503 = vpop.f32.mrb[0].mxu0
  %3504 = vmatprep.mubr.bf16.mxu0 0
  %3505 = vmatmul.mubr.bf16.gmra.mrb[0].mxu0 %v3338
  %v3506 = vpop.f32.mrb[0].mxu0
  %v3507 = vadd.f32 %v3367, %v3506
  %v3508 = vpop.f32.mrb[0].mxu0
  %v3509 = vpop.f32.mrb[0].mxu0
  %v3510 = vadd.f32 %v3367, %v3509
  %v3511 = vpop.f32.mrb[0].mxu0
  %3512 = vmatprep.mubr.bf16.mxu0 0
  %3513 = vmatmul.mubr.bf16.gmra.mrb[0].mxu0 %v3339
  %v3514 = vpop.f32.mrb[0].mxu0
  %v3515 = vadd.f32 %v3367, %v3514
  %v3516 = vpop.f32.mrb[0].mxu0
  %v3517 = vpop.f32.mrb[0].mxu0
  %v3518 = vadd.f32 %v3367, %v3517
  %v3519 = vpop.f32.mrb[0].mxu0
  %3520 = vmatprep.mubr.bf16.mxu0 0
  %3521 = vmatmul.mubr.bf16.gmra.mrb[0].mxu0 %v3340
  %v3522 = vpop.f32.mrb[0].mxu0
  %v3523 = vadd.f32 %v3367, %v3522
  %v3524 = vpop.f32.mrb[0].mxu0
  %v3525 = vpop.f32.mrb[0].mxu0
  %v3526 = vadd.f32 %v3367, %v3525
  %v3527 = vpop.f32.mrb[0].mxu0
  %3528 = vmatprep.mubr.bf16.mxu0 0
  %3529 = vmatmul.mubr.bf16.gmra.mrb[0].mxu0 %v3341
  %v3530 = vpop.f32.mrb[0].mxu0
  %v3531 = vadd.f32 %v3367, %v3530
  %v3532 = vpop.f32.mrb[0].mxu0
  %v3533 = vpop.f32.mrb[0].mxu0
  %v3534 = vadd.f32 %v3367, %v3533
  %v3535 = vpop.f32.mrb[0].mxu0
  %3536 = vmatprep.mubr.bf16.mxu0 0
  %3537 = vmatmul.mubr.bf16.gmra.mrb[0].mxu0 %v3342
  %v3538 = vpop.f32.mrb[0].mxu0
  %v3539 = vadd.f32 %v3367, %v3538
  %v3540 = vpop.f32.mrb[0].mxu0
  %v3541 = vpop.f32.mrb[0].mxu0
  %v3542 = vadd.f32 %v3367, %v3541
  %v3543 = vpop.f32.mrb[0].mxu0
  %3544 = vmatprep.mubr.bf16.mxu0 0
  %3545 = vmatmul.mubr.bf16.gmra.mrb[0].mxu0 %v3343
  %v3546 = vpop.f32.mrb[0].mxu0
  %v3547 = vadd.f32 %v3367, %v3546
  %v3548 = vpop.f32.mrb[0].mxu0
  %v3549 = vpop.f32.mrb[0].mxu0
  %v3550 = vadd.f32 %v3367, %v3549
  %v3551 = vpop.f32.mrb[0].mxu0
  %3552 = vmatprep.mubr.bf16.mxu0 0
  %3553 = vmatmul.mubr.bf16.gmra.mrb[0].mxu0 %v3344
  %v3554 = vpop.f32.mrb[0].mxu0
  %v3555 = vadd.f32 %v3367, %v3554
  %v3556 = vpop.f32.mrb[0].mxu0
  %v3557 = vpop.f32.mrb[0].mxu0
  %v3558 = vadd.f32 %v3367, %v3557
  %v3559 = vpop.f32.mrb[0].mxu0
  %3560 = vmatprep.mubr.bf16.mxu0 0
  %3561 = vmatmul.mubr.bf16.gmra.mrb[0].mxu0 %v3345
  %v3562 = vpop.f32.mrb[0].mxu0
  %v3563 = vadd.f32 %v3367, %v3562
  %v3564 = vpop.f32.mrb[0].mxu0
  %v3565 = vpop.f32.mrb[0].mxu0
  %v3566 = vadd.f32 %v3367, %v3565
  %v3567 = vpop.f32.mrb[0].mxu0
  %3568 = vmatprep.mubr.bf16.mxu0 0
  %3569 = vmatmul.mubr.bf16.gmra.mrb[0].mxu0 %v3346
  %v3570 = vpop.f32.mrb[0].mxu0
  %v3571 = vadd.f32 %v3367, %v3570
  %v3572 = vpop.f32.mrb[0].mxu0
  %v3573 = vpop.f32.mrb[0].mxu0
  %v3574 = vadd.f32 %v3367, %v3573
  %v3575 = vpop.f32.mrb[0].mxu0
  %3576 = vdwg.mxu0
  %v3577 = vxor.u32 %v3451, 2147483648
  %v3578 = vxor.u32 %v3454, 2147483648
  %v3579 = vxor.u32 %v3459, 2147483648
  %v3580 = vxor.u32 %v3462, 2147483648
  %v3581 = vxor.u32 %v3467, 2147483648
  %v3582 = vxor.u32 %v3470, 2147483648
  %v3583 = vxor.u32 %v3475, 2147483648
  %v3584 = vxor.u32 %v3478, 2147483648
  %v3585 = vxor.u32 %v3483, 2147483648
  %v3586 = vxor.u32 %v3486, 2147483648
  %v3587 = vxor.u32 %v3491, 2147483648
  %v3588 = vxor.u32 %v3494, 2147483648
  %v3589 = vxor.u32 %v3499, 2147483648
  %v3590 = vxor.u32 %v3502, 2147483648
  %v3591 = vxor.u32 %v3507, 2147483648
  %v3592 = vxor.u32 %v3510, 2147483648
  %v3593 = vxor.u32 %v3515, 2147483648
  %v3594 = vxor.u32 %v3518, 2147483648
  %v3595 = vxor.u32 %v3523, 2147483648
  %v3596 = vxor.u32 %v3526, 2147483648
  %v3597 = vxor.u32 %v3531, 2147483648
  %v3598 = vxor.u32 %v3534, 2147483648
  %v3599 = vxor.u32 %v3539, 2147483648
  %v3600 = vxor.u32 %v3542, 2147483648
  %v3601 = vxor.u32 %v3547, 2147483648
  %v3602 = vxor.u32 %v3550, 2147483648
  %v3603 = vxor.u32 %v3555, 2147483648
  %v3604 = vxor.u32 %v3558, 2147483648
  %v3605 = vxor.u32 %v3563, 2147483648
  %v3606 = vxor.u32 %v3566, 2147483648
  %v3607 = vxor.u32 %v3571, 2147483648
  %v3608 = vxor.u32 %v3574, 2147483648
  %v3609 = vmul.f32 %v3577, 1.442695
  %v3610 = vpow.pop %v3609
  %v3611 = vmul.f32 %v3578, 1.442695
  %v3612 = vpow.pop %v3611
  %v3613 = vmul.f32 %v3579, 1.442695
  %v3614 = vpow.pop %v3613
  %v3615 = vmul.f32 %v3580, 1.442695
  %v3616 = vpow.pop %v3615
  %v3617 = vmul.f32 %v3581, 1.442695
  %v3618 = vpow.pop %v3617
  %v3619 = vmul.f32 %v3582, 1.442695
  %v3620 = vpow.pop %v3619
  %v3621 = vmul.f32 %v3583, 1.442695
  %v3622 = vpow.pop %v3621
  %v3623 = vmul.f32 %v3584, 1.442695
  %v3624 = vpow.pop %v3623
  %v3625 = vmul.f32 %v3585, 1.442695
  %v3626 = vpow.pop %v3625
  %v3627 = vmul.f32 %v3586, 1.442695
  %v3628 = vpow.pop %v3627
  %v3629 = vmul.f32 %v3587, 1.442695
  %v3630 = vpow.pop %v3629
  %v3631 = vmul.f32 %v3588, 1.442695
  %v3632 = vpow.pop %v3631
  %v3633 = vmul.f32 %v3589, 1.442695
  %v3634 = vpow.pop %v3633
  %v3635 = vmul.f32 %v3590, 1.442695
  %v3636 = vpow.pop %v3635
  %v3637 = vmul.f32 %v3591, 1.442695
  %v3638 = vpow.pop %v3637
  %v3639 = vmul.f32 %v3592, 1.442695
  %v3640 = vpow.pop %v3639
  %v3641 = vmul.f32 %v3593, 1.442695
  %v3642 = vpow.pop %v3641
  %v3643 = vmul.f32 %v3594, 1.442695
  %v3644 = vpow.pop %v3643
  %v3645 = vmul.f32 %v3595, 1.442695
  %v3646 = vpow.pop %v3645
  %v3647 = vmul.f32 %v3596, 1.442695
  %v3648 = vpow.pop %v3647
  %v3649 = vmul.f32 %v3597, 1.442695
  %v3650 = vpow.pop %v3649
  %v3651 = vmul.f32 %v3598, 1.442695
  %v3652 = vpow.pop %v3651
  %v3653 = vmul.f32 %v3599, 1.442695
  %v3654 = vpow.pop %v3653
  %v3655 = vmul.f32 %v3600, 1.442695
  %v3656 = vpow.pop %v3655
  %v3657 = vmul.f32 %v3601, 1.442695
  %v3658 = vpow.pop %v3657
  %v3659 = vmul.f32 %v3602, 1.442695
  %v3660 = vpow.pop %v3659
  %v3661 = vmul.f32 %v3603, 1.442695
  %v3662 = vpow.pop %v3661
  %v3663 = vmul.f32 %v3604, 1.442695
  %v3664 = vpow.pop %v3663
  %v3665 = vmul.f32 %v3605, 1.442695
  %v3666 = vpow.pop %v3665
  %v3667 = vmul.f32 %v3606, 1.442695
  %v3668 = vpow.pop %v3667
  %v3669 = vmul.f32 %v3607, 1.442695
  %v3670 = vpow.pop %v3669
  %v3671 = vmul.f32 %v3608, 1.442695
  %v3672 = vpow.pop %v3671
  %v3673 = vadd.f32 %v3610, 1.0
  %v3674 = vadd.f32 %v3612, 1.0
  %v3675 = vadd.f32 %v3614, 1.0
  %v3676 = vadd.f32 %v3616, 1.0
  %v3677 = vadd.f32 %v3618, 1.0
  %v3678 = vadd.f32 %v3620, 1.0
  %v3679 = vadd.f32 %v3622, 1.0
  %v3680 = vadd.f32 %v3624, 1.0
  %v3681 = vadd.f32 %v3626, 1.0
  %v3682 = vadd.f32 %v3628, 1.0
  %v3683 = vadd.f32 %v3630, 1.0
  %v3684 = vadd.f32 %v3632, 1.0
  %v3685 = vadd.f32 %v3634, 1.0
  %v3686 = vadd.f32 %v3636, 1.0
  %v3687 = vadd.f32 %v3638, 1.0
  %v3688 = vadd.f32 %v3640, 1.0
  %v3689 = vadd.f32 %v3642, 1.0
  %v3690 = vadd.f32 %v3644, 1.0
  %v3691 = vadd.f32 %v3646, 1.0
  %v3692 = vadd.f32 %v3648, 1.0
  %v3693 = vadd.f32 %v3650, 1.0
  %v3694 = vadd.f32 %v3652, 1.0
  %v3695 = vadd.f32 %v3654, 1.0
  %v3696 = vadd.f32 %v3656, 1.0
  %v3697 = vadd.f32 %v3658, 1.0
  %v3698 = vadd.f32 %v3660, 1.0
  %v3699 = vadd.f32 %v3662, 1.0
  %v3700 = vadd.f32 %v3664, 1.0
  %v3701 = vadd.f32 %v3666, 1.0
  %v3702 = vadd.f32 %v3668, 1.0
  %v3703 = vadd.f32 %v3670, 1.0
  %v3704 = vadd.f32 %v3672, 1.0
  %v3705 = vrcp.pop %v3673
  %v3706 = vmul.f32 1.0, %v3705
  %v3707 = vrcp.pop %v3674
  %v3708 = vmul.f32 1.0, %v3707
  %v3709 = vrcp.pop %v3675
  %v3710 = vmul.f32 1.0, %v3709
  %v3711 = vrcp.pop %v3676
  %v3712 = vmul.f32 1.0, %v3711
  %v3713 = vrcp.pop %v3677
  %v3714 = vmul.f32 1.0, %v3713
  %v3715 = vrcp.pop %v3678
  %v3716 = vmul.f32 1.0, %v3715
  %v3717 = vrcp.pop %v3679
  %v3718 = vmul.f32 1.0, %v3717
  %v3719 = vrcp.pop %v3680
  %v3720 = vmul.f32 1.0, %v3719
  %v3721 = vrcp.pop %v3681
  %v3722 = vmul.f32 1.0, %v3721
  %v3723 = vrcp.pop %v3682
  %v3724 = vmul.f32 1.0, %v3723
  %v3725 = vrcp.pop %v3683
  %v3726 = vmul.f32 1.0, %v3725
  %v3727 = vrcp.pop %v3684
  %v3728 = vmul.f32 1.0, %v3727
  %v3729 = vrcp.pop %v3685
  %v3730 = vmul.f32 1.0, %v3729
  %v3731 = vrcp.pop %v3686
  %v3732 = vmul.f32 1.0, %v3731
  %v3733 = vrcp.pop %v3687
  %v3734 = vmul.f32 1.0, %v3733
  %v3735 = vrcp.pop %v3688
  %v3736 = vmul.f32 1.0, %v3735
  %v3737 = vrcp.pop %v3689
  %v3738 = vmul.f32 1.0, %v3737
  %v3739 = vrcp.pop %v3690
  %v3740 = vmul.f32 1.0, %v3739
  %v3741 = vrcp.pop %v3691
  %v3742 = vmul.f32 1.0, %v3741
  %v3743 = vrcp.pop %v3692
  %v3744 = vmul.f32 1.0, %v3743
  %v3745 = vrcp.pop %v3693
  %v3746 = vmul.f32 1.0, %v3745
  %v3747 = vrcp.pop %v3694
  %v3748 = vmul.f32 1.0, %v3747
  %v3749 = vrcp.pop %v3695
  %v3750 = vmul.f32 1.0, %v3749
  %v3751 = vrcp.pop %v3696
  %v3752 = vmul.f32 1.0, %v3751
  %v3753 = vrcp.pop %v3697
  %v3754 = vmul.f32 1.0, %v3753
  %v3755 = vrcp.pop %v3698
  %v3756 = vmul.f32 1.0, %v3755
  %v3757 = vrcp.pop %v3699
  %v3758 = vmul.f32 1.0, %v3757
  %v3759 = vrcp.pop %v3700
  %v3760 = vmul.f32 1.0, %v3759
  %v3761 = vrcp.pop %v3701
  %v3762 = vmul.f32 1.0, %v3761
  %v3763 = vrcp.pop %v3702
  %v3764 = vmul.f32 1.0, %v3763
  %v3765 = vrcp.pop %v3703
  %v3766 = vmul.f32 1.0, %v3765
  %v3767 = vrcp.pop %v3704
  %v3768 = vmul.f32 1.0, %v3767
  %s3769 = scalar_lea.vmem %s3, 256
  %3770 = vst.msk [vmem:[%s3769] sm:$0xff] %vm116, %v3706
  %3771 = vst.msk [vmem:[%s3769 + $0x8] sm:$0xff] %vm116, %v3708
  %3772 = vst.msk [vmem:[%s3769 + $0x10] sm:$0xff] %vm116, %v3710
  %3773 = vst.msk [vmem:[%s3769 + $0x18] sm:$0xff] %vm116, %v3712
  %3774 = vst.msk [vmem:[%s3769 + $0x20] sm:$0xff] %vm116, %v3714
  %3775 = vst.msk [vmem:[%s3769 + $0x28] sm:$0xff] %vm116, %v3716
  %3776 = vst.msk [vmem:[%s3769 + $0x30] sm:$0xff] %vm116, %v3718
  %3777 = vst.msk [vmem:[%s3769 + $0x38] sm:$0xff] %vm116, %v3720
  %3778 = vst.msk [vmem:[%s3769 + $0x40] sm:$0xff] %vm116, %v3722
  %3779 = vst.msk [vmem:[%s3769 + $0x48] sm:$0xff] %vm116, %v3724
  %3780 = vst.msk [vmem:[%s3769 + $0x50] sm:$0xff] %vm116, %v3726
  %3781 = vst.msk [vmem:[%s3769 + $0x58] sm:$0xff] %vm116, %v3728
  %3782 = vst.msk [vmem:[%s3769 + $0x60] sm:$0xff] %vm116, %v3730
  %3783 = vst.msk [vmem:[%s3769 + $0x68] sm:$0xff] %vm116, %v3732
  %3784 = vst.msk [vmem:[%s3769 + $0x70] sm:$0xff] %vm116, %v3734
  %3785 = vst.msk [vmem:[%s3769 + $0x78] sm:$0xff] %vm116, %v3736
  %3786 = vst.msk [vmem:[%s3769 + $0x80] sm:$0xff] %vm116, %v3738
  %3787 = vst.msk [vmem:[%s3769 + $0x88] sm:$0xff] %vm116, %v3740
  %3788 = vst.msk [vmem:[%s3769 + $0x90] sm:$0xff] %vm116, %v3742
  %3789 = vst.msk [vmem:[%s3769 + $0x98] sm:$0xff] %vm116, %v3744
  %3790 = vst.msk [vmem:[%s3769 + $0xa0] sm:$0xff] %vm116, %v3746
  %3791 = vst.msk [vmem:[%s3769 + $0xa8] sm:$0xff] %vm116, %v3748
  %3792 = vst.msk [vmem:[%s3769 + $0xb0] sm:$0xff] %vm116, %v3750
  %3793 = vst.msk [vmem:[%s3769 + $0xb8] sm:$0xff] %vm116, %v3752
  %3794 = vst.msk [vmem:[%s3769 + $0xc0] sm:$0xff] %vm116, %v3754
  %3795 = vst.msk [vmem:[%s3769 + $0xc8] sm:$0xff] %vm116, %v3756
  %3796 = vst.msk [vmem:[%s3769 + $0xd0] sm:$0xff] %vm116, %v3758
  %3797 = vst.msk [vmem:[%s3769 + $0xd8] sm:$0xff] %vm116, %v3760
  %3798 = vst.msk [vmem:[%s3769 + $0xe0] sm:$0xff] %vm116, %v3762
  %3799 = vst.msk [vmem:[%s3769 + $0xe8] sm:$0xff] %vm116, %v3764
  %3800 = vst.msk [vmem:[%s3769 + $0xf0] sm:$0xff] %vm116, %v3766
  %3801 = vst.msk [vmem:[%s3769 + $0xf8] sm:$0xff] %vm116, %v3768
  // Predicated region
  $region14: #{tpu_custom_call.1} parent=0 // pred_check
    _
  $region15: #{tpu_custom_call.1} parent=0 // pred_check_branch
    %3803 = sbr.rel (0) target = $region17
  $region16: #{tpu_custom_call.1} parent=0 // pred_region
    _
  $region17: #{tpu_custom_call.1} parent=0 // pred_fallthru
    _
  // Predicated region
  $region18: #{tpu_custom_call.1} parent=0 // pred_check
    _
  $region19: #{tpu_custom_call.1} parent=0 // pred_check_branch
    %3805 = sbr.rel (0) target = $region21
  $region20: #{tpu_custom_call.1} parent=0 // pred_region
    _
  $region21: #{tpu_custom_call.1} parent=0 // pred_fallthru
    _

</llo_original>
